<compile_context>
chip_gen: v6e
topology: v6e:2x2x1
jax: 0.10.0
libtpu: 0.0.40
codegen_flags: <defaults>
</compile_context>

<pallas_src>
import functools

import jax
import jax.numpy as jnp
from jax.experimental import pallas as pl
from jax.experimental.pallas import tpu as pltpu


_MXU_DTYPE = jnp.bfloat16     # matmul operand / stored-weight dtype (f32 accumulation)
_ACT_DTYPE = jnp.bfloat16     # inter-kernel activation storage dtype
_MAX_TM = 256                 # row tile upper bound


def _vmem_budget():
    """Per-generation scoped-VMEM cap: ~75% of physical VMEM (48 MiB on v7x,
    ~96 MiB on v5e/v6e), clamped to a safe range."""
    cap = 64 * 1024 * 1024
    try:
        info = pltpu.get_tpu_info()
        cap = int(getattr(info, "vmem_capacity_bytes", cap))
    except Exception:
        pass
    return max(32 * 1024 * 1024, min(cap * 3 // 4, 112 * 1024 * 1024))


_VMEM_LIMIT = _vmem_budget()
# Full-weight residency threshold (bf16 bytes of K*Np); conservative for v7x.
_RESIDENT_W_BYTES = min(20 * 1024 * 1024, _VMEM_LIMIT // 3)


# ----------------------------------------------------------------------------
# Tiling helpers
# ----------------------------------------------------------------------------
def _round_up(x, m):
    return ((x + m - 1) // m) * m


def _pick_m_tile(M, max_tile=_MAX_TM):
    Mp = _round_up(M, 16)                 # bf16-friendly sublane multiple
    if Mp <= max_tile:
        return Mp, Mp
    Mp = _round_up(M, max_tile)
    return max_tile, Mp


def _pick_n_tile(N):
    if N % 256 == 0:
        return 256, N
    if N % 128 == 0:
        return 128, N
    return 128, _round_up(N, 128)         # pad to lane-dense width


# ----------------------------------------------------------------------------
# In-kernel exact-erf GELU (Abramowitz & Stegun 7.1.26, max abs err ~1.5e-7)
# ----------------------------------------------------------------------------
def _erf_approx(x):
    a1, a2, a3, a4, a5 = 0.254829592, -0.284496736, 1.421413741, -1.453152027, 1.061405429
    p = 0.3275911
    ax = jnp.abs(x)
    t = pl.reciprocal(1.0 + p * ax)
    poly = ((((a5 * t + a4) * t + a3) * t + a2) * t + a1) * t
    y = 1.0 - poly * jnp.exp(-ax * ax)
    return jnp.where(x >= 0, y, -y)


def _gelu_exact(x):
    return 0.5 * x * (1.0 + _erf_approx(x * 0.7071067811865476))


# ----------------------------------------------------------------------------
# Fused linear kernel:  [LN] -> matmul -> +bias -> [act] -> [res + ls * out]
# ----------------------------------------------------------------------------
def _make_linear_kernel(ln, act, residual):
    def kernel(*refs):
        idx = 0
        x_ref = refs[idx]; idx += 1
        if ln:
            g_ref = refs[idx]; bln_ref = refs[idx + 1]; idx += 2
        w_ref = refs[idx]; b_ref = refs[idx + 1]; idx += 2
        if residual:
            ls_ref = refs[idx]; res_ref = refs[idx + 1]; idx += 2
        o_ref = refs[idx]

        if ln:                                         # LayerNorm prologue (f32)
            xf = x_ref[...].astype(jnp.float32)
            mu = jnp.mean(xf, axis=-1, keepdims=True)
            var = jnp.mean(jnp.square(xf - mu), axis=-1, keepdims=True)
            xf = (xf - mu) * jax.lax.rsqrt(var + 1e-6)
            xf = xf * g_ref[...] + bln_ref[...]
            xm = xf.astype(_MXU_DTYPE)
        else:                                          # no f32 detour when LN is off
            xm = x_ref[...].astype(_MXU_DTYPE)

        acc = jnp.dot(xm, w_ref[...], preferred_element_type=jnp.float32)
        acc = acc + b_ref[...]

        if act == 'relu':
            acc = jnp.maximum(acc, 0.0)
        elif act == 'sigmoid':
            acc = jax.nn.sigmoid(acc)
        elif act == 'gelu':
            acc = _gelu_exact(acc)

        if residual:                                   # x + ls * branch(x)
            acc = res_ref[...].astype(jnp.float32) + ls_ref[...] * acc

        o_ref[...] = acc.astype(o_ref.dtype)

    return kernel


def fused_linear(x, w, b, *, ln_gb=None, act=None, ls=None, residual=None,
                 out_dtype=None):
    """y = [res + ls *] act(LN?(x) @ w + b).  x: (M, K), w: (K, N), b: (N,)."""
    assert (ls is None) == (residual is None)
    M, K = x.shape
    Kw, N = w.shape
    assert K == Kw
    if out_dtype is None:
        out_dtype = x.dtype
    if w.dtype != _MXU_DTYPE:
        w = w.astype(_MXU_DTYPE)

    tm, Mp = _pick_m_tile(M)
    tn, Np = _pick_n_tile(N)

    if Mp != M:
        x = jnp.pad(x, ((0, Mp - M), (0, 0)))
        if residual is not None:
            residual = jnp.pad(residual, ((0, Mp - M), (0, 0)))
    w2 = w
    b2 = jnp.asarray(b, jnp.float32).reshape(1, N)
    res2 = residual
    ls2 = jnp.asarray(ls, jnp.float32).reshape(1, N) if ls is not None else None
    if Np != N:
        w2 = jnp.pad(w2, ((0, 0), (0, Np - N)))
        b2 = jnp.pad(b2, ((0, 0), (0, Np - N)))
        if ls2 is not None:
            ls2 = jnp.pad(ls2, ((0, 0), (0, Np - N)))
        if res2 is not None:
            res2 = jnp.pad(res2, ((0, 0), (0, Np - N)))
    if res2 is not None and res2.dtype != out_dtype:
        res2 = res2.astype(out_dtype)

    ln_args = []
    if ln_gb is not None:
        g, bb = ln_gb
        ln_args = [jnp.asarray(g, jnp.float32).reshape(1, K),
                   jnp.asarray(bb, jnp.float32).reshape(1, K)]

    kern = _make_linear_kernel(ln=ln_gb is not None, act=act,
                               residual=residual is not None)

    w_bytes = K * Np * jnp.dtype(_MXU_DTYPE).itemsize
    if w_bytes <= _RESIDENT_W_BYTES:
        # Full-weight residency: grid over M only, weight block constant ->
        # each operand is read from HBM exactly once; LN runs once per row tile.
        grid = (Mp // tm,)
        args = [x]
        in_specs = [pl.BlockSpec((tm, K), lambda i: (i, 0))]
        if ln_gb is not None:
            args += ln_args
            in_specs += [pl.BlockSpec((1, K), lambda i: (0, 0)),
                         pl.BlockSpec((1, K), lambda i: (0, 0))]
        args += [w2, b2]
        in_specs += [pl.BlockSpec((K, Np), lambda i: (0, 0)),
                     pl.BlockSpec((1, Np), lambda i: (0, 0))]
        if residual is not None:
            args += [ls2, res2]
            in_specs += [pl.BlockSpec((1, Np), lambda i: (0, 0)),
                         pl.BlockSpec((tm, Np), lambda i: (i, 0))]
        out_specs = pl.BlockSpec((tm, Np), lambda i: (i, 0))
        dims = ("parallel",)
    else:
        # 2-D fallback: re-stream the SMALLER operand across the inner sweep.
        act_bytes = Mp * K * x.dtype.itemsize
        if act_bytes <= w_bytes:
            grid = (Np // tn, Mp // tm)          # n outer, m inner: weight read once
            xmap = lambda j, i: (i, 0)
            cmap = lambda j, i: (0, 0)
            wmap = lambda j, i: (0, j)
            omap = lambda j, i: (i, j)
        else:
            grid = (Mp // tm, Np // tn)          # m outer, n inner: activation read once
            xmap = lambda i, j: (i, 0)
            cmap = lambda i, j: (0, 0)
            wmap = lambda i, j: (0, j)
            omap = lambda i, j: (i, j)
        args = [x]
        in_specs = [pl.BlockSpec((tm, K), xmap)]
        if ln_gb is not None:
            args += ln_args
            in_specs += [pl.BlockSpec((1, K), cmap), pl.BlockSpec((1, K), cmap)]
        args += [w2, b2]
        in_specs += [pl.BlockSpec((K, tn), wmap), pl.BlockSpec((1, tn), wmap)]
        if residual is not None:
            args += [ls2, res2]
            in_specs += [pl.BlockSpec((1, tn), wmap), pl.BlockSpec((tm, tn), omap)]
        out_specs = pl.BlockSpec((tm, tn), omap)
        dims = ("parallel", "parallel")

    out = pl.pallas_call(
        kern,
        out_shape=jax.ShapeDtypeStruct((Mp, Np), out_dtype),
        grid=grid,
        in_specs=in_specs,
        out_specs=out_specs,
        compiler_params=pltpu.CompilerParams(
            dimension_semantics=dims,
            vmem_limit_bytes=_VMEM_LIMIT),
    )(*args)
    if Mp != M or Np != N:
        out = out[:M, :N]
    return out


# ----------------------------------------------------------------------------
# Attention: grid over (batch, head-group); each group is a contiguous,
# 128-lane-aligned qkv slab (columns permuted at merge time) and its output is
# a single lane-dense store.  Softmax scale is pre-folded into Wq/bq.
# ----------------------------------------------------------------------------
def _heads_per_group(num_heads, head_dim):
    if head_dim % 128 == 0:
        return 1
    g = max(1, 128 // head_dim)
    while g > 1 and (num_heads % g != 0 or (g * head_dim) % 128 != 0):
        g -= 1
    if num_heads % g == 0 and (g * head_dim) % 128 == 0:
        return g
    return num_heads                      # fallback: all heads in one group


def _attn_kernel(qkv_ref, o_ref, *, heads_per_group, head_dim):
    gw = heads_per_group * head_dim
    qkv = qkv_ref[0]                                   # (N, 3*gw)
    outs = []
    for h in range(heads_per_group):                   # static unroll within group
        q = qkv[:, h * head_dim:(h + 1) * head_dim].astype(_MXU_DTYPE)
        k = qkv[:, gw + h * head_dim: gw + (h + 1) * head_dim].astype(_MXU_DTYPE)
        v = qkv[:, 2 * gw + h * head_dim: 2 * gw + (h + 1) * head_dim].astype(_MXU_DTYPE)
        s = jax.lax.dot_general(q, k, (((1,), (1,)), ((), ())),
                                preferred_element_type=jnp.float32)     # (N, N)
        s = s - jnp.max(s, axis=-1, keepdims=True)
        p = jnp.exp(s)
        p = p * pl.reciprocal(jnp.sum(p, axis=-1, keepdims=True), approx=True)
        outs.append(jnp.dot(p.astype(_MXU_DTYPE), v,
                            preferred_element_type=jnp.float32))        # (N, hd)
    out = outs[0] if len(outs) == 1 else jnp.concatenate(outs, axis=-1)
    o_ref[0] = out.astype(o_ref.dtype)                 # one lane-dense (N, gw) store


def pallas_attention(qkv, num_heads, heads_per_group):
    """qkv: (B, N, 3D) in grouped-head column order.  Returns (B, N, D)."""
    B, N, D3 = qkv.shape
    D = D3 // 3
    hd = D // num_heads
    n_groups = num_heads // heads_per_group
    gw = heads_per_group * hd
    # TODO(synk): for long sequences, tile over KV (flash-style online softmax)
    # instead of materializing the full (N, N) scores per head.
    kern = functools.partial(_attn_kernel, heads_per_group=heads_per_group,
                             head_dim=hd)
    return pl.pallas_call(
        kern,
        out_shape=jax.ShapeDtypeStruct((B, N, D), qkv.dtype),
        grid=(B, n_groups),
        in_specs=[pl.BlockSpec((1, N, 3 * gw), lambda b, g: (b, 0, g))],
        out_specs=pl.BlockSpec((1, N, gw), lambda b, g: (b, 0, g)),
        compiler_params=pltpu.CompilerParams(
            dimension_semantics=("parallel", "parallel"),
            vmem_limit_bytes=_VMEM_LIMIT),
    )(qkv)


# ----------------------------------------------------------------------------
# One-time (OUTSIDE jit) LoRA merge + layout preparation.
#   W_eff = W + scaling * A @ B   (exact identity)
#   qkv columns permuted into head groups, 1/sqrt(hd) folded into q columns,
#   everything stored bf16 (weights) / f32 (norm / bias / layerscale scalars).
# ----------------------------------------------------------------------------
def prepare_params(params, cfg):
    D = cfg['embed_dim']
    H = cfg['num_heads']
    hd = D // H
    g = _heads_per_group(H, hd)
    if cfg['use_rslora']:
        scaling = cfg['lora_alpha'] / (cfg['lora_r'] ** 0.5)
    else:
        scaling = cfg['lora_alpha'] / cfg['lora_r']

    perm = []
    for gi in range(H // g):
        for sel in range(3):                       # Q, K, V of this head group
            for h in range(gi * g, (gi + 1) * g):
                perm.extend(range(sel * D + h * hd, sel * D + (h + 1) * hd))
    perm = jnp.asarray(perm, jnp.int32)
    qscale = jnp.concatenate([jnp.full((D,), hd ** -0.5, jnp.float32),
                              jnp.ones((2 * D,), jnp.float32)])

    def f32(a):
        return jnp.asarray(a, jnp.float32)

    def wcast(W):
        return jnp.asarray(W, _MXU_DTYPE)

    blocks = []
    for p in params['blocks']:
        dqkv = jnp.concatenate([p['Aq'] @ p['Bq'], p['Ak'] @ p['Bk'],
                                p['Av'] @ p['Bv']], axis=1)
        Wqkv = (p['Wqkv'] + scaling * dqkv) * qscale[None, :]
        bqkv = p['bqkv'] * qscale
        blocks.append({
            'ln1_g': f32(p['ln1_g']), 'ln1_b': f32(p['ln1_b']),
            'ln2_g': f32(p['ln2_g']), 'ln2_b': f32(p['ln2_b']),
            'ls1': f32(p['ls1']), 'ls2': f32(p['ls2']),
            'Wqkv': wcast(Wqkv[:, perm]), 'bqkv': f32(bqkv[perm]),
            'Wproj': wcast(p['Wproj'] + scaling * (p['Ao'] @ p['Bo'])),
            'bproj': f32(p['bproj']),
            'Wfc1': wcast(p['Wfc1'] + scaling * (p['A1'] @ p['B1'])),
            'bfc1': f32(p['bfc1']),
            'Wfc2': wcast(p['Wfc2'] + scaling * (p['A2'] @ p['B2'])),
            'bfc2': f32(p['bfc2']),
        })

    hc, hr = params['head']['cls'], params['head']['reg']
    head = {
        # cls/reg first linears share input + the trunk's final LayerNorm ->
        # fuse them column-wise so the LN runs only once.
        'W1': wcast(jnp.concatenate([hc[0], hr[0]], axis=1)),
        'b1': f32(jnp.concatenate([hc[1], hr[1]])),
        'W2c': wcast(hc[2]), 'b2c': f32(hc[3]),
        'W2r': wcast(hr[2]), 'b2r': f32(hr[3]),
        'W3c': f32(hc[4]), 'b3c': f32(hc[5]),     # tiny lane-sparse projections: XLA
        'W3r': f32(hr[4]), 'b3r': f32(hr[5]),
    }

    return {
        'W_pe': wcast(params['W_pe']), 'b_pe': f32(params['b_pe']),
        'pos_embed': f32(params['pos_embed']),
        'token_type_embed': f32(params['token_type_embed']),
        'norm_g': f32(params['norm_g']), 'norm_b': f32(params['norm_b']),
        'blocks': blocks,
        'head': head,
    }


# ----------------------------------------------------------------------------
# Model pieces
# ----------------------------------------------------------------------------
def patch_embed(img, W_pe, b_pe, patch):
    """Conv2d(C, D, k=patch, s=patch) as patchify + fused matmul.  img: NCHW."""
    B, C, Hh, Ww = img.shape
    Hp, Wp = Hh // patch, Ww // patch
    x = img.reshape(B, C, Hp, patch, Wp, patch)
    x = x.transpose(0, 2, 4, 1, 3, 5)                 # (B, Hp, Wp, C, ph, pw)
    x = x.reshape(B * Hp * Wp, C * patch * patch).astype(_ACT_DTYPE)
    tok = fused_linear(x, W_pe, b_pe)                 # (B*L, D) bf16
    return tok.reshape(B, Hp * Wp, -1)


def block_forward(x2, p, cfg, B, N):
    """DINOv2 block with merged-LoRA weights.
       x + ls1*attn(ln1(x));  x + ls2*mlp(ln2(x)).   x2: (B*N, D) bf16."""
    D = x2.shape[1]
    H = cfg['num_heads']
    g = _heads_per_group(H, D // H)
    # ln1 fused into the qkv projection (grouped-head column layout, q pre-scaled).
    qkv = fused_linear(x2, p['Wqkv'], p['bqkv'], ln_gb=(p['ln1_g'], p['ln1_b']))
    o = pallas_attention(qkv.reshape(B, N, 3 * D), H, g).reshape(B * N, D)
    # attn.proj with layerscale + residual fused.
    x2 = fused_linear(o, p['Wproj'], p['bproj'], ls=p['ls1'], residual=x2)
    # ln2 + exact-erf GELU fused into fc1 (no extra HBM pass for the hidden act).
    h = fused_linear(x2, p['Wfc1'], p['bfc1'], ln_gb=(p['ln2_g'], p['ln2_b']),
                     act='gelu')
    # fc2 with layerscale + residual fused.
    x2 = fused_linear(h, p['Wfc2'], p['bfc2'], ls=p['ls2'], residual=x2)
    return x2


def head_forward(xf2, hp, ln_gb, B, xH, xW):
    """MLP anchor-free head.  Trunk final LayerNorm fused into the first linear."""
    D = xf2.shape[1]
    h1 = fused_linear(xf2, hp['W1'], hp['b1'], ln_gb=ln_gb, act='relu')   # (M, 2D)
    h1c, h1r = h1[:, :D], h1[:, D:]
    h2c = fused_linear(h1c, hp['W2c'], hp['b2c'], act='relu')
    h2r = fused_linear(h1r, hp['W2r'], hp['b2r'], act='relu')
    # Lane-sparse final projections (N=1 and N=4) stay in XLA: negligible cost,
    # avoids masked partial stores / near-zero MXU utilization in a kernel.
    cls = (h2c.astype(jnp.float32) @ hp['W3c'] + hp['b3c']).reshape(B, xH, xW)
    reg = jax.nn.sigmoid(h2r.astype(jnp.float32) @ hp['W3r'] + hp['b3r'])
    return cls, reg.reshape(B, xH, xW, 4)


def lorat_forward(prepared, z, x, z_feat_mask, cfg):
    """Per-frame forward.  `prepared` must come from prepare_params() (merged
    LoRA weights, outside jit) -- no weight re-materialization per call."""
    D = cfg['embed_dim']
    P = cfg['patch_size']
    xW, xH = cfg['x_size']
    zW, zH = cfg['z_size']
    B = z.shape[0]

    # ---- _z_feat ----
    z_tok = patch_embed(z, prepared['W_pe'], prepared['b_pe'], P)        # (B, Lz, D)
    pos = prepared['pos_embed']                                          # (1, Lx, D)
    pos_z = pos.reshape(1, xH, xW, D)[:, :zH, :zW, :].reshape(1, zH * zW, D)
    tte = prepared['token_type_embed']                                   # (3, D)
    z_tok = (z_tok.astype(jnp.float32) + pos_z
             + jnp.take(tte, z_feat_mask.reshape(B, -1), axis=0)).astype(_ACT_DTYPE)

    # ---- _x_feat ----
    x_tok = patch_embed(x, prepared['W_pe'], prepared['b_pe'], P)        # (B, Lx, D)
    x_tok = (x_tok.astype(jnp.float32) + pos
             + tte[2].reshape(1, 1, D)).astype(_ACT_DTYPE)

    # ---- _fusion ----
    fusion = jnp.concatenate([z_tok, x_tok], axis=1)                     # (B, Lz+Lx, D)
    Ntok = fusion.shape[1]
    f2 = fusion.reshape(B * Ntok, D)
    for blk in prepared['blocks']:
        f2 = block_forward(f2, blk, cfg, B, Ntok)

    # Drop template tokens; the trunk final LayerNorm (per-token) is fused into
    # the head's first linear, so slicing first is equivalent.
    xf = f2.reshape(B, Ntok, D)[:, zH * zW:, :].reshape(B * xH * xW, D)
    ln_gb = (prepared['norm_g'], prepared['norm_b'])
    # TODO(synk): exact MlpAnchorFreeHead definition not provided; using a
    # 3-layer MLP cls branch (1-ch score map) + 3-layer MLP reg branch (4-ch, sigmoid).
    return head_forward(xf, prepared['head'], ln_gb, B, xH, xW)


# ----------------------------------------------------------------------------
# Deterministic parameter initialization (synthetic; no checkpoint loading)
# ----------------------------------------------------------------------------
def init_params(key, cfg):
    D = cfg['embed_dim']
    r = cfg['lora_r']
    Hm = cfg['mlp_hidden']
    C = cfg['in_chans']
    P = cfg['patch_size']
    xW, xH = cfg['x_size']
    keys = iter(jax.random.split(key, 256))

    def nrm(shape, std=0.02):
        return jax.random.normal(next(keys), shape, jnp.float32) * std

    params = {
        'W_pe': nrm((C * P * P, D)),
        'b_pe': nrm((D,)),
        'pos_embed': nrm((1, xW * xH, D)),
        'token_type_embed': nrm((3, D)),
        'norm_g': jnp.ones((D,), jnp.float32),
        'norm_b': jnp.zeros((D,), jnp.float32),
    }
    blocks = []
    for _ in range(cfg['depth']):
        blocks.append({
            'ln1_g': jnp.ones((D,), jnp.float32), 'ln1_b': jnp.zeros((D,), jnp.float32),
            'ln2_g': jnp.ones((D,), jnp.float32), 'ln2_b': jnp.zeros((D,), jnp.float32),
            'Wqkv': nrm((D, 3 * D)), 'bqkv': nrm((3 * D,)),
            'Aq': nrm((D, r)), 'Bq': nrm((r, D)),
            'Ak': nrm((D, r)), 'Bk': nrm((r, D)),
            'Av': nrm((D, r)), 'Bv': nrm((r, D)),
            'Wproj': nrm((D, D)), 'bproj': nrm((D,)),
            'Ao': nrm((D, r)), 'Bo': nrm((r, D)),
            'ls1': jnp.ones((D,), jnp.float32),   # DINOv2 LayerScale init_values=1.0
            'ls2': jnp.ones((D,), jnp.float32),
            'Wfc1': nrm((D, Hm)), 'bfc1': nrm((Hm,)),
            'A1': nrm((D, r)), 'B1': nrm((r, Hm)),
            'Wfc2': nrm((Hm, D)), 'bfc2': nrm((D,)),
            'A2': nrm((Hm, r)), 'B2': nrm((r, D)),
        })
    params['blocks'] = blocks
    params['head'] = {
        'cls': [nrm((D, D)), nrm((D,)), nrm((D, D)), nrm((D,)), nrm((D, 1)), nrm((1,))],
        'reg': [nrm((D, D)), nrm((D,)), nrm((D, D)), nrm((D,)), nrm((D, 4)), nrm((4,))],
    }
    return params


# ----------------------------------------------------------------------------
if __name__ == "__main__":
    cfg = dict(
        embed_dim=128, num_heads=2, depth=2, mlp_hidden=256,
        patch_size=4, in_chans=3,
        x_size=(4, 4),   # (W, H) of search-region feature grid -> 16 x-tokens
        z_size=(2, 2),   # (W, H) of template feature grid      -> 4 z-tokens
        lora_r=4, lora_alpha=8.0, use_rslora=False,
    )
    key = jax.random.PRNGKey(0)
    pk, zk, xk, mk = jax.random.split(key, 4)

    raw_params = init_params(pk, cfg)
    # One-time LoRA merge / layout prep, OUTSIDE jit (load-time, not per-frame).
    prepared = jax.block_until_ready(prepare_params(raw_params, cfg))

    B = 2
    zW, zH = cfg['z_size']
    xW, xH = cfg['x_size']
    P = cfg['patch_size']
    z = jax.random.normal(zk, (B, 3, zH * P, zW * P), jnp.float32)   # NCHW
    x = jax.random.normal(xk, (B, 3, xH * P, xW * P), jnp.float32)   # NCHW
    z_feat_mask = jax.random.bernoulli(mk, 0.5, (B, zH, zW)).astype(jnp.int32)

    fwd = jax.jit(functools.partial(lorat_forward, cfg=cfg))
    score_map, boxes = fwd(prepared, z, x, z_feat_mask)
    jax.block_until_ready((score_map, boxes))
    assert score_map.shape == (B, xH, xW)
    assert boxes.shape == (B, xH, xW, 4)
    print("KERNEL_OK")
</pallas_src>

<mosaic_0001>
module attributes {stable_mosaic.version = 11 : i64} {
  func.func @kernel(%arg0: i32, %arg1: memref<32x48xbf16, #tpu.memory_space<vmem>>, %arg2: memref<48x128xbf16, #tpu.memory_space<vmem>>, %arg3: memref<1x128xf32, #tpu.memory_space<vmem>>, %arg4: memref<32x128xbf16, #tpu.memory_space<vmem>>) attributes {dimension_semantics = [#tpu.dimension_semantics<parallel>], iteration_bounds = array<i64: 1>, scalar_prefetch = 0 : i64, scratch_operands = 0 : i64, tpu.core_type = #tpu.core_type<tc>, window_params = [{transform_indices = @transform_0, window_bounds = array<i64: 32, 48>}, {pipeline_mode = #tpu.pipeline_mode<synchronous>, transform_indices = @transform_1, window_bounds = array<i64: 48, 128>}, {pipeline_mode = #tpu.pipeline_mode<synchronous>, transform_indices = @transform_2, window_bounds = array<i64: 1, 128>}, {transform_indices = @transform_3, window_bounds = array<i64: 32, 128>}]} {
    %c0 = arith.constant 0 : index
    %c0_0 = arith.constant 0 : index
    %0 = vector.load %arg1[%c0, %c0_0] : memref<32x48xbf16, #tpu.memory_space<vmem>>, vector<32x48xbf16>
    %c0_1 = arith.constant 0 : index
    %c0_2 = arith.constant 0 : index
    %1 = vector.load %arg2[%c0_1, %c0_2] : memref<48x128xbf16, #tpu.memory_space<vmem>>, vector<48x128xbf16>
    %cst = arith.constant dense<0.000000e+00> : vector<32x128xf32>
    %2 = tpu.matmul %0, %1, %cst {dimension_numbers = #tpu.dot_dimension_numbers<[1], [0], [0], [1], [0, 0, 1, 1], [], []>} : vector<32x48xbf16>, vector<48x128xbf16>, vector<32x128xf32> -> vector<32x128xf32>
    %c0_3 = arith.constant 0 : index
    %c0_4 = arith.constant 0 : index
    %3 = vector.load %arg3[%c0_3, %c0_4] : memref<1x128xf32, #tpu.memory_space<vmem>>, vector<1x128xf32>
    %4 = vector.broadcast %3 : vector<1x128xf32> to vector<32x128xf32>
    %5 = arith.addf %2, %4 : vector<32x128xf32>
    %6 = arith.truncf %5 : vector<32x128xf32> to vector<32x128xbf16>
    %c0_5 = arith.constant 0 : index
    %c0_6 = arith.constant 0 : index
    %7 = vector.load %arg4[%c0_5, %c0_6] : memref<32x128xbf16, #tpu.memory_space<vmem>>, vector<32x128xbf16>
    tpu.vector_store %arg4[%c0_5, %c0_6], %6 {strides = array<i32>} : memref<32x128xbf16, #tpu.memory_space<vmem>>, vector<32x128xbf16>,
    return
  }
  func.func @transform_0(%arg0: i32) -> (i32, i32) {
    %c0_i32 = arith.constant 0 : i32
    %c0_i32_0 = arith.constant 0 : i32
    return %arg0, %c0_i32 : i32, i32
  }
  func.func @transform_1(%arg0: i32) -> (i32, i32) {
    %c0_i32 = arith.constant 0 : i32
    %c0_i32_0 = arith.constant 0 : i32
    %c0_i32_1 = arith.constant 0 : i32
    return %c0_i32, %c0_i32_0 : i32, i32
  }
  func.func @transform_2(%arg0: i32) -> (i32, i32) {
    %c0_i32 = arith.constant 0 : i32
    %c0_i32_0 = arith.constant 0 : i32
    %c0_i32_1 = arith.constant 0 : i32
    return %c0_i32, %c0_i32_0 : i32, i32
  }
  func.func @transform_3(%arg0: i32) -> (i32, i32) {
    %c0_i32 = arith.constant 0 : i32
    %c0_i32_0 = arith.constant 0 : i32
    return %arg0, %c0_i32 : i32, i32
  }
}

module attributes {stable_mosaic.version = 11 : i64} {
  func.func @kernel(%arg0: i32, %arg1: memref<16x48xbf16, #tpu.memory_space<vmem>>, %arg2: memref<48x128xbf16, #tpu.memory_space<vmem>>, %arg3: memref<1x128xf32, #tpu.memory_space<vmem>>, %arg4: memref<16x128xbf16, #tpu.memory_space<vmem>>) attributes {dimension_semantics = [#tpu.dimension_semantics<parallel>], iteration_bounds = array<i64: 1>, scalar_prefetch = 0 : i64, scratch_operands = 0 : i64, tpu.core_type = #tpu.core_type<tc>, window_params = [{transform_indices = @transform_0, window_bounds = array<i64: 16, 48>}, {pipeline_mode = #tpu.pipeline_mode<synchronous>, transform_indices = @transform_1, window_bounds = array<i64: 48, 128>}, {pipeline_mode = #tpu.pipeline_mode<synchronous>, transform_indices = @transform_2, window_bounds = array<i64: 1, 128>}, {transform_indices = @transform_3, window_bounds = array<i64: 16, 128>}]} {
    %c0 = arith.constant 0 : index
    %c0_0 = arith.constant 0 : index
    %0 = vector.load %arg1[%c0, %c0_0] : memref<16x48xbf16, #tpu.memory_space<vmem>>, vector<16x48xbf16>
    %c0_1 = arith.constant 0 : index
    %c0_2 = arith.constant 0 : index
    %1 = vector.load %arg2[%c0_1, %c0_2] : memref<48x128xbf16, #tpu.memory_space<vmem>>, vector<48x128xbf16>
    %cst = arith.constant dense<0.000000e+00> : vector<16x128xf32>
    %2 = tpu.matmul %0, %1, %cst {dimension_numbers = #tpu.dot_dimension_numbers<[1], [0], [0], [1], [0, 0, 1, 1], [], []>} : vector<16x48xbf16>, vector<48x128xbf16>, vector<16x128xf32> -> vector<16x128xf32>
    %c0_3 = arith.constant 0 : index
    %c0_4 = arith.constant 0 : index
    %3 = vector.load %arg3[%c0_3, %c0_4] : memref<1x128xf32, #tpu.memory_space<vmem>>, vector<1x128xf32>
    %4 = vector.broadcast %3 : vector<1x128xf32> to vector<16x128xf32>
    %5 = arith.addf %2, %4 : vector<16x128xf32>
    %6 = arith.truncf %5 : vector<16x128xf32> to vector<16x128xbf16>
    %c0_5 = arith.constant 0 : index
    %c0_6 = arith.constant 0 : index
    %7 = vector.load %arg4[%c0_5, %c0_6] : memref<16x128xbf16, #tpu.memory_space<vmem>>, vector<16x128xbf16>
    tpu.vector_store %arg4[%c0_5, %c0_6], %6 {strides = array<i32>} : memref<16x128xbf16, #tpu.memory_space<vmem>>, vector<16x128xbf16>,
    return
  }
  func.func @transform_0(%arg0: i32) -> (i32, i32) {
    %c0_i32 = arith.constant 0 : i32
    %c0_i32_0 = arith.constant 0 : i32
    return %arg0, %c0_i32 : i32, i32
  }
  func.func @transform_1(%arg0: i32) -> (i32, i32) {
    %c0_i32 = arith.constant 0 : i32
    %c0_i32_0 = arith.constant 0 : i32
    %c0_i32_1 = arith.constant 0 : i32
    return %c0_i32, %c0_i32_0 : i32, i32
  }
  func.func @transform_2(%arg0: i32) -> (i32, i32) {
    %c0_i32 = arith.constant 0 : i32
    %c0_i32_0 = arith.constant 0 : i32
    %c0_i32_1 = arith.constant 0 : i32
    return %c0_i32, %c0_i32_0 : i32, i32
  }
  func.func @transform_3(%arg0: i32) -> (i32, i32) {
    %c0_i32 = arith.constant 0 : i32
    %c0_i32_0 = arith.constant 0 : i32
    return %arg0, %c0_i32 : i32, i32
  }
}

module attributes {stable_mosaic.version = 11 : i64} {
  func.func @kernel(%arg0: i32, %arg1: memref<48x128xbf16, #tpu.memory_space<vmem>>, %arg2: memref<1x128xf32, #tpu.memory_space<vmem>>, %arg3: memref<1x128xf32, #tpu.memory_space<vmem>>, %arg4: memref<128x384xbf16, #tpu.memory_space<vmem>>, %arg5: memref<1x384xf32, #tpu.memory_space<vmem>>, %arg6: memref<48x384xbf16, #tpu.memory_space<vmem>>) attributes {dimension_semantics = [#tpu.dimension_semantics<parallel>], iteration_bounds = array<i64: 1>, scalar_prefetch = 0 : i64, scratch_operands = 0 : i64, tpu.core_type = #tpu.core_type<tc>, window_params = [{transform_indices = @transform_0, window_bounds = array<i64: 48, 128>}, {pipeline_mode = #tpu.pipeline_mode<synchronous>, transform_indices = @transform_1, window_bounds = array<i64: 1, 128>}, {pipeline_mode = #tpu.pipeline_mode<synchronous>, transform_indices = @transform_2, window_bounds = array<i64: 1, 128>}, {pipeline_mode = #tpu.pipeline_mode<synchronous>, transform_indices = @transform_3, window_bounds = array<i64: 128, 384>}, {pipeline_mode = #tpu.pipeline_mode<synchronous>, transform_indices = @transform_4, window_bounds = array<i64: 1, 384>}, {transform_indices = @transform_5, window_bounds = array<i64: 48, 384>}]} {
    %c0 = arith.constant 0 : index
    %c0_0 = arith.constant 0 : index
    %0 = vector.load %arg1[%c0, %c0_0] : memref<48x128xbf16, #tpu.memory_space<vmem>>, vector<48x128xbf16>
    %1 = arith.extf %0 : vector<48x128xbf16> to vector<48x128xf32>
    %cst = arith.constant dense<0.000000e+00> : vector<48xf32>
    %2 = vector.multi_reduction <add>, %1, %cst [1] : vector<48x128xf32> to vector<48xf32>
    %3 = vector.shape_cast %2 : vector<48xf32> to vector<48x1xf32>
    %cst_1 = arith.constant 1.280000e+02 : f32
    %4 = vector.broadcast %cst_1 : f32 to vector<48x1xf32>
    %5 = arith.divf %3, %4 : vector<48x1xf32>
    %6 = vector.broadcast %5 : vector<48x1xf32> to vector<48x128xf32>
    %7 = arith.subf %1, %6 : vector<48x128xf32>
    %8 = arith.mulf %7, %7 : vector<48x128xf32>
    %cst_2 = arith.constant dense<0.000000e+00> : vector<48xf32>
    %9 = vector.multi_reduction <add>, %8, %cst_2 [1] : vector<48x128xf32> to vector<48xf32>
    %10 = vector.shape_cast %9 : vector<48xf32> to vector<48x1xf32>
    %cst_3 = arith.constant 1.280000e+02 : f32
    %11 = vector.broadcast %cst_3 : f32 to vector<48x1xf32>
    %12 = arith.divf %10, %11 : vector<48x1xf32>
    %13 = vector.broadcast %5 : vector<48x1xf32> to vector<48x128xf32>
    %14 = arith.subf %1, %13 : vector<48x128xf32>
    %cst_4 = arith.constant 9.99999997E-7 : f32
    %15 = vector.broadcast %cst_4 : f32 to vector<48x1xf32>
    %16 = arith.addf %12, %15 : vector<48x1xf32>
    %17 = math.rsqrt %16 : vector<48x1xf32>
    %18 = vector.broadcast %17 : vector<48x1xf32> to vector<48x128xf32>
    %19 = arith.mulf %14, %18 : vector<48x128xf32>
    %c0_5 = arith.constant 0 : index
    %c0_6 = arith.constant 0 : index
    %20 = vector.load %arg2[%c0_5, %c0_6] : memref<1x128xf32, #tpu.memory_space<vmem>>, vector<1x128xf32>
    %21 = vector.broadcast %20 : vector<1x128xf32> to vector<48x128xf32>
    %22 = arith.mulf %19, %21 : vector<48x128xf32>
    %c0_7 = arith.constant 0 : index
    %c0_8 = arith.constant 0 : index
    %23 = vector.load %arg3[%c0_7, %c0_8] : memref<1x128xf32, #tpu.memory_space<vmem>>, vector<1x128xf32>
    %24 = vector.broadcast %23 : vector<1x128xf32> to vector<48x128xf32>
    %25 = arith.addf %22, %24 : vector<48x128xf32>
    %26 = arith.truncf %25 : vector<48x128xf32> to vector<48x128xbf16>
    %c0_9 = arith.constant 0 : index
    %c0_10 = arith.constant 0 : index
    %27 = vector.load %arg4[%c0_9, %c0_10] : memref<128x384xbf16, #tpu.memory_space<vmem>>, vector<128x384xbf16>
    %cst_11 = arith.constant dense<0.000000e+00> : vector<48x384xf32>
    %28 = tpu.matmul %26, %27, %cst_11 {dimension_numbers = #tpu.dot_dimension_numbers<[1], [0], [0], [1], [0, 0, 1, 1], [], []>} : vector<48x128xbf16>, vector<128x384xbf16>, vector<48x384xf32> -> vector<48x384xf32>
    %c0_12 = arith.constant 0 : index
    %c0_13 = arith.constant 0 : index
    %29 = vector.load %arg5[%c0_12, %c0_13] : memref<1x384xf32, #tpu.memory_space<vmem>>, vector<1x384xf32>
    %30 = vector.broadcast %29 : vector<1x384xf32> to vector<48x384xf32>
    %31 = arith.addf %28, %30 : vector<48x384xf32>
    %32 = arith.truncf %31 : vector<48x384xf32> to vector<48x384xbf16>
    %c0_14 = arith.constant 0 : index
    %c0_15 = arith.constant 0 : index
    %33 = vector.load %arg6[%c0_14, %c0_15] : memref<48x384xbf16, #tpu.memory_space<vmem>>, vector<48x384xbf16>
    tpu.vector_store %arg6[%c0_14, %c0_15], %32 {strides = array<i32>} : memref<48x384xbf16, #tpu.memory_space<vmem>>, vector<48x384xbf16>,
    return
  }
  func.func @transform_0(%arg0: i32) -> (i32, i32) {
    %c0_i32 = arith.constant 0 : i32
    %c0_i32_0 = arith.constant 0 : i32
    return %arg0, %c0_i32 : i32, i32
  }
  func.func @transform_1(%arg0: i32) -> (i32, i32) {
    %c0_i32 = arith.constant 0 : i32
    %c0_i32_0 = arith.constant 0 : i32
    %c0_i32_1 = arith.constant 0 : i32
    return %c0_i32, %c0_i32_0 : i32, i32
  }
  func.func @transform_2(%arg0: i32) -> (i32, i32) {
    %c0_i32 = arith.constant 0 : i32
    %c0_i32_0 = arith.constant 0 : i32
    %c0_i32_1 = arith.constant 0 : i32
    return %c0_i32, %c0_i32_0 : i32, i32
  }
  func.func @transform_3(%arg0: i32) -> (i32, i32) {
    %c0_i32 = arith.constant 0 : i32
    %c0_i32_0 = arith.constant 0 : i32
    %c0_i32_1 = arith.constant 0 : i32
    return %c0_i32, %c0_i32_0 : i32, i32
  }
  func.func @transform_4(%arg0: i32) -> (i32, i32) {
    %c0_i32 = arith.constant 0 : i32
    %c0_i32_0 = arith.constant 0 : i32
    %c0_i32_1 = arith.constant 0 : i32
    return %c0_i32, %c0_i32_0 : i32, i32
  }
  func.func @transform_5(%arg0: i32) -> (i32, i32) {
    %c0_i32 = arith.constant 0 : i32
    %c0_i32_0 = arith.constant 0 : i32
    return %arg0, %c0_i32 : i32, i32
  }
}

module attributes {stable_mosaic.version = 11 : i64} {
  func.func @_attn_kernel(%arg0: i32, %arg1: i32, %arg2: memref<1x20x384xbf16, #tpu.memory_space<vmem>>, %arg3: memref<1x20x128xbf16, #tpu.memory_space<vmem>>) attributes {dimension_semantics = [#tpu.dimension_semantics<parallel>, #tpu.dimension_semantics<parallel>], iteration_bounds = array<i64: 2, 1>, scalar_prefetch = 0 : i64, scratch_operands = 0 : i64, tpu.core_type = #tpu.core_type<tc>, window_params = [{transform_indices = @transform_0, window_bounds = array<i64: 1, 20, 384>}, {transform_indices = @transform_1, window_bounds = array<i64: 1, 20, 128>}]} {
    %c0 = arith.constant 0 : index
    %c0_0 = arith.constant 0 : index
    %c0_1 = arith.constant 0 : index
    %0 = vector.load %arg2[%c0, %c0_0, %c0_1] : memref<1x20x384xbf16, #tpu.memory_space<vmem>>, vector<1x20x384xbf16>
    %1 = vector.shape_cast %0 : vector<1x20x384xbf16> to vector<20x384xbf16>
    %2 = vector.extract_strided_slice %1 {offsets = [0, 0], sizes = [20, 64], strides = [1, 1]} : vector<20x384xbf16> to vector<20x64xbf16>
    %3 = vector.extract_strided_slice %1 {offsets = [0, 128], sizes = [20, 64], strides = [1, 1]} : vector<20x384xbf16> to vector<20x64xbf16>
    %4 = vector.extract_strided_slice %1 {offsets = [0, 256], sizes = [20, 64], strides = [1, 1]} : vector<20x384xbf16> to vector<20x64xbf16>
    %cst = arith.constant dense<0.000000e+00> : vector<20x20xf32>
    %5 = tpu.matmul %2, %3, %cst {dimension_numbers = #tpu.dot_dimension_numbers<[1], [1], [0], [0], [0, 0, 1, 0], [], []>} : vector<20x64xbf16>, vector<20x64xbf16>, vector<20x20xf32> -> vector<20x20xf32>
    %cst_2 = arith.constant dense<0xFF800000> : vector<20xf32>
    %6 = vector.multi_reduction <maximumf>, %5, %cst_2 [1] : vector<20x20xf32> to vector<20xf32>
    %7 = vector.shape_cast %6 : vector<20xf32> to vector<20x1xf32>
    %8 = vector.broadcast %7 : vector<20x1xf32> to vector<20x20xf32>
    %9 = arith.subf %5, %8 : vector<20x20xf32>
    %10 = math.exp %9 : vector<20x20xf32>
    %cst_3 = arith.constant dense<0.000000e+00> : vector<20xf32>
    %11 = vector.multi_reduction <add>, %10, %cst_3 [1] : vector<20x20xf32> to vector<20xf32>
    %12 = vector.shape_cast %11 : vector<20xf32> to vector<20x1xf32>
    %13 = tpu.reciprocal %12 {approx = true} : vector<20x1xf32> -> vector<20x1xf32>
    %14 = vector.broadcast %13 : vector<20x1xf32> to vector<20x20xf32>
    %15 = arith.mulf %10, %14 : vector<20x20xf32>
    %16 = arith.truncf %15 : vector<20x20xf32> to vector<20x20xbf16>
    %cst_4 = arith.constant dense<0.000000e+00> : vector<20x64xf32>
    %17 = tpu.matmul %16, %4, %cst_4 {dimension_numbers = #tpu.dot_dimension_numbers<[1], [0], [0], [1], [0, 0, 1, 1], [], []>} : vector<20x20xbf16>, vector<20x64xbf16>, vector<20x64xf32> -> vector<20x64xf32>
    %18 = vector.extract_strided_slice %1 {offsets = [0, 64], sizes = [20, 64], strides = [1, 1]} : vector<20x384xbf16> to vector<20x64xbf16>
    %19 = vector.extract_strided_slice %1 {offsets = [0, 192], sizes = [20, 64], strides = [1, 1]} : vector<20x384xbf16> to vector<20x64xbf16>
    %20 = vector.extract_strided_slice %1 {offsets = [0, 320], sizes = [20, 64], strides = [1, 1]} : vector<20x384xbf16> to vector<20x64xbf16>
    %cst_5 = arith.constant dense<0.000000e+00> : vector<20x20xf32>
    %21 = tpu.matmul %18, %19, %cst_5 {dimension_numbers = #tpu.dot_dimension_numbers<[1], [1], [0], [0], [0, 0, 1, 0], [], []>} : vector<20x64xbf16>, vector<20x64xbf16>, vector<20x20xf32> -> vector<20x20xf32>
    %cst_6 = arith.constant dense<0xFF800000> : vector<20xf32>
    %22 = vector.multi_reduction <maximumf>, %21, %cst_6 [1] : vector<20x20xf32> to vector<20xf32>
    %23 = vector.shape_cast %22 : vector<20xf32> to vector<20x1xf32>
    %24 = vector.broadcast %23 : vector<20x1xf32> to vector<20x20xf32>
    %25 = arith.subf %21, %24 : vector<20x20xf32>
    %26 = math.exp %25 : vector<20x20xf32>
    %cst_7 = arith.constant dense<0.000000e+00> : vector<20xf32>
    %27 = vector.multi_reduction <add>, %26, %cst_7 [1] : vector<20x20xf32> to vector<20xf32>
    %28 = vector.shape_cast %27 : vector<20xf32> to vector<20x1xf32>
    %29 = tpu.reciprocal %28 {approx = true} : vector<20x1xf32> -> vector<20x1xf32>
    %30 = vector.broadcast %29 : vector<20x1xf32> to vector<20x20xf32>
    %31 = arith.mulf %26, %30 : vector<20x20xf32>
    %32 = arith.truncf %31 : vector<20x20xf32> to vector<20x20xbf16>
    %cst_8 = arith.constant dense<0.000000e+00> : vector<20x64xf32>
    %33 = tpu.matmul %32, %20, %cst_8 {dimension_numbers = #tpu.dot_dimension_numbers<[1], [0], [0], [1], [0, 0, 1, 1], [], []>} : vector<20x20xbf16>, vector<20x64xbf16>, vector<20x64xf32> -> vector<20x64xf32>
    %34 = tpu.concatenate %17, %33 in 1 : vector<20x64xf32>, vector<20x64xf32> -> vector<20x128xf32>
    %35 = arith.truncf %34 : vector<20x128xf32> to vector<20x128xbf16>
    %c0_9 = arith.constant 0 : index
    %c0_10 = arith.constant 0 : index
    %c0_11 = arith.constant 0 : index
    %36 = vector.load %arg3[%c0_9, %c0_10, %c0_11] : memref<1x20x128xbf16, #tpu.memory_space<vmem>>, vector<1x20x128xbf16>
    %37 = vector.shape_cast %36 : vector<1x20x128xbf16> to vector<20x128xbf16>
    %38 = vector.shape_cast %35 : vector<20x128xbf16> to vector<1x20x128xbf16>
    tpu.vector_store %arg3[%c0_9, %c0_10, %c0_11], %38 {strides = array<i32>} : memref<1x20x128xbf16, #tpu.memory_space<vmem>>, vector<1x20x128xbf16>,
    return
  }
  func.func @transform_0(%arg0: i32, %arg1: i32) -> (i32, i32, i32) {
    %c0_i32 = arith.constant 0 : i32
    %c0_i32_0 = arith.constant 0 : i32
    return %arg0, %c0_i32, %arg1 : i32, i32, i32
  }
  func.func @transform_1(%arg0: i32, %arg1: i32) -> (i32, i32, i32) {
    %c0_i32 = arith.constant 0 : i32
    %c0_i32_0 = arith.constant 0 : i32
    return %arg0, %c0_i32, %arg1 : i32, i32, i32
  }
}

module attributes {stable_mosaic.version = 11 : i64} {
  func.func @kernel(%arg0: i32, %arg1: memref<48x128xbf16, #tpu.memory_space<vmem>>, %arg2: memref<128x128xbf16, #tpu.memory_space<vmem>>, %arg3: memref<1x128xf32, #tpu.memory_space<vmem>>, %arg4: memref<1x128xf32, #tpu.memory_space<vmem>>, %arg5: memref<48x128xbf16, #tpu.memory_space<vmem>>, %arg6: memref<48x128xbf16, #tpu.memory_space<vmem>>) attributes {dimension_semantics = [#tpu.dimension_semantics<parallel>], iteration_bounds = array<i64: 1>, scalar_prefetch = 0 : i64, scratch_operands = 0 : i64, tpu.core_type = #tpu.core_type<tc>, window_params = [{transform_indices = @transform_0, window_bounds = array<i64: 48, 128>}, {pipeline_mode = #tpu.pipeline_mode<synchronous>, transform_indices = @transform_1, window_bounds = array<i64: 128, 128>}, {pipeline_mode = #tpu.pipeline_mode<synchronous>, transform_indices = @transform_2, window_bounds = array<i64: 1, 128>}, {pipeline_mode = #tpu.pipeline_mode<synchronous>, transform_indices = @transform_3, window_bounds = array<i64: 1, 128>}, {transform_indices = @transform_4, window_bounds = array<i64: 48, 128>}, {transform_indices = @transform_5, window_bounds = array<i64: 48, 128>}]} {
    %c0 = arith.constant 0 : index
    %c0_0 = arith.constant 0 : index
    %0 = vector.load %arg1[%c0, %c0_0] : memref<48x128xbf16, #tpu.memory_space<vmem>>, vector<48x128xbf16>
    %c0_1 = arith.constant 0 : index
    %c0_2 = arith.constant 0 : index
    %1 = vector.load %arg2[%c0_1, %c0_2] : memref<128x128xbf16, #tpu.memory_space<vmem>>, vector<128x128xbf16>
    %cst = arith.constant dense<0.000000e+00> : vector<48x128xf32>
    %2 = tpu.matmul %0, %1, %cst {dimension_numbers = #tpu.dot_dimension_numbers<[1], [0], [0], [1], [0, 0, 1, 1], [], []>} : vector<48x128xbf16>, vector<128x128xbf16>, vector<48x128xf32> -> vector<48x128xf32>
    %c0_3 = arith.constant 0 : index
    %c0_4 = arith.constant 0 : index
    %3 = vector.load %arg3[%c0_3, %c0_4] : memref<1x128xf32, #tpu.memory_space<vmem>>, vector<1x128xf32>
    %4 = vector.broadcast %3 : vector<1x128xf32> to vector<48x128xf32>
    %5 = arith.addf %2, %4 : vector<48x128xf32>
    %c0_5 = arith.constant 0 : index
    %c0_6 = arith.constant 0 : index
    %6 = vector.load %arg5[%c0_5, %c0_6] : memref<48x128xbf16, #tpu.memory_space<vmem>>, vector<48x128xbf16>
    %7 = arith.extf %6 : vector<48x128xbf16> to vector<48x128xf32>
    %c0_7 = arith.constant 0 : index
    %c0_8 = arith.constant 0 : index
    %8 = vector.load %arg4[%c0_7, %c0_8] : memref<1x128xf32, #tpu.memory_space<vmem>>, vector<1x128xf32>
    %9 = vector.broadcast %8 : vector<1x128xf32> to vector<48x128xf32>
    %10 = arith.mulf %9, %5 : vector<48x128xf32>
    %11 = arith.addf %7, %10 : vector<48x128xf32>
    %12 = arith.truncf %11 : vector<48x128xf32> to vector<48x128xbf16>
    %c0_9 = arith.constant 0 : index
    %c0_10 = arith.constant 0 : index
    %13 = vector.load %arg6[%c0_9, %c0_10] : memref<48x128xbf16, #tpu.memory_space<vmem>>, vector<48x128xbf16>
    tpu.vector_store %arg6[%c0_9, %c0_10], %12 {strides = array<i32>} : memref<48x128xbf16, #tpu.memory_space<vmem>>, vector<48x128xbf16>,
    return
  }
  func.func @transform_0(%arg0: i32) -> (i32, i32) {
    %c0_i32 = arith.constant 0 : i32
    %c0_i32_0 = arith.constant 0 : i32
    return %arg0, %c0_i32 : i32, i32
  }
  func.func @transform_1(%arg0: i32) -> (i32, i32) {
    %c0_i32 = arith.constant 0 : i32
    %c0_i32_0 = arith.constant 0 : i32
    %c0_i32_1 = arith.constant 0 : i32
    return %c0_i32, %c0_i32_0 : i32, i32
  }
  func.func @transform_2(%arg0: i32) -> (i32, i32) {
    %c0_i32 = arith.constant 0 : i32
    %c0_i32_0 = arith.constant 0 : i32
    %c0_i32_1 = arith.constant 0 : i32
    return %c0_i32, %c0_i32_0 : i32, i32
  }
  func.func @transform_3(%arg0: i32) -> (i32, i32) {
    %c0_i32 = arith.constant 0 : i32
    %c0_i32_0 = arith.constant 0 : i32
    %c0_i32_1 = arith.constant 0 : i32
    return %c0_i32, %c0_i32_0 : i32, i32
  }
  func.func @transform_4(%arg0: i32) -> (i32, i32) {
    %c0_i32 = arith.constant 0 : i32
    %c0_i32_0 = arith.constant 0 : i32
    return %arg0, %c0_i32 : i32, i32
  }
  func.func @transform_5(%arg0: i32) -> (i32, i32) {
    %c0_i32 = arith.constant 0 : i32
    %c0_i32_0 = arith.constant 0 : i32
    return %arg0, %c0_i32 : i32, i32
  }
}

module attributes {stable_mosaic.version = 11 : i64} {
  func.func @kernel(%arg0: i32, %arg1: memref<48x128xbf16, #tpu.memory_space<vmem>>, %arg2: memref<1x128xf32, #tpu.memory_space<vmem>>, %arg3: memref<1x128xf32, #tpu.memory_space<vmem>>, %arg4: memref<128x256xbf16, #tpu.memory_space<vmem>>, %arg5: memref<1x256xf32, #tpu.memory_space<vmem>>, %arg6: memref<48x256xbf16, #tpu.memory_space<vmem>>) attributes {dimension_semantics = [#tpu.dimension_semantics<parallel>], iteration_bounds = array<i64: 1>, scalar_prefetch = 0 : i64, scratch_operands = 0 : i64, tpu.core_type = #tpu.core_type<tc>, window_params = [{transform_indices = @transform_0, window_bounds = array<i64: 48, 128>}, {pipeline_mode = #tpu.pipeline_mode<synchronous>, transform_indices = @transform_1, window_bounds = array<i64: 1, 128>}, {pipeline_mode = #tpu.pipeline_mode<synchronous>, transform_indices = @transform_2, window_bounds = array<i64: 1, 128>}, {pipeline_mode = #tpu.pipeline_mode<synchronous>, transform_indices = @transform_3, window_bounds = array<i64: 128, 256>}, {pipeline_mode = #tpu.pipeline_mode<synchronous>, transform_indices = @transform_4, window_bounds = array<i64: 1, 256>}, {transform_indices = @transform_5, window_bounds = array<i64: 48, 256>}]} {
    %c0 = arith.constant 0 : index
    %c0_0 = arith.constant 0 : index
    %0 = vector.load %arg1[%c0, %c0_0] : memref<48x128xbf16, #tpu.memory_space<vmem>>, vector<48x128xbf16>
    %1 = arith.extf %0 : vector<48x128xbf16> to vector<48x128xf32>
    %cst = arith.constant dense<0.000000e+00> : vector<48xf32>
    %2 = vector.multi_reduction <add>, %1, %cst [1] : vector<48x128xf32> to vector<48xf32>
    %3 = vector.shape_cast %2 : vector<48xf32> to vector<48x1xf32>
    %cst_1 = arith.constant 1.280000e+02 : f32
    %4 = vector.broadcast %cst_1 : f32 to vector<48x1xf32>
    %5 = arith.divf %3, %4 : vector<48x1xf32>
    %6 = vector.broadcast %5 : vector<48x1xf32> to vector<48x128xf32>
    %7 = arith.subf %1, %6 : vector<48x128xf32>
    %8 = arith.mulf %7, %7 : vector<48x128xf32>
    %cst_2 = arith.constant dense<0.000000e+00> : vector<48xf32>
    %9 = vector.multi_reduction <add>, %8, %cst_2 [1] : vector<48x128xf32> to vector<48xf32>
    %10 = vector.shape_cast %9 : vector<48xf32> to vector<48x1xf32>
    %cst_3 = arith.constant 1.280000e+02 : f32
    %11 = vector.broadcast %cst_3 : f32 to vector<48x1xf32>
    %12 = arith.divf %10, %11 : vector<48x1xf32>
    %13 = vector.broadcast %5 : vector<48x1xf32> to vector<48x128xf32>
    %14 = arith.subf %1, %13 : vector<48x128xf32>
    %cst_4 = arith.constant 9.99999997E-7 : f32
    %15 = vector.broadcast %cst_4 : f32 to vector<48x1xf32>
    %16 = arith.addf %12, %15 : vector<48x1xf32>
    %17 = math.rsqrt %16 : vector<48x1xf32>
    %18 = vector.broadcast %17 : vector<48x1xf32> to vector<48x128xf32>
    %19 = arith.mulf %14, %18 : vector<48x128xf32>
    %c0_5 = arith.constant 0 : index
    %c0_6 = arith.constant 0 : index
    %20 = vector.load %arg2[%c0_5, %c0_6] : memref<1x128xf32, #tpu.memory_space<vmem>>, vector<1x128xf32>
    %21 = vector.broadcast %20 : vector<1x128xf32> to vector<48x128xf32>
    %22 = arith.mulf %19, %21 : vector<48x128xf32>
    %c0_7 = arith.constant 0 : index
    %c0_8 = arith.constant 0 : index
    %23 = vector.load %arg3[%c0_7, %c0_8] : memref<1x128xf32, #tpu.memory_space<vmem>>, vector<1x128xf32>
    %24 = vector.broadcast %23 : vector<1x128xf32> to vector<48x128xf32>
    %25 = arith.addf %22, %24 : vector<48x128xf32>
    %26 = arith.truncf %25 : vector<48x128xf32> to vector<48x128xbf16>
    %c0_9 = arith.constant 0 : index
    %c0_10 = arith.constant 0 : index
    %27 = vector.load %arg4[%c0_9, %c0_10] : memref<128x256xbf16, #tpu.memory_space<vmem>>, vector<128x256xbf16>
    %cst_11 = arith.constant dense<0.000000e+00> : vector<48x256xf32>
    %28 = tpu.matmul %26, %27, %cst_11 {dimension_numbers = #tpu.dot_dimension_numbers<[1], [0], [0], [1], [0, 0, 1, 1], [], []>} : vector<48x128xbf16>, vector<128x256xbf16>, vector<48x256xf32> -> vector<48x256xf32>
    %c0_12 = arith.constant 0 : index
    %c0_13 = arith.constant 0 : index
    %29 = vector.load %arg5[%c0_12, %c0_13] : memref<1x256xf32, #tpu.memory_space<vmem>>, vector<1x256xf32>
    %30 = vector.broadcast %29 : vector<1x256xf32> to vector<48x256xf32>
    %31 = arith.addf %28, %30 : vector<48x256xf32>
    %cst_14 = arith.constant 5.000000e-01 : f32
    %32 = vector.broadcast %cst_14 : f32 to vector<48x256xf32>
    %33 = arith.mulf %32, %31 : vector<48x256xf32>
    %cst_15 = arith.constant 0.707106769 : f32
    %34 = vector.broadcast %cst_15 : f32 to vector<48x256xf32>
    %35 = arith.mulf %31, %34 : vector<48x256xf32>
    %36 = math.absf %35 : vector<48x256xf32>
    %cst_16 = arith.constant 0.327591091 : f32
    %37 = vector.broadcast %cst_16 : f32 to vector<48x256xf32>
    %38 = arith.mulf %37, %36 : vector<48x256xf32>
    %cst_17 = arith.constant 1.000000e+00 : f32
    %39 = vector.broadcast %cst_17 : f32 to vector<48x256xf32>
    %40 = arith.addf %39, %38 : vector<48x256xf32>
    %41 = tpu.reciprocal %40 : vector<48x256xf32> -> vector<48x256xf32>
    %cst_18 = arith.constant 1.06140542 : f32
    %42 = vector.broadcast %cst_18 : f32 to vector<48x256xf32>
    %43 = arith.mulf %42, %41 : vector<48x256xf32>
    %cst_19 = arith.constant -1.45315206 : f32
    %44 = vector.broadcast %cst_19 : f32 to vector<48x256xf32>
    %45 = arith.addf %43, %44 : vector<48x256xf32>
    %46 = arith.mulf %45, %41 : vector<48x256xf32>
    %cst_20 = arith.constant 1.42141378 : f32
    %47 = vector.broadcast %cst_20 : f32 to vector<48x256xf32>
    %48 = arith.addf %46, %47 : vector<48x256xf32>
    %49 = arith.mulf %48, %41 : vector<48x256xf32>
    %cst_21 = arith.constant -0.284496725 : f32
    %50 = vector.broadcast %cst_21 : f32 to vector<48x256xf32>
    %51 = arith.addf %49, %50 : vector<48x256xf32>
    %52 = arith.mulf %51, %41 : vector<48x256xf32>
    %cst_22 = arith.constant 0.254829586 : f32
    %53 = vector.broadcast %cst_22 : f32 to vector<48x256xf32>
    %54 = arith.addf %52, %53 : vector<48x256xf32>
    %55 = arith.mulf %54, %41 : vector<48x256xf32>
    %cst_23 = arith.constant 0.000000e+00 : f32
    %56 = vector.broadcast %cst_23 : f32 to vector<48x256xf32>
    %57 = arith.subf %56, %36 : vector<48x256xf32>
    %58 = arith.mulf %57, %36 : vector<48x256xf32>
    %59 = math.exp %58 : vector<48x256xf32>
    %60 = arith.mulf %55, %59 : vector<48x256xf32>
    %cst_24 = arith.constant 1.000000e+00 : f32
    %61 = vector.broadcast %cst_24 : f32 to vector<48x256xf32>
    %62 = arith.subf %61, %60 : vector<48x256xf32>
    %cst_25 = arith.constant 0.000000e+00 : f32
    %63 = vector.broadcast %cst_25 : f32 to vector<48x256xf32>
    %64 = arith.cmpf oge, %35, %63 : vector<48x256xf32>
    %cst_26 = arith.constant 0.000000e+00 : f32
    %65 = vector.broadcast %cst_26 : f32 to vector<48x256xf32>
    %66 = arith.subf %65, %62 : vector<48x256xf32>
    %67 = arith.select %64, %62, %66 : vector<48x256xi1>, vector<48x256xf32>
    %cst_27 = arith.constant 1.000000e+00 : f32
    %68 = vector.broadcast %cst_27 : f32 to vector<48x256xf32>
    %69 = arith.addf %68, %67 : vector<48x256xf32>
    %70 = arith.mulf %33, %69 : vector<48x256xf32>
    %71 = arith.truncf %70 : vector<48x256xf32> to vector<48x256xbf16>
    %c0_28 = arith.constant 0 : index
    %c0_29 = arith.constant 0 : index
    %72 = vector.load %arg6[%c0_28, %c0_29] : memref<48x256xbf16, #tpu.memory_space<vmem>>, vector<48x256xbf16>
    tpu.vector_store %arg6[%c0_28, %c0_29], %71 {strides = array<i32>} : memref<48x256xbf16, #tpu.memory_space<vmem>>, vector<48x256xbf16>,
    return
  }
  func.func @transform_0(%arg0: i32) -> (i32, i32) {
    %c0_i32 = arith.constant 0 : i32
    %c0_i32_0 = arith.constant 0 : i32
    return %arg0, %c0_i32 : i32, i32
  }
  func.func @transform_1(%arg0: i32) -> (i32, i32) {
    %c0_i32 = arith.constant 0 : i32
    %c0_i32_0 = arith.constant 0 : i32
    %c0_i32_1 = arith.constant 0 : i32
    return %c0_i32, %c0_i32_0 : i32, i32
  }
  func.func @transform_2(%arg0: i32) -> (i32, i32) {
    %c0_i32 = arith.constant 0 : i32
    %c0_i32_0 = arith.constant 0 : i32
    %c0_i32_1 = arith.constant 0 : i32
    return %c0_i32, %c0_i32_0 : i32, i32
  }
  func.func @transform_3(%arg0: i32) -> (i32, i32) {
    %c0_i32 = arith.constant 0 : i32
    %c0_i32_0 = arith.constant 0 : i32
    %c0_i32_1 = arith.constant 0 : i32
    return %c0_i32, %c0_i32_0 : i32, i32
  }
  func.func @transform_4(%arg0: i32) -> (i32, i32) {
    %c0_i32 = arith.constant 0 : i32
    %c0_i32_0 = arith.constant 0 : i32
    %c0_i32_1 = arith.constant 0 : i32
    return %c0_i32, %c0_i32_0 : i32, i32
  }
  func.func @transform_5(%arg0: i32) -> (i32, i32) {
    %c0_i32 = arith.constant 0 : i32
    %c0_i32_0 = arith.constant 0 : i32
    return %arg0, %c0_i32 : i32, i32
  }
}

module attributes {stable_mosaic.version = 11 : i64} {
  func.func @kernel(%arg0: i32, %arg1: memref<48x256xbf16, #tpu.memory_space<vmem>>, %arg2: memref<256x128xbf16, #tpu.memory_space<vmem>>, %arg3: memref<1x128xf32, #tpu.memory_space<vmem>>, %arg4: memref<1x128xf32, #tpu.memory_space<vmem>>, %arg5: memref<48x128xbf16, #tpu.memory_space<vmem>>, %arg6: memref<48x128xbf16, #tpu.memory_space<vmem>>) attributes {dimension_semantics = [#tpu.dimension_semantics<parallel>], iteration_bounds = array<i64: 1>, scalar_prefetch = 0 : i64, scratch_operands = 0 : i64, tpu.core_type = #tpu.core_type<tc>, window_params = [{transform_indices = @transform_0, window_bounds = array<i64: 48, 256>}, {pipeline_mode = #tpu.pipeline_mode<synchronous>, transform_indices = @transform_1, window_bounds = array<i64: 256, 128>}, {pipeline_mode = #tpu.pipeline_mode<synchronous>, transform_indices = @transform_2, window_bounds = array<i64: 1, 128>}, {pipeline_mode = #tpu.pipeline_mode<synchronous>, transform_indices = @transform_3, window_bounds = array<i64: 1, 128>}, {transform_indices = @transform_4, window_bounds = array<i64: 48, 128>}, {transform_indices = @transform_5, window_bounds = array<i64: 48, 128>}]} {
    %c0 = arith.constant 0 : index
    %c0_0 = arith.constant 0 : index
    %0 = vector.load %arg1[%c0, %c0_0] : memref<48x256xbf16, #tpu.memory_space<vmem>>, vector<48x256xbf16>
    %c0_1 = arith.constant 0 : index
    %c0_2 = arith.constant 0 : index
    %1 = vector.load %arg2[%c0_1, %c0_2] : memref<256x128xbf16, #tpu.memory_space<vmem>>, vector<256x128xbf16>
    %cst = arith.constant dense<0.000000e+00> : vector<48x128xf32>
    %2 = tpu.matmul %0, %1, %cst {dimension_numbers = #tpu.dot_dimension_numbers<[1], [0], [0], [1], [0, 0, 1, 1], [], []>} : vector<48x256xbf16>, vector<256x128xbf16>, vector<48x128xf32> -> vector<48x128xf32>
    %c0_3 = arith.constant 0 : index
    %c0_4 = arith.constant 0 : index
    %3 = vector.load %arg3[%c0_3, %c0_4] : memref<1x128xf32, #tpu.memory_space<vmem>>, vector<1x128xf32>
    %4 = vector.broadcast %3 : vector<1x128xf32> to vector<48x128xf32>
    %5 = arith.addf %2, %4 : vector<48x128xf32>
    %c0_5 = arith.constant 0 : index
    %c0_6 = arith.constant 0 : index
    %6 = vector.load %arg5[%c0_5, %c0_6] : memref<48x128xbf16, #tpu.memory_space<vmem>>, vector<48x128xbf16>
    %7 = arith.extf %6 : vector<48x128xbf16> to vector<48x128xf32>
    %c0_7 = arith.constant 0 : index
    %c0_8 = arith.constant 0 : index
    %8 = vector.load %arg4[%c0_7, %c0_8] : memref<1x128xf32, #tpu.memory_space<vmem>>, vector<1x128xf32>
    %9 = vector.broadcast %8 : vector<1x128xf32> to vector<48x128xf32>
    %10 = arith.mulf %9, %5 : vector<48x128xf32>
    %11 = arith.addf %7, %10 : vector<48x128xf32>
    %12 = arith.truncf %11 : vector<48x128xf32> to vector<48x128xbf16>
    %c0_9 = arith.constant 0 : index
    %c0_10 = arith.constant 0 : index
    %13 = vector.load %arg6[%c0_9, %c0_10] : memref<48x128xbf16, #tpu.memory_space<vmem>>, vector<48x128xbf16>
    tpu.vector_store %arg6[%c0_9, %c0_10], %12 {strides = array<i32>} : memref<48x128xbf16, #tpu.memory_space<vmem>>, vector<48x128xbf16>,
    return
  }
  func.func @transform_0(%arg0: i32) -> (i32, i32) {
    %c0_i32 = arith.constant 0 : i32
    %c0_i32_0 = arith.constant 0 : i32
    return %arg0, %c0_i32 : i32, i32
  }
  func.func @transform_1(%arg0: i32) -> (i32, i32) {
    %c0_i32 = arith.constant 0 : i32
    %c0_i32_0 = arith.constant 0 : i32
    %c0_i32_1 = arith.constant 0 : i32
    return %c0_i32, %c0_i32_0 : i32, i32
  }
  func.func @transform_2(%arg0: i32) -> (i32, i32) {
    %c0_i32 = arith.constant 0 : i32
    %c0_i32_0 = arith.constant 0 : i32
    %c0_i32_1 = arith.constant 0 : i32
    return %c0_i32, %c0_i32_0 : i32, i32
  }
  func.func @transform_3(%arg0: i32) -> (i32, i32) {
    %c0_i32 = arith.constant 0 : i32
    %c0_i32_0 = arith.constant 0 : i32
    %c0_i32_1 = arith.constant 0 : i32
    return %c0_i32, %c0_i32_0 : i32, i32
  }
  func.func @transform_4(%arg0: i32) -> (i32, i32) {
    %c0_i32 = arith.constant 0 : i32
    %c0_i32_0 = arith.constant 0 : i32
    return %arg0, %c0_i32 : i32, i32
  }
  func.func @transform_5(%arg0: i32) -> (i32, i32) {
    %c0_i32 = arith.constant 0 : i32
    %c0_i32_0 = arith.constant 0 : i32
    return %arg0, %c0_i32 : i32, i32
  }
}

module attributes {stable_mosaic.version = 11 : i64} {
  func.func @kernel(%arg0: i32, %arg1: memref<32x128xbf16, #tpu.memory_space<vmem>>, %arg2: memref<1x128xf32, #tpu.memory_space<vmem>>, %arg3: memref<1x128xf32, #tpu.memory_space<vmem>>, %arg4: memref<128x256xbf16, #tpu.memory_space<vmem>>, %arg5: memref<1x256xf32, #tpu.memory_space<vmem>>, %arg6: memref<32x256xbf16, #tpu.memory_space<vmem>>) attributes {dimension_semantics = [#tpu.dimension_semantics<parallel>], iteration_bounds = array<i64: 1>, scalar_prefetch = 0 : i64, scratch_operands = 0 : i64, tpu.core_type = #tpu.core_type<tc>, window_params = [{transform_indices = @transform_0, window_bounds = array<i64: 32, 128>}, {pipeline_mode = #tpu.pipeline_mode<synchronous>, transform_indices = @transform_1, window_bounds = array<i64: 1, 128>}, {pipeline_mode = #tpu.pipeline_mode<synchronous>, transform_indices = @transform_2, window_bounds = array<i64: 1, 128>}, {pipeline_mode = #tpu.pipeline_mode<synchronous>, transform_indices = @transform_3, window_bounds = array<i64: 128, 256>}, {pipeline_mode = #tpu.pipeline_mode<synchronous>, transform_indices = @transform_4, window_bounds = array<i64: 1, 256>}, {transform_indices = @transform_5, window_bounds = array<i64: 32, 256>}]} {
    %c0 = arith.constant 0 : index
    %c0_0 = arith.constant 0 : index
    %0 = vector.load %arg1[%c0, %c0_0] : memref<32x128xbf16, #tpu.memory_space<vmem>>, vector<32x128xbf16>
    %1 = arith.extf %0 : vector<32x128xbf16> to vector<32x128xf32>
    %cst = arith.constant dense<0.000000e+00> : vector<32xf32>
    %2 = vector.multi_reduction <add>, %1, %cst [1] : vector<32x128xf32> to vector<32xf32>
    %3 = vector.shape_cast %2 : vector<32xf32> to vector<32x1xf32>
    %cst_1 = arith.constant 1.280000e+02 : f32
    %4 = vector.broadcast %cst_1 : f32 to vector<32x1xf32>
    %5 = arith.divf %3, %4 : vector<32x1xf32>
    %6 = vector.broadcast %5 : vector<32x1xf32> to vector<32x128xf32>
    %7 = arith.subf %1, %6 : vector<32x128xf32>
    %8 = arith.mulf %7, %7 : vector<32x128xf32>
    %cst_2 = arith.constant dense<0.000000e+00> : vector<32xf32>
    %9 = vector.multi_reduction <add>, %8, %cst_2 [1] : vector<32x128xf32> to vector<32xf32>
    %10 = vector.shape_cast %9 : vector<32xf32> to vector<32x1xf32>
    %cst_3 = arith.constant 1.280000e+02 : f32
    %11 = vector.broadcast %cst_3 : f32 to vector<32x1xf32>
    %12 = arith.divf %10, %11 : vector<32x1xf32>
    %13 = vector.broadcast %5 : vector<32x1xf32> to vector<32x128xf32>
    %14 = arith.subf %1, %13 : vector<32x128xf32>
    %cst_4 = arith.constant 9.99999997E-7 : f32
    %15 = vector.broadcast %cst_4 : f32 to vector<32x1xf32>
    %16 = arith.addf %12, %15 : vector<32x1xf32>
    %17 = math.rsqrt %16 : vector<32x1xf32>
    %18 = vector.broadcast %17 : vector<32x1xf32> to vector<32x128xf32>
    %19 = arith.mulf %14, %18 : vector<32x128xf32>
    %c0_5 = arith.constant 0 : index
    %c0_6 = arith.constant 0 : index
    %20 = vector.load %arg2[%c0_5, %c0_6] : memref<1x128xf32, #tpu.memory_space<vmem>>, vector<1x128xf32>
    %21 = vector.broadcast %20 : vector<1x128xf32> to vector<32x128xf32>
    %22 = arith.mulf %19, %21 : vector<32x128xf32>
    %c0_7 = arith.constant 0 : index
    %c0_8 = arith.constant 0 : index
    %23 = vector.load %arg3[%c0_7, %c0_8] : memref<1x128xf32, #tpu.memory_space<vmem>>, vector<1x128xf32>
    %24 = vector.broadcast %23 : vector<1x128xf32> to vector<32x128xf32>
    %25 = arith.addf %22, %24 : vector<32x128xf32>
    %26 = arith.truncf %25 : vector<32x128xf32> to vector<32x128xbf16>
    %c0_9 = arith.constant 0 : index
    %c0_10 = arith.constant 0 : index
    %27 = vector.load %arg4[%c0_9, %c0_10] : memref<128x256xbf16, #tpu.memory_space<vmem>>, vector<128x256xbf16>
    %cst_11 = arith.constant dense<0.000000e+00> : vector<32x256xf32>
    %28 = tpu.matmul %26, %27, %cst_11 {dimension_numbers = #tpu.dot_dimension_numbers<[1], [0], [0], [1], [0, 0, 1, 1], [], []>} : vector<32x128xbf16>, vector<128x256xbf16>, vector<32x256xf32> -> vector<32x256xf32>
    %c0_12 = arith.constant 0 : index
    %c0_13 = arith.constant 0 : index
    %29 = vector.load %arg5[%c0_12, %c0_13] : memref<1x256xf32, #tpu.memory_space<vmem>>, vector<1x256xf32>
    %30 = vector.broadcast %29 : vector<1x256xf32> to vector<32x256xf32>
    %31 = arith.addf %28, %30 : vector<32x256xf32>
    %cst_14 = arith.constant 0.000000e+00 : f32
    %32 = vector.broadcast %cst_14 : f32 to vector<32x256xf32>
    %33 = arith.maximumf %31, %32 : vector<32x256xf32>
    %34 = arith.truncf %33 : vector<32x256xf32> to vector<32x256xbf16>
    %c0_15 = arith.constant 0 : index
    %c0_16 = arith.constant 0 : index
    %35 = vector.load %arg6[%c0_15, %c0_16] : memref<32x256xbf16, #tpu.memory_space<vmem>>, vector<32x256xbf16>
    tpu.vector_store %arg6[%c0_15, %c0_16], %34 {strides = array<i32>} : memref<32x256xbf16, #tpu.memory_space<vmem>>, vector<32x256xbf16>,
    return
  }
  func.func @transform_0(%arg0: i32) -> (i32, i32) {
    %c0_i32 = arith.constant 0 : i32
    %c0_i32_0 = arith.constant 0 : i32
    return %arg0, %c0_i32 : i32, i32
  }
  func.func @transform_1(%arg0: i32) -> (i32, i32) {
    %c0_i32 = arith.constant 0 : i32
    %c0_i32_0 = arith.constant 0 : i32
    %c0_i32_1 = arith.constant 0 : i32
    return %c0_i32, %c0_i32_0 : i32, i32
  }
  func.func @transform_2(%arg0: i32) -> (i32, i32) {
    %c0_i32 = arith.constant 0 : i32
    %c0_i32_0 = arith.constant 0 : i32
    %c0_i32_1 = arith.constant 0 : i32
    return %c0_i32, %c0_i32_0 : i32, i32
  }
  func.func @transform_3(%arg0: i32) -> (i32, i32) {
    %c0_i32 = arith.constant 0 : i32
    %c0_i32_0 = arith.constant 0 : i32
    %c0_i32_1 = arith.constant 0 : i32
    return %c0_i32, %c0_i32_0 : i32, i32
  }
  func.func @transform_4(%arg0: i32) -> (i32, i32) {
    %c0_i32 = arith.constant 0 : i32
    %c0_i32_0 = arith.constant 0 : i32
    %c0_i32_1 = arith.constant 0 : i32
    return %c0_i32, %c0_i32_0 : i32, i32
  }
  func.func @transform_5(%arg0: i32) -> (i32, i32) {
    %c0_i32 = arith.constant 0 : i32
    %c0_i32_0 = arith.constant 0 : i32
    return %arg0, %c0_i32 : i32, i32
  }
}

module attributes {stable_mosaic.version = 11 : i64} {
  func.func @kernel(%arg0: i32, %arg1: memref<32x128xbf16, #tpu.memory_space<vmem>>, %arg2: memref<128x128xbf16, #tpu.memory_space<vmem>>, %arg3: memref<1x128xf32, #tpu.memory_space<vmem>>, %arg4: memref<32x128xbf16, #tpu.memory_space<vmem>>) attributes {dimension_semantics = [#tpu.dimension_semantics<parallel>], iteration_bounds = array<i64: 1>, scalar_prefetch = 0 : i64, scratch_operands = 0 : i64, tpu.core_type = #tpu.core_type<tc>, window_params = [{transform_indices = @transform_0, window_bounds = array<i64: 32, 128>}, {pipeline_mode = #tpu.pipeline_mode<synchronous>, transform_indices = @transform_1, window_bounds = array<i64: 128, 128>}, {pipeline_mode = #tpu.pipeline_mode<synchronous>, transform_indices = @transform_2, window_bounds = array<i64: 1, 128>}, {transform_indices = @transform_3, window_bounds = array<i64: 32, 128>}]} {
    %c0 = arith.constant 0 : index
    %c0_0 = arith.constant 0 : index
    %0 = vector.load %arg1[%c0, %c0_0] : memref<32x128xbf16, #tpu.memory_space<vmem>>, vector<32x128xbf16>
    %c0_1 = arith.constant 0 : index
    %c0_2 = arith.constant 0 : index
    %1 = vector.load %arg2[%c0_1, %c0_2] : memref<128x128xbf16, #tpu.memory_space<vmem>>, vector<128x128xbf16>
    %cst = arith.constant dense<0.000000e+00> : vector<32x128xf32>
    %2 = tpu.matmul %0, %1, %cst {dimension_numbers = #tpu.dot_dimension_numbers<[1], [0], [0], [1], [0, 0, 1, 1], [], []>} : vector<32x128xbf16>, vector<128x128xbf16>, vector<32x128xf32> -> vector<32x128xf32>
    %c0_3 = arith.constant 0 : index
    %c0_4 = arith.constant 0 : index
    %3 = vector.load %arg3[%c0_3, %c0_4] : memref<1x128xf32, #tpu.memory_space<vmem>>, vector<1x128xf32>
    %4 = vector.broadcast %3 : vector<1x128xf32> to vector<32x128xf32>
    %5 = arith.addf %2, %4 : vector<32x128xf32>
    %cst_5 = arith.constant 0.000000e+00 : f32
    %6 = vector.broadcast %cst_5 : f32 to vector<32x128xf32>
    %7 = arith.maximumf %5, %6 : vector<32x128xf32>
    %8 = arith.truncf %7 : vector<32x128xf32> to vector<32x128xbf16>
    %c0_6 = arith.constant 0 : index
    %c0_7 = arith.constant 0 : index
    %9 = vector.load %arg4[%c0_6, %c0_7] : memref<32x128xbf16, #tpu.memory_space<vmem>>, vector<32x128xbf16>
    tpu.vector_store %arg4[%c0_6, %c0_7], %8 {strides = array<i32>} : memref<32x128xbf16, #tpu.memory_space<vmem>>, vector<32x128xbf16>,
    return
  }
  func.func @transform_0(%arg0: i32) -> (i32, i32) {
    %c0_i32 = arith.constant 0 : i32
    %c0_i32_0 = arith.constant 0 : i32
    return %arg0, %c0_i32 : i32, i32
  }
  func.func @transform_1(%arg0: i32) -> (i32, i32) {
    %c0_i32 = arith.constant 0 : i32
    %c0_i32_0 = arith.constant 0 : i32
    %c0_i32_1 = arith.constant 0 : i32
    return %c0_i32, %c0_i32_0 : i32, i32
  }
  func.func @transform_2(%arg0: i32) -> (i32, i32) {
    %c0_i32 = arith.constant 0 : i32
    %c0_i32_0 = arith.constant 0 : i32
    %c0_i32_1 = arith.constant 0 : i32
    return %c0_i32, %c0_i32_0 : i32, i32
  }
  func.func @transform_3(%arg0: i32) -> (i32, i32) {
    %c0_i32 = arith.constant 0 : i32
    %c0_i32_0 = arith.constant 0 : i32
    return %arg0, %c0_i32 : i32, i32
  }
}

</mosaic_0001>

<llo_original>
// kernel: lorat_forward.16
$region0: #{lorat_forward.16}
  #allocation0 [shape = 'u32[]', space=smem, size = 0x4, offset = 0x4, fixed_abs, tag = 'smem constant byte address 0x4 - core index']
  #allocation1 [shape = 'u32[144,128]{1,0:T(1,128)}', space=vmem, size = 0x12000, scoped, tag = 'internal scratch']
  %s0 = inlined_call_operand.vmem [shape: bf16[32,48], index: 0, kind: input, shape index: {}]
  %s1 = inlined_call_operand.vmem [shape: bf16[48,128], index: 1, kind: input, shape index: {}]
  %s2 = inlined_call_operand.vmem [shape: f32[1,128], index: 2, kind: input, shape index: {}]
  %s3 = inlined_call_operand.vmem [shape: bf16[32,128], index: 3, kind: output, shape index: {}]
  %s4 = sld [smem:[#allocation0]]
  $region22: #{lorat_forward.16} parent=0
    _
  %s6 = ssub.s32 1, %s4
  %s7 = scalar_select 0, %s6, %s4
  // Predicated region
  $region2: #{lorat_forward.16} parent=0 // pred_check
    _
  $region3: #{lorat_forward.16} parent=0 // pred_check_branch
    %9 = sbr.rel (0) target = $region5
  $region4: #{lorat_forward.16} parent=0 // pred_region
    _
  $region5: #{lorat_forward.16} parent=0 // pred_fallthru
    _
  // Predicated region
  $region6: #{lorat_forward.16} parent=0 // pred_check
    _
  $region7: #{lorat_forward.16} parent=0 // pred_check_branch
    %11 = sbr.rel (0) target = $region9
  $region8: #{lorat_forward.16} parent=0 // pred_region
    _
  $region9: #{lorat_forward.16} parent=0 // pred_fallthru
    _
  // Predicated region
  $region10: #{lorat_forward.16} parent=0 // pred_check
    _
  $region11: #{lorat_forward.16} parent=0 // pred_check_branch
    %13 = sbr.rel (0) target = $region13
  $region12: #{lorat_forward.16} parent=0 // pred_region
    _
  $region13: #{lorat_forward.16} parent=0 // pred_fallthru
    _
  %v15 = vld [vmem:[%s0] sm:$0xf]
  %v16 = vld [vmem:[%s0 + $0x4] sm:$0xf]
  %v17 = vld [vmem:[%s0 + $0x8] sm:$0xf]
  %v18 = vld [vmem:[%s0 + $0xc] sm:$0xf]
  %v19 = vld [vmem:[%s1] sm:$0xf]
  %v20 = vld [vmem:[%s1 + $0x4] sm:$0xf]
  %v21 = vld [vmem:[%s1 + $0x8] sm:$0xf]
  %v22 = vld [vmem:[%s1 + $0xc] sm:$0xf]
  %v23 = vld [vmem:[%s1 + $0x10] sm:$0xf]
  %v24 = vld [vmem:[%s1 + $0x14] sm:$0xf]
  %v25 = vld [vmem:[%s2] sm:$0x1]
  %v27 = vlaneseq
  %v28 = vshrl.u32 %v27, 7
  %v29 = vsub.s32 0, %v28
  %v30 = vrot.slane %v25, %v29
  %v36 = vunpack.c.l.b16 %v15
  %v37 = vunpack.c.l.b16 %v16
  %v38 = vunpack.c.l.b16 %v17
  %v39 = vunpack.c.l.b16 %v18
  %v40 = vpack.c.b16 %v37, %v36
  %v41 = vpack.c.b16 %v39, %v38
  %v48 = vunpack.c.l.b16 %v19
  %v49 = vunpack.c.l.b16 %v20
  %v50 = vunpack.c.l.b16 %v21
  %v51 = vunpack.c.l.b16 %v22
  %v52 = vunpack.c.l.b16 %v23
  %v53 = vunpack.c.l.b16 %v24
  %v54 = vpack.c.b16 %v49, %v48
  %v55 = vpack.c.b16 %v51, %v50
  %v56 = vpack.c.b16 %v53, %v52
  %vm60 = vcmask 392192
  %v62 = vsel %vm60, %v40, 0
  %v65 = vsel %vm60, %v41, 0
  %67 = vmatprep.subr.bf16.mxu0 0
  %68 = vmatpush1.bf16.msra.mxu0 0
  %69 = vmatprep.subr.bf16.mxu0 0
  %70 = vmatpush1.bf16.msra.mxu0 0
  %71 = vmatprep.subr.bf16.mxu0 0
  %72 = vmatpush1.bf16.msra.mxu0 0
  %73 = vmatprep.subr.bf16.mxu0 0
  %74 = vmatpush1.bf16.msra.mxu0 0
  %75 = vmatprep.subr.bf16.mxu0 0
  %76 = vmatpush1.bf16.msra.mxu0 0
  %77 = vmatprep.subr.bf16.mxu0 0
  %78 = vmatpush1.bf16.msra.mxu0 %v56
  %79 = vmatprep.subr.bf16.mxu0 0
  %80 = vmatpush1.bf16.msra.mxu0 %v55
  %81 = vmatprep.subr.bf16.mxu0 0
  %82 = vmatpush1.bf16.msra.mxu0 %v54
  %83 = vmatprep.subr.bf16.mxu0 0
  %84 = vmatpush2.bf16.msra.mxu0 0
  %85 = vmatprep.subr.bf16.mxu0 0
  %86 = vmatpush2.bf16.msra.mxu0 0
  %87 = vmatprep.subr.bf16.mxu0 0
  %88 = vmatpush2.bf16.msra.mxu0 0
  %89 = vmatprep.subr.bf16.mxu0 0
  %90 = vmatpush2.bf16.msra.mxu0 0
  %91 = vmatprep.subr.bf16.mxu0 0
  %92 = vmatpush2.bf16.msra.mxu0 0
  %93 = vmatprep.subr.bf16.mxu0 0
  %94 = vmatpush2.bf16.msra.mxu0 0
  %95 = vmatprep.subr.bf16.mxu0 0
  %96 = vmatpush2.bf16.msra.mxu0 0
  %97 = vmatprep.subr.bf16.mxu0 0
  %98 = vmatpush2.bf16.msra.mxu0 0
  %99 = vmatprep.mubr.bf16.mxu0 0
  %100 = vmatmul.mubr.bf16.gmra.mxu0 %v62
  %v101 = vpop.f32.mrf.mxu0
  %v102 = vadd.f32 %v30, %v101
  %v103 = vpop.f32.mrf.mxu0
  %v104 = vpop.f32.mrf.mxu0
  %v105 = vadd.f32 %v30, %v104
  %v106 = vpop.f32.mrf.mxu0
  %107 = vmatprep.mubr.bf16.mxu0 0
  %108 = vmatmul.mubr.bf16.gmra.mxu0 %v65
  %v109 = vpop.f32.mrf.mxu0
  %v110 = vadd.f32 %v30, %v109
  %v111 = vpop.f32.mrf.mxu0
  %v112 = vpop.f32.mrf.mxu0
  %v113 = vadd.f32 %v30, %v112
  %v114 = vpop.f32.mrf.mxu0
  %115 = vdwg.mxu0
  %v116 = vpack.c.bf16 %v105, %v102
  %v117 = vpack.c.bf16 %v113, %v110
  %v120 = vunpack.c.l.b16 %v116
  %v121 = vunpack.c.h.b16 %v116
  %v122 = vunpack.c.l.b16 %v117
  %v123 = vunpack.c.h.b16 %v117
  %v124 = vpack.c.b16 %v120, %v120
  %v125 = vpack.c.b16 %v121, %v121
  %v126 = vpack.c.b16 %v122, %v122
  %v127 = vpack.c.b16 %v123, %v123
  %132 = vst [vmem:[%s3] sm:$0xf] %v124
  %133 = vst [vmem:[%s3 + $0x4] sm:$0xf] %v125
  %134 = vst [vmem:[%s3 + $0x8] sm:$0xf] %v126
  %135 = vst [vmem:[%s3 + $0xc] sm:$0xf] %v127
  // Predicated region
  $region14: #{lorat_forward.16} parent=0 // pred_check
    _
  $region15: #{lorat_forward.16} parent=0 // pred_check_branch
    %137 = sbr.rel (0) target = $region17
  $region16: #{lorat_forward.16} parent=0 // pred_region
    _
  $region17: #{lorat_forward.16} parent=0 // pred_fallthru
    _
  // Predicated region
  $region18: #{lorat_forward.16} parent=0 // pred_check
    _
  $region19: #{lorat_forward.16} parent=0 // pred_check_branch
    %139 = sbr.rel (0) target = $region21
  $region20: #{lorat_forward.16} parent=0 // pred_region
    _
  $region21: #{lorat_forward.16} parent=0 // pred_fallthru
    _

// kernel: lorat_forward.15
$region0: #{lorat_forward.15}
  #allocation0 [shape = 'u32[]', space=smem, size = 0x4, offset = 0x4, fixed_abs, tag = 'smem constant byte address 0x4 - core index']
  #allocation1 [shape = 'u32[144,128]{1,0:T(1,128)}', space=vmem, size = 0x12000, scoped, tag = 'internal scratch']
  %s0 = inlined_call_operand.vmem [shape: bf16[16,48], index: 0, kind: input, shape index: {}]
  %s1 = inlined_call_operand.vmem [shape: bf16[48,128], index: 1, kind: input, shape index: {}]
  %s2 = inlined_call_operand.vmem [shape: f32[1,128], index: 2, kind: input, shape index: {}]
  %s3 = inlined_call_operand.vmem [shape: bf16[16,128], index: 3, kind: output, shape index: {}]
  %s4 = sld [smem:[#allocation0]]
  $region22: #{lorat_forward.15} parent=0
    _
  %s6 = ssub.s32 1, %s4
  %s7 = scalar_select 0, %s6, %s4
  // Predicated region
  $region2: #{lorat_forward.15} parent=0 // pred_check
    _
  $region3: #{lorat_forward.15} parent=0 // pred_check_branch
    %9 = sbr.rel (0) target = $region5
  $region4: #{lorat_forward.15} parent=0 // pred_region
    _
  $region5: #{lorat_forward.15} parent=0 // pred_fallthru
    _
  // Predicated region
  $region6: #{lorat_forward.15} parent=0 // pred_check
    _
  $region7: #{lorat_forward.15} parent=0 // pred_check_branch
    %11 = sbr.rel (0) target = $region9
  $region8: #{lorat_forward.15} parent=0 // pred_region
    _
  $region9: #{lorat_forward.15} parent=0 // pred_fallthru
    _
  // Predicated region
  $region10: #{lorat_forward.15} parent=0 // pred_check
    _
  $region11: #{lorat_forward.15} parent=0 // pred_check_branch
    %13 = sbr.rel (0) target = $region13
  $region12: #{lorat_forward.15} parent=0 // pred_region
    _
  $region13: #{lorat_forward.15} parent=0 // pred_fallthru
    _
  %v15 = vld [vmem:[%s0] sm:$0xf]
  %v16 = vld [vmem:[%s0 + $0x4] sm:$0xf]
  %v17 = vld [vmem:[%s1] sm:$0xf]
  %v18 = vld [vmem:[%s1 + $0x4] sm:$0xf]
  %v19 = vld [vmem:[%s1 + $0x8] sm:$0xf]
  %v20 = vld [vmem:[%s1 + $0xc] sm:$0xf]
  %v21 = vld [vmem:[%s1 + $0x10] sm:$0xf]
  %v22 = vld [vmem:[%s1 + $0x14] sm:$0xf]
  %v23 = vld [vmem:[%s2] sm:$0x1]
  %v25 = vlaneseq
  %v26 = vshrl.u32 %v25, 7
  %v27 = vsub.s32 0, %v26
  %v28 = vrot.slane %v23, %v27
  %v32 = vunpack.c.l.b16 %v15
  %v33 = vunpack.c.l.b16 %v16
  %v34 = vpack.c.b16 %v33, %v32
  %v41 = vunpack.c.l.b16 %v17
  %v42 = vunpack.c.l.b16 %v18
  %v43 = vunpack.c.l.b16 %v19
  %v44 = vunpack.c.l.b16 %v20
  %v45 = vunpack.c.l.b16 %v21
  %v46 = vunpack.c.l.b16 %v22
  %v47 = vpack.c.b16 %v42, %v41
  %v48 = vpack.c.b16 %v44, %v43
  %v49 = vpack.c.b16 %v46, %v45
  %vm53 = vcmask 392192
  %v55 = vsel %vm53, %v34, 0
  %57 = vmatprep.subr.bf16.mxu0 0
  %58 = vmatpush1.bf16.msra.mxu0 0
  %59 = vmatprep.subr.bf16.mxu0 0
  %60 = vmatpush1.bf16.msra.mxu0 0
  %61 = vmatprep.subr.bf16.mxu0 0
  %62 = vmatpush1.bf16.msra.mxu0 0
  %63 = vmatprep.subr.bf16.mxu0 0
  %64 = vmatpush1.bf16.msra.mxu0 0
  %65 = vmatprep.subr.bf16.mxu0 0
  %66 = vmatpush1.bf16.msra.mxu0 0
  %67 = vmatprep.subr.bf16.mxu0 0
  %68 = vmatpush1.bf16.msra.mxu0 %v49
  %69 = vmatprep.subr.bf16.mxu0 0
  %70 = vmatpush1.bf16.msra.mxu0 %v48
  %71 = vmatprep.subr.bf16.mxu0 0
  %72 = vmatpush1.bf16.msra.mxu0 %v47
  %73 = vmatprep.subr.bf16.mxu0 0
  %74 = vmatpush2.bf16.msra.mxu0 0
  %75 = vmatprep.subr.bf16.mxu0 0
  %76 = vmatpush2.bf16.msra.mxu0 0
  %77 = vmatprep.subr.bf16.mxu0 0
  %78 = vmatpush2.bf16.msra.mxu0 0
  %79 = vmatprep.subr.bf16.mxu0 0
  %80 = vmatpush2.bf16.msra.mxu0 0
  %81 = vmatprep.subr.bf16.mxu0 0
  %82 = vmatpush2.bf16.msra.mxu0 0
  %83 = vmatprep.subr.bf16.mxu0 0
  %84 = vmatpush2.bf16.msra.mxu0 0
  %85 = vmatprep.subr.bf16.mxu0 0
  %86 = vmatpush2.bf16.msra.mxu0 0
  %87 = vmatprep.subr.bf16.mxu0 0
  %88 = vmatpush2.bf16.msra.mxu0 0
  %89 = vmatprep.mubr.bf16.mxu0 0
  %90 = vmatmul.mubr.bf16.gmra.mxu0 %v55
  %v91 = vpop.f32.mrf.mxu0
  %v92 = vadd.f32 %v28, %v91
  %v93 = vpop.f32.mrf.mxu0
  %v94 = vpop.f32.mrf.mxu0
  %v95 = vadd.f32 %v28, %v94
  %v96 = vpop.f32.mrf.mxu0
  %97 = vdwg.mxu0
  %v98 = vpack.c.bf16 %v95, %v92
  %v100 = vunpack.c.l.b16 %v98
  %v101 = vunpack.c.h.b16 %v98
  %v102 = vpack.c.b16 %v100, %v100
  %v103 = vpack.c.b16 %v101, %v101
  %106 = vst [vmem:[%s3] sm:$0xf] %v102
  %107 = vst [vmem:[%s3 + $0x4] sm:$0xf] %v103
  // Predicated region
  $region14: #{lorat_forward.15} parent=0 // pred_check
    _
  $region15: #{lorat_forward.15} parent=0 // pred_check_branch
    %109 = sbr.rel (0) target = $region17
  $region16: #{lorat_forward.15} parent=0 // pred_region
    _
  $region17: #{lorat_forward.15} parent=0 // pred_fallthru
    _
  // Predicated region
  $region18: #{lorat_forward.15} parent=0 // pred_check
    _
  $region19: #{lorat_forward.15} parent=0 // pred_check_branch
    %111 = sbr.rel (0) target = $region21
  $region20: #{lorat_forward.15} parent=0 // pred_region
    _
  $region21: #{lorat_forward.15} parent=0 // pred_fallthru
    _

// kernel: lorat_forward.19
$region0: #{lorat_forward.19}
  #allocation0 [shape = 'u32[]', space=smem, size = 0x4, offset = 0x4, fixed_abs, tag = 'smem constant byte address 0x4 - core index']
  #allocation1 [shape = 'u32[144,128]{1,0:T(1,128)}', space=vmem, size = 0x12000, scoped, tag = 'internal scratch']
  %s0 = inlined_call_operand.vmem [shape: bf16[48,128], index: 0, kind: input, shape index: {}]
  %s1 = inlined_call_operand.vmem [shape: bf16[128,128], index: 1, kind: input, shape index: {}]
  %s2 = inlined_call_operand.vmem [shape: f32[1,128], index: 2, kind: input, shape index: {}]
  %s3 = inlined_call_operand.vmem [shape: f32[1,128], index: 3, kind: input, shape index: {}]
  %s4 = inlined_call_operand.vmem [shape: bf16[48,128], index: 4, kind: input, shape index: {}]
  %s5 = inlined_call_operand.vmem [shape: bf16[48,128], index: 5, kind: output, shape index: {}]
  %s6 = sld [smem:[#allocation0]]
  $region30: #{lorat_forward.19} parent=0
    _
  %s8 = ssub.s32 1, %s6
  %s9 = scalar_select 0, %s8, %s6
  // Predicated region
  $region2: #{lorat_forward.19} parent=0 // pred_check
    _
  $region3: #{lorat_forward.19} parent=0 // pred_check_branch
    %11 = sbr.rel (0) target = $region5
  $region4: #{lorat_forward.19} parent=0 // pred_region
    _
  $region5: #{lorat_forward.19} parent=0 // pred_fallthru
    _
  // Predicated region
  $region6: #{lorat_forward.19} parent=0 // pred_check
    _
  $region7: #{lorat_forward.19} parent=0 // pred_check_branch
    %13 = sbr.rel (0) target = $region9
  $region8: #{lorat_forward.19} parent=0 // pred_region
    _
  $region9: #{lorat_forward.19} parent=0 // pred_fallthru
    _
  // Predicated region
  $region10: #{lorat_forward.19} parent=0 // pred_check
    _
  $region11: #{lorat_forward.19} parent=0 // pred_check_branch
    %15 = sbr.rel (0) target = $region13
  $region12: #{lorat_forward.19} parent=0 // pred_region
    _
  $region13: #{lorat_forward.19} parent=0 // pred_fallthru
    _
  // Predicated region
  $region14: #{lorat_forward.19} parent=0 // pred_check
    _
  $region15: #{lorat_forward.19} parent=0 // pred_check_branch
    %17 = sbr.rel (0) target = $region17
  $region16: #{lorat_forward.19} parent=0 // pred_region
    _
  $region17: #{lorat_forward.19} parent=0 // pred_fallthru
    _
  // Predicated region
  $region18: #{lorat_forward.19} parent=0 // pred_check
    _
  $region19: #{lorat_forward.19} parent=0 // pred_check_branch
    %19 = sbr.rel (0) target = $region21
  $region20: #{lorat_forward.19} parent=0 // pred_region
    _
  $region21: #{lorat_forward.19} parent=0 // pred_fallthru
    _
  %v21 = vld [vmem:[%s0] sm:$0xf]
  %v22 = vld [vmem:[%s0 + $0x4] sm:$0xf]
  %v23 = vld [vmem:[%s0 + $0x8] sm:$0xf]
  %v24 = vld [vmem:[%s0 + $0xc] sm:$0xf]
  %v25 = vld [vmem:[%s0 + $0x10] sm:$0xf]
  %v26 = vld [vmem:[%s0 + $0x14] sm:$0xf]
  %v27 = vld [vmem:[%s1] sm:$0xf]
  %v28 = vld [vmem:[%s1 + $0x4] sm:$0xf]
  %v29 = vld [vmem:[%s1 + $0x8] sm:$0xf]
  %v30 = vld [vmem:[%s1 + $0xc] sm:$0xf]
  %v31 = vld [vmem:[%s1 + $0x10] sm:$0xf]
  %v32 = vld [vmem:[%s1 + $0x14] sm:$0xf]
  %v33 = vld [vmem:[%s1 + $0x18] sm:$0xf]
  %v34 = vld [vmem:[%s1 + $0x1c] sm:$0xf]
  %v35 = vld [vmem:[%s1 + $0x20] sm:$0xf]
  %v36 = vld [vmem:[%s1 + $0x24] sm:$0xf]
  %v37 = vld [vmem:[%s1 + $0x28] sm:$0xf]
  %v38 = vld [vmem:[%s1 + $0x2c] sm:$0xf]
  %v39 = vld [vmem:[%s1 + $0x30] sm:$0xf]
  %v40 = vld [vmem:[%s1 + $0x34] sm:$0xf]
  %v41 = vld [vmem:[%s1 + $0x38] sm:$0xf]
  %v42 = vld [vmem:[%s1 + $0x3c] sm:$0xf]
  %v43 = vld [vmem:[%s2] sm:$0x1]
  %v45 = vlaneseq
  %v46 = vshrl.u32 %v45, 7
  %v47 = vsub.s32 0, %v46
  %v48 = vrot.slane %v43, %v47
  %v56 = vunpack.c.l.b16 %v21
  %v57 = vunpack.c.l.b16 %v22
  %v58 = vunpack.c.l.b16 %v23
  %v59 = vunpack.c.l.b16 %v24
  %v60 = vunpack.c.l.b16 %v25
  %v61 = vunpack.c.l.b16 %v26
  %v62 = vpack.c.b16 %v57, %v56
  %v63 = vpack.c.b16 %v59, %v58
  %v64 = vpack.c.b16 %v61, %v60
  %v84 = vunpack.c.l.b16 %v27
  %v85 = vunpack.c.l.b16 %v28
  %v86 = vunpack.c.l.b16 %v29
  %v87 = vunpack.c.l.b16 %v30
  %v88 = vunpack.c.l.b16 %v31
  %v89 = vunpack.c.l.b16 %v32
  %v90 = vunpack.c.l.b16 %v33
  %v91 = vunpack.c.l.b16 %v34
  %v92 = vunpack.c.l.b16 %v35
  %v93 = vunpack.c.l.b16 %v36
  %v94 = vunpack.c.l.b16 %v37
  %v95 = vunpack.c.l.b16 %v38
  %v96 = vunpack.c.l.b16 %v39
  %v97 = vunpack.c.l.b16 %v40
  %v98 = vunpack.c.l.b16 %v41
  %v99 = vunpack.c.l.b16 %v42
  %v100 = vpack.c.b16 %v85, %v84
  %v101 = vpack.c.b16 %v87, %v86
  %v102 = vpack.c.b16 %v89, %v88
  %v103 = vpack.c.b16 %v91, %v90
  %v104 = vpack.c.b16 %v93, %v92
  %v105 = vpack.c.b16 %v95, %v94
  %v106 = vpack.c.b16 %v97, %v96
  %v107 = vpack.c.b16 %v99, %v98
  %116 = vmatprep.subr.bf16.mxu0 0
  %117 = vmatpush1.bf16.msra.mxu0 %v107
  %118 = vmatprep.subr.bf16.mxu0 0
  %119 = vmatpush1.bf16.msra.mxu0 %v106
  %120 = vmatprep.subr.bf16.mxu0 0
  %121 = vmatpush1.bf16.msra.mxu0 %v105
  %122 = vmatprep.subr.bf16.mxu0 0
  %123 = vmatpush1.bf16.msra.mxu0 %v104
  %124 = vmatprep.subr.bf16.mxu0 0
  %125 = vmatpush1.bf16.msra.mxu0 %v103
  %126 = vmatprep.subr.bf16.mxu0 0
  %127 = vmatpush1.bf16.msra.mxu0 %v102
  %128 = vmatprep.subr.bf16.mxu0 0
  %129 = vmatpush1.bf16.msra.mxu0 %v101
  %130 = vmatprep.subr.bf16.mxu0 0
  %131 = vmatpush1.bf16.msra.mxu0 %v100
  %132 = vmatprep.subr.bf16.mxu0 0
  %133 = vmatpush2.bf16.msra.mxu0 0
  %134 = vmatprep.subr.bf16.mxu0 0
  %135 = vmatpush2.bf16.msra.mxu0 0
  %136 = vmatprep.subr.bf16.mxu0 0
  %137 = vmatpush2.bf16.msra.mxu0 0
  %138 = vmatprep.subr.bf16.mxu0 0
  %139 = vmatpush2.bf16.msra.mxu0 0
  %140 = vmatprep.subr.bf16.mxu0 0
  %141 = vmatpush2.bf16.msra.mxu0 0
  %142 = vmatprep.subr.bf16.mxu0 0
  %143 = vmatpush2.bf16.msra.mxu0 0
  %144 = vmatprep.subr.bf16.mxu0 0
  %145 = vmatpush2.bf16.msra.mxu0 0
  %146 = vmatprep.subr.bf16.mxu0 0
  %147 = vmatpush2.bf16.msra.mxu0 0
  %148 = vmatprep.mubr.bf16.mxu0 0
  %149 = vmatmul.mubr.bf16.gmra.mxu0 %v62
  %v150 = vpop.f32.mrf.mxu0
  %v151 = vadd.f32 %v48, %v150
  %v152 = vpop.f32.mrf.mxu0
  %v153 = vpop.f32.mrf.mxu0
  %v154 = vadd.f32 %v48, %v153
  %v155 = vpop.f32.mrf.mxu0
  %156 = vmatprep.mubr.bf16.mxu0 0
  %157 = vmatmul.mubr.bf16.gmra.mxu0 %v63
  %v158 = vpop.f32.mrf.mxu0
  %v159 = vadd.f32 %v48, %v158
  %v160 = vpop.f32.mrf.mxu0
  %v161 = vpop.f32.mrf.mxu0
  %v162 = vadd.f32 %v48, %v161
  %v163 = vpop.f32.mrf.mxu0
  %164 = vmatprep.mubr.bf16.mxu0 0
  %165 = vmatmul.mubr.bf16.gmra.mxu0 %v64
  %v166 = vpop.f32.mrf.mxu0
  %v167 = vadd.f32 %v48, %v166
  %v168 = vpop.f32.mrf.mxu0
  %v169 = vpop.f32.mrf.mxu0
  %v170 = vadd.f32 %v48, %v169
  %v171 = vpop.f32.mrf.mxu0
  %172 = vdwg.mxu0
  %v173 = vld [vmem:[%s4] sm:$0xf]
  %v174 = vld [vmem:[%s4 + $0x4] sm:$0xf]
  %v175 = vld [vmem:[%s4 + $0x8] sm:$0xf]
  %v176 = vld [vmem:[%s4 + $0xc] sm:$0xf]
  %v177 = vld [vmem:[%s4 + $0x10] sm:$0xf]
  %v178 = vld [vmem:[%s4 + $0x14] sm:$0xf]
  %v179 = vunpack.c.l.bf16 %v173
  %v180 = vunpack.c.l.bf16 %v174
  %v181 = vunpack.c.l.bf16 %v175
  %v182 = vunpack.c.l.bf16 %v176
  %v183 = vunpack.c.l.bf16 %v177
  %v184 = vunpack.c.l.bf16 %v178
  %v185 = vld [vmem:[%s3] sm:$0x1]
  %v187 = vlaneseq
  %v188 = vshrl.u32 %v187, 7
  %v189 = vsub.s32 0, %v188
  %v190 = vrot.slane %v185, %v189
  %v192 = vmul.f32 %v190, %v151
  %v193 = vmul.f32 %v190, %v154
  %v194 = vmul.f32 %v190, %v159
  %v195 = vmul.f32 %v190, %v162
  %v196 = vmul.f32 %v190, %v167
  %v197 = vmul.f32 %v190, %v170
  %v198 = vadd.f32 %v179, %v192
  %v199 = vadd.f32 %v180, %v193
  %v200 = vadd.f32 %v181, %v194
  %v201 = vadd.f32 %v182, %v195
  %v202 = vadd.f32 %v183, %v196
  %v203 = vadd.f32 %v184, %v197
  %v204 = vpack.c.bf16 %v199, %v198
  %v205 = vpack.c.bf16 %v201, %v200
  %v206 = vpack.c.bf16 %v203, %v202
  %v210 = vunpack.c.l.b16 %v204
  %v211 = vunpack.c.h.b16 %v204
  %v212 = vunpack.c.l.b16 %v205
  %v213 = vunpack.c.h.b16 %v205
  %v214 = vunpack.c.l.b16 %v206
  %v215 = vunpack.c.h.b16 %v206
  %v216 = vpack.c.b16 %v210, %v210
  %v217 = vpack.c.b16 %v211, %v211
  %v218 = vpack.c.b16 %v212, %v212
  %v219 = vpack.c.b16 %v213, %v213
  %v220 = vpack.c.b16 %v214, %v214
  %v221 = vpack.c.b16 %v215, %v215
  %228 = vst [vmem:[%s5] sm:$0xf] %v216
  %229 = vst [vmem:[%s5 + $0x4] sm:$0xf] %v217
  %230 = vst [vmem:[%s5 + $0x8] sm:$0xf] %v218
  %231 = vst [vmem:[%s5 + $0xc] sm:$0xf] %v219
  %232 = vst [vmem:[%s5 + $0x10] sm:$0xf] %v220
  %233 = vst [vmem:[%s5 + $0x14] sm:$0xf] %v221
  // Predicated region
  $region22: #{lorat_forward.19} parent=0 // pred_check
    _
  $region23: #{lorat_forward.19} parent=0 // pred_check_branch
    %235 = sbr.rel (0) target = $region25
  $region24: #{lorat_forward.19} parent=0 // pred_region
    _
  $region25: #{lorat_forward.19} parent=0 // pred_fallthru
    _
  // Predicated region
  $region26: #{lorat_forward.19} parent=0 // pred_check
    _
  $region27: #{lorat_forward.19} parent=0 // pred_check_branch
    %237 = sbr.rel (0) target = $region29
  $region28: #{lorat_forward.19} parent=0 // pred_region
    _
  $region29: #{lorat_forward.19} parent=0 // pred_fallthru
    _

// kernel: lorat_forward.18
$region0: #{lorat_forward.18}
  #allocation0 [shape = 'u32[]', space=smem, size = 0x4, offset = 0x4, fixed_abs, tag = 'smem constant byte address 0x4 - core index']
  #allocation1 [shape = 'u32[144,128]{1,0:T(1,128)}', space=vmem, size = 0x12000, scoped, tag = 'internal scratch']
  %s0 = inlined_call_operand.vmem [shape: bf16[2,20,384], index: 0, kind: input, shape index: {}]
  %s1 = inlined_call_operand.vmem [shape: bf16[2,20,128], index: 1, kind: output, shape index: {}]
  %s2 = sld [smem:[#allocation0]]
  $region37: #{lorat_forward.18} parent=0
    _
  %s4 = ssub.s32 1, %s2
  %s5 = scalar_select 0, %s4, %s2
  loop: start=0, step=1, limit=4
  $region2: #{lorat_forward.18} parent=0 // loop_pre_header
    _
  $region3: #{lorat_forward.18} parent=0 // loop_header
    %s7 = sphi 0, %s11
    %p8 = scmp.ge.s32.totalorder %s7, 4
    %s14 = sphi 0, %s26
    %s15 = sphi 0, %s22
    %s16 = sphi 0, %s14
    %s17 = sphi 0, %s15
    %s18 = sphi 0, %s16
    %s19 = sphi 0, %s17
    %s31 = sphi 0, %s33
    %s34 = sphi 0, %s31
    %s35 = sphi 0, %s34
    %s51 = sphi 0, %s35
    %s59 = sphi 0, %s61
    %s62 = sphi 0, %s59
    %s63 = sphi 0, %s62
    %s79 = sphi 0, %s63
  $region4: #{lorat_forward.18} parent=0 // loop_header_branch
    %10 = sbr.rel (%p8) target = $region8
  $region5: #{lorat_forward.18} parent=0 // loop_body
    %s12 = ssub.s32 %s7, 1
    %s13 = ssub.s32 %s7, 2
    %s20 = sadd.s32 1, %s15
    %p21 = scmp.ge.s32.totalorder %s20, 1
    %s22 = scalar_select %p21, 0, %s20
    %s23 = sadd.s32 1, %s14
    %s24 = scalar_select %p21, %s23, %s14
    %p25 = scmp.ge.s32.totalorder %s24, 2
    %s26 = scalar_select %p25, 0, %s24
    %s27 = ssub.s32 %s14, %s26
    %s28 = ssub.s32 %s15, %s22
    %s29 = sor.u32 %s27, %s28
    %p30 = scmp.eq.s32.totalorder %s29, 0
    %s32 = sadd.s32 %s31, 1
    %s33 = scalar_select %p30, %s31, %s32
    %p36 = pneg %p30
    %p37 = scmp.eq.s32.totalorder %s7, 1
    %p38 = por %p36, %p37
    %p39 = scmp.ne.s32.totalorder %s31, %s34
    %p40 = scmp.eq.s32.totalorder %s7, 0
    %p41 = por %p39, %p40
    %p42 = scmp.ne.s32.totalorder %s31, %s34
    %p43 = scmp.eq.s32.totalorder %s12, 1
    %p44 = por %p42, %p43
    %p45 = scmp.ne.s32.totalorder %s34, %s35
    %p46 = scmp.eq.s32.totalorder %s12, 0
    %p47 = por %p45, %p46
    %p48 = scmp.ne.s32.totalorder %s34, %s35
    %p49 = scmp.eq.s32.totalorder %s13, 1
    %p50 = por %p48, %p49
    %p52 = scmp.ne.s32.totalorder %s35, %s51
    %p53 = scmp.eq.s32.totalorder %s13, 0
    %p54 = por %p52, %p53
    %s55 = ssub.s32 %s14, %s26
    %s56 = ssub.s32 %s15, %s22
    %s57 = sor.u32 %s55, %s56
    %p58 = scmp.eq.s32.totalorder %s57, 0
    %s60 = sadd.s32 %s59, 1
    %s61 = scalar_select %p58, %s59, %s60
    %p64 = pneg %p58
    %p65 = scmp.eq.s32.totalorder %s7, 1
    %p66 = por %p64, %p65
    %p67 = scmp.ne.s32.totalorder %s59, %s62
    %p68 = scmp.eq.s32.totalorder %s7, 0
    %p69 = por %p67, %p68
    %p70 = scmp.ne.s32.totalorder %s59, %s62
    %p71 = scmp.eq.s32.totalorder %s12, 1
    %p72 = por %p70, %p71
    %p73 = scmp.ne.s32.totalorder %s62, %s63
    %p74 = scmp.eq.s32.totalorder %s12, 0
    %p75 = por %p73, %p74
    %p76 = scmp.ne.s32.totalorder %s62, %s63
    %p77 = scmp.eq.s32.totalorder %s13, 1
    %p78 = por %p76, %p77
    %p80 = scmp.ne.s32.totalorder %s63, %s79
    %p81 = scmp.eq.s32.totalorder %s13, 0
    %p82 = por %p80, %p81
    %p83 = scmp.le.s32.totalorder 1, %s7
    %p84 = scmp.lt.s32.totalorder %s7, 3
    %p85 = pnand %p83, %p84
    %p86 = pneg %p85
    // Predicated region
    $region9: #{lorat_forward.18} parent=5 // pred_check
      _
    $region10: #{lorat_forward.18} parent=5 // pred_check_branch
      %88 = sbr.rel (%p85) target = $region12
    $region11: #{lorat_forward.18} parent=5 // pred_region
      %s89 = ssub.s32 %s7, 1
    $region12: #{lorat_forward.18} parent=5 // pred_fallthru
      _
    %p90 = scmp.lt.s32.totalorder %s7, 2
    // Predicated region
    $region13: #{lorat_forward.18} parent=5 // pred_check
      %p91 = pneg %p90
    $region14: #{lorat_forward.18} parent=5 // pred_check_branch
      %93 = sbr.rel (%p91) target = $region16
    $region15: #{lorat_forward.18} parent=5 // pred_region
      // Predicated region
      $region17: #{lorat_forward.18} parent=15 // pred_check
        %p94 = pneg %p41
      $region18: #{lorat_forward.18} parent=15 // pred_check_branch
        %96 = sbr.rel (%p94) target = $region20
      $region19: #{lorat_forward.18} parent=15 // pred_region
        %s97 = smul.u32 3, %s15
        %p98 = scmp.lt.s32.totalorder %s14, 1
        %s99 = scalar_select %p98, %s14, 1
        %p100 = scmp.lt.s32.totalorder %s97, 2
        %s101 = scalar_select %p100, %s97, 2
        %s102 = smul.addr %s99, 9
        %s103 = sadd.s32 %s101, %s102
        %s104 = smul.addr %s103, 4
        %s105 = scalar_lea.vmem %s0, %s104
        %s106 = smul.u32 3, %s15
      $region20: #{lorat_forward.18} parent=15 // pred_fallthru
        _
    $region16: #{lorat_forward.18} parent=5 // pred_fallthru
      _
    %p107 = scmp.le.s32.totalorder 1, %s7
    %p108 = scmp.lt.s32.totalorder %s7, 3
    %p109 = pnand %p107, %p108
    %p110 = pneg %p109
    // Predicated region
    $region21: #{lorat_forward.18} parent=5 // pred_check
      _
    $region22: #{lorat_forward.18} parent=5 // pred_check_branch
      %112 = sbr.rel (%p109) target = $region24
    $region23: #{lorat_forward.18} parent=5 // pred_region
      %s113 = ssub.s32 %s7, 1
      %s114 = smul.u32 3, %s17
      %p115 = scmp.lt.s32.totalorder %s16, 1
      %s116 = scalar_select %p115, %s16, 1
      %p117 = scmp.lt.s32.totalorder %s114, 2
      %s118 = scalar_select %p117, %s114, 2
      %s119 = smul.addr %s116, 9
      %s120 = sadd.s32 %s118, %s119
      %s121 = smul.addr %s120, 4
      %s122 = scalar_lea.vmem %s0, %s121
      %p123 = pneg %p47
      %p124 = pneg %p44
      %p125 = pneg %p75
      %p126 = pneg %p72
      %p127 = scmp.lt.s32.totalorder %s16, 1
      %s128 = scalar_select %p127, %s16, 1
      %p129 = scmp.lt.s32.totalorder %s17, 0
      %s130 = scalar_select %p129, %s17, 0
      %s131 = smul.addr %s128, 3
      %s132 = sadd.s32 %s130, %s131
      %s133 = smul.addr %s132, 4
      %s134 = scalar_lea.vmem %s1, %s133
      %s135 = smul.u32 3, %s17
      %p136 = scmp.lt.s32.totalorder %s16, 1
      %s137 = scalar_select %p136, %s16, 1
      %p138 = scmp.lt.s32.totalorder %s135, 2
      %s139 = scalar_select %p138, %s135, 2
      %s140 = smul.addr %s137, 9
      %s141 = sadd.s32 %s139, %s140
      %s142 = smul.addr %s141, 4
      %s143 = scalar_lea.vmem %s0, %s142
      %s144 = smul.u32 3, %s17
      %p145 = scmp.lt.s32.totalorder %s16, 1
      %s146 = scalar_select %p145, %s16, 1
      %p147 = scmp.lt.s32.totalorder %s17, 0
      %s148 = scalar_select %p147, %s17, 0
      %s149 = smul.addr %s146, 3
      %s150 = sadd.s32 %s148, %s149
      %s151 = smul.addr %s150, 4
      %s152 = scalar_lea.vmem %s1, %s151
      %v154 = vld [vmem:[%s143] sm:$0xff]
      %v155 = vld [vmem:[%s143 + $0x8] sm:$0xf]
      %v156 = vld [vmem:[%s143 + $0xc] sm:$0xff]
      %v157 = vld [vmem:[%s143 + $0x14] sm:$0xf]
      %v158 = vld [vmem:[%s143 + $0x18] sm:$0x33]
      %v159 = vld [vmem:[%s143 + $0x20] sm:$0x3]
      %v163 = vunpack.c.l.b16 %v154
      %v164 = vunpack.c.l.b16 %v156
      %v165 = vunpack.c.l.b16 %v158
      %v166 = vpack.c.b16 %v164, %v163
      %v167 = vpack.c.b16 %v165, %v165
      %v168 = vunpack.c.h.b16 %v154
      %v169 = vunpack.c.h.b16 %v156
      %v170 = vunpack.c.h.b16 %v158
      %v171 = vpack.c.b16 %v169, %v168
      %v172 = vpack.c.b16 %v170, %v170
      %vm173 = vcmask 523264
      %v175 = vsel %vm173, %v166, 0
      %v178 = vsel %vm173, %v167, 0
      %v181 = vsel %vm173, %v171, 0
      %v184 = vsel %vm173, %v172, 0
      %186 = vmatprep.subr.bf16.mxu0 0
      %187 = vmatpush1.bf16.xpose.msra.mxu0 0
      %188 = vmatprep.subr.bf16.mxu0 0
      %189 = vmatpush1.bf16.xpose.msra.mxu0 0
      %190 = vmatprep.subr.bf16.mxu0 0
      %191 = vmatpush1.bf16.xpose.msra.mxu0 0
      %192 = vmatprep.subr.bf16.mxu0 0
      %193 = vmatpush1.bf16.xpose.msra.mxu0 0
      %194 = vmatprep.subr.bf16.mxu0 0
      %195 = vmatpush1.bf16.xpose.msra.mxu0 0
      %196 = vmatprep.subr.bf16.mxu0 0
      %197 = vmatpush1.bf16.xpose.msra.mxu0 0
      %198 = vmatprep.subr.bf16.mxu0 0
      %199 = vmatpush1.bf16.xpose.msra.mxu0 %v184
      %200 = vmatprep.subr.bf16.mxu0 0
      %201 = vmatpush1.bf16.xpose.msra.mxu0 %v181
      %202 = vmatprep.subr.bf16.mxu0 0
      %203 = vmatpush2.bf16.xpose.msra.mxu0 0
      %204 = vmatprep.subr.bf16.mxu0 0
      %205 = vmatpush2.bf16.xpose.msra.mxu0 0
      %206 = vmatprep.subr.bf16.mxu0 0
      %207 = vmatpush2.bf16.xpose.msra.mxu0 0
      %208 = vmatprep.subr.bf16.mxu0 0
      %209 = vmatpush2.bf16.xpose.msra.mxu0 0
      %210 = vmatprep.subr.bf16.mxu0 0
      %211 = vmatpush2.bf16.xpose.msra.mxu0 0
      %212 = vmatprep.subr.bf16.mxu0 0
      %213 = vmatpush2.bf16.xpose.msra.mxu0 0
      %214 = vmatprep.subr.bf16.mxu0 0
      %215 = vmatpush2.bf16.xpose.msra.mxu0 0
      %216 = vmatprep.subr.bf16.mxu0 0
      %217 = vmatpush2.bf16.xpose.msra.mxu0 0
      %218 = vmatprep.mubr.bf16.mxu0 0
      %219 = vmatmul.mubr.bf16.gmra.mxu0 %v175
      %v220 = vpop.f32.mrf.mxu0
      %v221 = vadd.f32 0.0, %v220
      %v222 = vpop.f32.mrf.mxu0
      %v223 = vpop.f32.mrf.mxu0
      %v224 = vadd.f32 0.0, %v223
      %v225 = vpop.f32.mrf.mxu0
      %226 = vmatprep.mubr.bf16.mxu0 0
      %227 = vmatmul.mubr.bf16.gmra.mxu0 %v178
      %v228 = vpop.f32.mrf.mxu0
      %v229 = vadd.f32 0.0, %v228
      %v230 = vpop.f32.mrf.mxu0
      %v231 = vpop.f32.mrf.mxu0
      %v232 = vpop.f32.mrf.mxu0
      %233 = vdwg.mxu0
      %vm234 = vcmask 162816
      %v235 = vsel %vm234, %v221, -inf
      %236 = vmax.xlane.f32.xlu0 %v235
      %v237 = vpop.xlane.xlu0 %236
      %v238 = vsel %vm234, %v224, -inf
      %239 = vmax.xlane.f32.xlu0 %v238
      %v240 = vpop.xlane.xlu0 %239
      %vm241 = vcmask 158720
      %v242 = vsel %vm241, %v229, -inf
      %243 = vmax.xlane.f32.xlu0 %v242
      %v244 = vpop.xlane.xlu0 %243
      %v245 = vsub.f32 %v221, %v237
      %v246 = vsub.f32 %v224, %v240
      %v247 = vsub.f32 %v229, %v244
      %v248 = vmul.f32 %v245, 1.442695
      %v249 = vpow.pop %v248
      %v250 = vmul.f32 %v246, 1.442695
      %v251 = vpow.pop %v250
      %v252 = vmul.f32 %v247, 1.442695
      %v253 = vpow.pop %v252
      %v254 = vsel %vm234, %v249, 0.0
      %255 = vadd.xlane.f32.xlu0 %v254
      %v256 = vpop.xlane.xlu0 %255
      %v257 = vsel %vm234, %v251, 0.0
      %258 = vadd.xlane.f32.xlu0 %v257
      %v259 = vpop.xlane.xlu0 %258
      %v260 = vsel %vm241, %v253, 0.0
      %261 = vadd.xlane.f32.xlu0 %v260
      %v262 = vpop.xlane.xlu0 %261
      %v263 = vrcp.pop %v256
      %v264 = vrcp.pop %v259
      %v265 = vrcp.pop %v262
      %v266 = vmul.f32 %v249, %v263
      %v267 = vmul.f32 %v251, %v264
      %v268 = vmul.f32 %v253, %v265
      %v269 = vpack.c.bf16 %v267, %v266
      %v270 = vpack.c.bf16 %v268, %v268
      %v274 = vunpack.c.l.b16 %v155
      %v275 = vunpack.c.l.b16 %v157
      %v276 = vunpack.c.l.b16 %v159
      %v277 = vpack.c.b16 %v275, %v274
      %v278 = vpack.c.b16 %v276, %v276
      %v281 = vsel %vm234, %v269, 0
      %v284 = vsel %vm234, %v270, 0
      %vm286 = vcmask 1041408
      %v288 = vsel %vm286, %v278, 0
      %290 = vmatprep.subr.bf16.mxu0 0
      %291 = vmatpush1.bf16.msra.mxu0 0
      %292 = vmatprep.subr.bf16.mxu0 0
      %293 = vmatpush1.bf16.msra.mxu0 0
      %294 = vmatprep.subr.bf16.mxu0 0
      %295 = vmatpush1.bf16.msra.mxu0 0
      %296 = vmatprep.subr.bf16.mxu0 0
      %297 = vmatpush1.bf16.msra.mxu0 0
      %298 = vmatprep.subr.bf16.mxu0 0
      %299 = vmatpush1.bf16.msra.mxu0 0
      %300 = vmatprep.subr.bf16.mxu0 0
      %301 = vmatpush1.bf16.msra.mxu0 0
      %302 = vmatprep.subr.bf16.mxu0 0
      %303 = vmatpush1.bf16.msra.mxu0 %v288
      %304 = vmatprep.subr.bf16.mxu0 0
      %305 = vmatpush1.bf16.msra.mxu0 %v277
      %306 = vmatprep.subr.bf16.mxu0 0
      %307 = vmatpush2.bf16.msra.mxu0 0
      %308 = vmatprep.subr.bf16.mxu0 0
      %309 = vmatpush2.bf16.msra.mxu0 0
      %310 = vmatprep.subr.bf16.mxu0 0
      %311 = vmatpush2.bf16.msra.mxu0 0
      %312 = vmatprep.subr.bf16.mxu0 0
      %313 = vmatpush2.bf16.msra.mxu0 0
      %314 = vmatprep.subr.bf16.mxu0 0
      %315 = vmatpush2.bf16.msra.mxu0 0
      %316 = vmatprep.subr.bf16.mxu0 0
      %317 = vmatpush2.bf16.msra.mxu0 0
      %318 = vmatprep.subr.bf16.mxu0 0
      %319 = vmatpush2.bf16.msra.mxu0 0
      %320 = vmatprep.subr.bf16.mxu0 0
      %321 = vmatpush2.bf16.msra.mxu0 0
      %322 = vmatprep.mubr.bf16.mxu0 0
      %323 = vmatmul.mubr.bf16.gmra.mxu0 %v281
      %v324 = vpop.f32.mrf.mxu0
      %v325 = vadd.f32 0.0, %v324
      %v326 = vpop.f32.mrf.mxu0
      %v327 = vpop.f32.mrf.mxu0
      %v328 = vadd.f32 0.0, %v327
      %v329 = vpop.f32.mrf.mxu0
      %330 = vmatprep.mubr.bf16.mxu0 0
      %331 = vmatmul.mubr.bf16.gmra.mxu0 %v284
      %v332 = vpop.f32.mrf.mxu0
      %v333 = vadd.f32 0.0, %v332
      %v334 = vpop.f32.mrf.mxu0
      %v335 = vpop.f32.mrf.mxu0
      %v336 = vpop.f32.mrf.mxu0
      %337 = vdwg.mxu0
      %338 = vrot.lane.b32.xlu0 %v166, 64
      %v339 = vpop.permute.xlu0 %338
      %340 = vrot.lane.b32.xlu0 %v167, 64
      %v341 = vpop.permute.xlu0 %340
      %342 = vrot.lane.b32.xlu0 %v171, 64
      %v343 = vpop.permute.xlu0 %342
      %344 = vrot.lane.b32.xlu0 %v172, 64
      %v345 = vpop.permute.xlu0 %344
      %v347 = vsel %vm173, %v339, 0
      %v350 = vsel %vm173, %v341, 0
      %v353 = vsel %vm173, %v343, 0
      %v356 = vsel %vm173, %v345, 0
      %358 = vmatprep.subr.bf16.mxu0 0
      %359 = vmatpush1.bf16.xpose.msra.mxu0 0
      %360 = vmatprep.subr.bf16.mxu0 0
      %361 = vmatpush1.bf16.xpose.msra.mxu0 0
      %362 = vmatprep.subr.bf16.mxu0 0
      %363 = vmatpush1.bf16.xpose.msra.mxu0 0
      %364 = vmatprep.subr.bf16.mxu0 0
      %365 = vmatpush1.bf16.xpose.msra.mxu0 0
      %366 = vmatprep.subr.bf16.mxu0 0
      %367 = vmatpush1.bf16.xpose.msra.mxu0 0
      %368 = vmatprep.subr.bf16.mxu0 0
      %369 = vmatpush1.bf16.xpose.msra.mxu0 0
      %370 = vmatprep.subr.bf16.mxu0 0
      %371 = vmatpush1.bf16.xpose.msra.mxu0 %v356
      %372 = vmatprep.subr.bf16.mxu0 0
      %373 = vmatpush1.bf16.xpose.msra.mxu0 %v353
      %374 = vmatprep.subr.bf16.mxu0 0
      %375 = vmatpush2.bf16.xpose.msra.mxu0 0
      %376 = vmatprep.subr.bf16.mxu0 0
      %377 = vmatpush2.bf16.xpose.msra.mxu0 0
      %378 = vmatprep.subr.bf16.mxu0 0
      %379 = vmatpush2.bf16.xpose.msra.mxu0 0
      %380 = vmatprep.subr.bf16.mxu0 0
      %381 = vmatpush2.bf16.xpose.msra.mxu0 0
      %382 = vmatprep.subr.bf16.mxu0 0
      %383 = vmatpush2.bf16.xpose.msra.mxu0 0
      %384 = vmatprep.subr.bf16.mxu0 0
      %385 = vmatpush2.bf16.xpose.msra.mxu0 0
      %386 = vmatprep.subr.bf16.mxu0 0
      %387 = vmatpush2.bf16.xpose.msra.mxu0 0
      %388 = vmatprep.subr.bf16.mxu0 0
      %389 = vmatpush2.bf16.xpose.msra.mxu0 0
      %390 = vmatprep.mubr.bf16.mxu0 0
      %391 = vmatmul.mubr.bf16.gmra.mxu0 %v347
      %v392 = vpop.f32.mrf.mxu0
      %v393 = vadd.f32 0.0, %v392
      %v394 = vpop.f32.mrf.mxu0
      %v395 = vpop.f32.mrf.mxu0
      %v396 = vadd.f32 0.0, %v395
      %v397 = vpop.f32.mrf.mxu0
      %398 = vmatprep.mubr.bf16.mxu0 0
      %399 = vmatmul.mubr.bf16.gmra.mxu0 %v350
      %v400 = vpop.f32.mrf.mxu0
      %v401 = vadd.f32 0.0, %v400
      %v402 = vpop.f32.mrf.mxu0
      %v403 = vpop.f32.mrf.mxu0
      %v404 = vpop.f32.mrf.mxu0
      %405 = vdwg.mxu0
      %v406 = vsel %vm234, %v393, -inf
      %407 = vmax.xlane.f32.xlu0 %v406
      %v408 = vpop.xlane.xlu0 %407
      %v409 = vsel %vm234, %v396, -inf
      %410 = vmax.xlane.f32.xlu0 %v409
      %v411 = vpop.xlane.xlu0 %410
      %v412 = vsel %vm241, %v401, -inf
      %413 = vmax.xlane.f32.xlu0 %v412
      %v414 = vpop.xlane.xlu0 %413
      %v415 = vsub.f32 %v393, %v408
      %v416 = vsub.f32 %v396, %v411
      %v417 = vsub.f32 %v401, %v414
      %v418 = vmul.f32 %v415, 1.442695
      %v419 = vpow.pop %v418
      %v420 = vmul.f32 %v416, 1.442695
      %v421 = vpow.pop %v420
      %v422 = vmul.f32 %v417, 1.442695
      %v423 = vpow.pop %v422
      %v424 = vsel %vm234, %v419, 0.0
      %425 = vadd.xlane.f32.xlu0 %v424
      %v426 = vpop.xlane.xlu0 %425
      %v427 = vsel %vm234, %v421, 0.0
      %428 = vadd.xlane.f32.xlu0 %v427
      %v429 = vpop.xlane.xlu0 %428
      %v430 = vsel %vm241, %v423, 0.0
      %431 = vadd.xlane.f32.xlu0 %v430
      %v432 = vpop.xlane.xlu0 %431
      %v433 = vrcp.pop %v426
      %v434 = vrcp.pop %v429
      %v435 = vrcp.pop %v432
      %v436 = vmul.f32 %v419, %v433
      %v437 = vmul.f32 %v421, %v434
      %v438 = vmul.f32 %v423, %v435
      %v439 = vpack.c.bf16 %v437, %v436
      %v440 = vpack.c.bf16 %v438, %v438
      %441 = vrot.lane.b32.xlu0 %v277, 64
      %v442 = vpop.permute.xlu0 %441
      %443 = vrot.lane.b32.xlu0 %v278, 64
      %v444 = vpop.permute.xlu0 %443
      %v447 = vsel %vm234, %v439, 0
      %v450 = vsel %vm234, %v440, 0
      %v453 = vsel %vm286, %v444, 0
      %455 = vmatprep.subr.bf16.mxu0 0
      %456 = vmatpush1.bf16.msra.mxu0 0
      %457 = vmatprep.subr.bf16.mxu0 0
      %458 = vmatpush1.bf16.msra.mxu0 0
      %459 = vmatprep.subr.bf16.mxu0 0
      %460 = vmatpush1.bf16.msra.mxu0 0
      %461 = vmatprep.subr.bf16.mxu0 0
      %462 = vmatpush1.bf16.msra.mxu0 0
      %463 = vmatprep.subr.bf16.mxu0 0
      %464 = vmatpush1.bf16.msra.mxu0 0
      %465 = vmatprep.subr.bf16.mxu0 0
      %466 = vmatpush1.bf16.msra.mxu0 0
      %467 = vmatprep.subr.bf16.mxu0 0
      %468 = vmatpush1.bf16.msra.mxu0 %v453
      %469 = vmatprep.subr.bf16.mxu0 0
      %470 = vmatpush1.bf16.msra.mxu0 %v442
      %471 = vmatprep.subr.bf16.mxu0 0
      %472 = vmatpush2.bf16.msra.mxu0 0
      %473 = vmatprep.subr.bf16.mxu0 0
      %474 = vmatpush2.bf16.msra.mxu0 0
      %475 = vmatprep.subr.bf16.mxu0 0
      %476 = vmatpush2.bf16.msra.mxu0 0
      %477 = vmatprep.subr.bf16.mxu0 0
      %478 = vmatpush2.bf16.msra.mxu0 0
      %479 = vmatprep.subr.bf16.mxu0 0
      %480 = vmatpush2.bf16.msra.mxu0 0
      %481 = vmatprep.subr.bf16.mxu0 0
      %482 = vmatpush2.bf16.msra.mxu0 0
      %483 = vmatprep.subr.bf16.mxu0 0
      %484 = vmatpush2.bf16.msra.mxu0 0
      %485 = vmatprep.subr.bf16.mxu0 0
      %486 = vmatpush2.bf16.msra.mxu0 0
      %487 = vmatprep.mubr.bf16.mxu0 0
      %488 = vmatmul.mubr.bf16.gmra.mxu0 %v447
      %v489 = vpop.f32.mrf.mxu0
      %v490 = vadd.f32 0.0, %v489
      %v491 = vpop.f32.mrf.mxu0
      %v492 = vpop.f32.mrf.mxu0
      %v493 = vadd.f32 0.0, %v492
      %v494 = vpop.f32.mrf.mxu0
      %495 = vmatprep.mubr.bf16.mxu0 0
      %496 = vmatmul.mubr.bf16.gmra.mxu0 %v450
      %v497 = vpop.f32.mrf.mxu0
      %v498 = vadd.f32 0.0, %v497
      %v499 = vpop.f32.mrf.mxu0
      %v500 = vpop.f32.mrf.mxu0
      %v501 = vpop.f32.mrf.mxu0
      %502 = vdwg.mxu0
      %506 = vrot.lane.b32.xlu0 %v490, 64
      %v507 = vpop.permute.xlu0 %506
      %508 = vrot.lane.b32.xlu0 %v493, 64
      %v509 = vpop.permute.xlu0 %508
      %510 = vrot.lane.b32.xlu0 %v498, 64
      %v511 = vpop.permute.xlu0 %510
      %v515 = vsel %vm173, %v325, %v507
      %v516 = vsel %vm173, %v328, %v509
      %v517 = vsel %vm173, %v333, %v511
      %v518 = vpack.c.bf16 %v516, %v515
      %v519 = vpack.c.bf16 %v517, %v517
      %v522 = vunpack.c.l.b16 %v518
      %v523 = vunpack.c.h.b16 %v518
      %v524 = vunpack.c.l.b16 %v519
      %v525 = vpack.c.b16 %v522, %v522
      %v526 = vpack.c.b16 %v523, %v523
      %v527 = vpack.c.b16 %v524, %v524
      %531 = vst [vmem:[%s152] sm:$0xf] %v525
      %532 = vst [vmem:[%s152 + $0x4] sm:$0xf] %v526
      %533 = vst [vmem:[%s152 + $0x8] sm:$0x3] %v527
      %p534 = scmp.lt.s32.totalorder %s16, 1
      %s535 = scalar_select %p534, %s16, 1
      %p536 = scmp.lt.s32.totalorder %s17, 0
      %s537 = scalar_select %p536, %s17, 0
      %s538 = smul.addr %s535, 3
      %s539 = sadd.s32 %s537, %s538
      %s540 = smul.addr %s539, 4
      %s541 = scalar_lea.vmem %s1, %s540
      // Predicated region
      $region25: #{lorat_forward.18} parent=23 // pred_check
        %p542 = pneg %p72
      $region26: #{lorat_forward.18} parent=23 // pred_check_branch
        %544 = sbr.rel (%p542) target = $region28
      $region27: #{lorat_forward.18} parent=23 // pred_region
        _
      $region28: #{lorat_forward.18} parent=23 // pred_fallthru
        _
    $region24: #{lorat_forward.18} parent=5 // pred_fallthru
      _
    %p545 = scmp.le.s32.totalorder 2, %s7
    // Predicated region
    $region29: #{lorat_forward.18} parent=5 // pred_check
      %p546 = pneg %p545
    $region30: #{lorat_forward.18} parent=5 // pred_check_branch
      %548 = sbr.rel (%p546) target = $region32
    $region31: #{lorat_forward.18} parent=5 // pred_region
      %s549 = ssub.s32 %s7, 2
      // Predicated region
      $region33: #{lorat_forward.18} parent=31 // pred_check
        %p550 = pneg %p78
      $region34: #{lorat_forward.18} parent=31 // pred_check_branch
        %552 = sbr.rel (%p550) target = $region36
      $region35: #{lorat_forward.18} parent=31 // pred_region
        %p553 = scmp.lt.s32.totalorder %s18, 1
        %s554 = scalar_select %p553, %s18, 1
        %p555 = scmp.lt.s32.totalorder %s19, 0
        %s556 = scalar_select %p555, %s19, 0
        %s557 = smul.addr %s554, 3
        %s558 = sadd.s32 %s556, %s557
        %s559 = smul.addr %s558, 4
        %s560 = scalar_lea.vmem %s1, %s559
      $region36: #{lorat_forward.18} parent=31 // pred_fallthru
        _
    $region32: #{lorat_forward.18} parent=5 // pred_fallthru
      _
  $region6: #{lorat_forward.18} parent=0 // loop_footer
    %s11 = sadd.s32 1, %s7
  $region7: #{lorat_forward.18} parent=0 // loop_footer_branch
    %6 = sbr.rel target = $region3
  $region8: #{lorat_forward.18} parent=0 // loop_exit
    _

// kernel: lorat_forward.17
$region0: #{lorat_forward.17}
  #allocation0 [shape = 'u32[]', space=smem, size = 0x4, offset = 0x4, fixed_abs, tag = 'smem constant byte address 0x4 - core index']
  #allocation1 [shape = 'u32[144,128]{1,0:T(1,128)}', space=vmem, size = 0x12000, scoped, tag = 'internal scratch']
  %s0 = inlined_call_operand.vmem [shape: bf16[48,128], index: 0, kind: input, shape index: {}]
  %s1 = inlined_call_operand.vmem [shape: f32[1,128], index: 1, kind: input, shape index: {}]
  %s2 = inlined_call_operand.vmem [shape: f32[1,128], index: 2, kind: input, shape index: {}]
  %s3 = inlined_call_operand.vmem [shape: bf16[128,384], index: 3, kind: input, shape index: {}]
  %s4 = inlined_call_operand.vmem [shape: f32[1,384], index: 4, kind: input, shape index: {}]
  %s5 = inlined_call_operand.vmem [shape: bf16[48,384], index: 5, kind: output, shape index: {}]
  %s6 = sld [smem:[#allocation0]]
  $region30: #{lorat_forward.17} parent=0
    _
  %s8 = ssub.s32 1, %s6
  %s9 = scalar_select 0, %s8, %s6
  // Predicated region
  $region2: #{lorat_forward.17} parent=0 // pred_check
    _
  $region3: #{lorat_forward.17} parent=0 // pred_check_branch
    %11 = sbr.rel (0) target = $region5
  $region4: #{lorat_forward.17} parent=0 // pred_region
    _
  $region5: #{lorat_forward.17} parent=0 // pred_fallthru
    _
  // Predicated region
  $region6: #{lorat_forward.17} parent=0 // pred_check
    _
  $region7: #{lorat_forward.17} parent=0 // pred_check_branch
    %13 = sbr.rel (0) target = $region9
  $region8: #{lorat_forward.17} parent=0 // pred_region
    _
  $region9: #{lorat_forward.17} parent=0 // pred_fallthru
    _
  // Predicated region
  $region10: #{lorat_forward.17} parent=0 // pred_check
    _
  $region11: #{lorat_forward.17} parent=0 // pred_check_branch
    %15 = sbr.rel (0) target = $region13
  $region12: #{lorat_forward.17} parent=0 // pred_region
    _
  $region13: #{lorat_forward.17} parent=0 // pred_fallthru
    _
  // Predicated region
  $region14: #{lorat_forward.17} parent=0 // pred_check
    _
  $region15: #{lorat_forward.17} parent=0 // pred_check_branch
    %17 = sbr.rel (0) target = $region17
  $region16: #{lorat_forward.17} parent=0 // pred_region
    _
  $region17: #{lorat_forward.17} parent=0 // pred_fallthru
    _
  // Predicated region
  $region18: #{lorat_forward.17} parent=0 // pred_check
    _
  $region19: #{lorat_forward.17} parent=0 // pred_check_branch
    %19 = sbr.rel (0) target = $region21
  $region20: #{lorat_forward.17} parent=0 // pred_region
    _
  $region21: #{lorat_forward.17} parent=0 // pred_fallthru
    _
  %v21 = vld [vmem:[%s0] sm:$0xf]
  %v22 = vld [vmem:[%s0 + $0x4] sm:$0xf]
  %v23 = vld [vmem:[%s0 + $0x8] sm:$0xf]
  %v24 = vld [vmem:[%s0 + $0xc] sm:$0xf]
  %v25 = vld [vmem:[%s0 + $0x10] sm:$0xf]
  %v26 = vld [vmem:[%s0 + $0x14] sm:$0xf]
  %v27 = vunpack.c.l.bf16 %v21
  %v28 = vunpack.c.l.bf16 %v22
  %v29 = vunpack.c.l.bf16 %v23
  %v30 = vunpack.c.l.bf16 %v24
  %v31 = vunpack.c.l.bf16 %v25
  %v32 = vunpack.c.l.bf16 %v26
  %33 = vadd.xlane.f32.xlu0 %v27
  %v34 = vpop.xlane.xlu0 %33
  %35 = vadd.xlane.f32.xlu0 %v28
  %v36 = vpop.xlane.xlu0 %35
  %37 = vadd.xlane.f32.xlu0 %v29
  %v38 = vpop.xlane.xlu0 %37
  %39 = vadd.xlane.f32.xlu0 %v30
  %v40 = vpop.xlane.xlu0 %39
  %41 = vadd.xlane.f32.xlu0 %v31
  %v42 = vpop.xlane.xlu0 %41
  %43 = vadd.xlane.f32.xlu0 %v32
  %v44 = vpop.xlane.xlu0 %43
  %v45 = vrcp.pop 128.0
  %v46 = vmul.f32 %v34, %v45
  %v47 = vmul.f32 %v36, %v45
  %v48 = vmul.f32 %v38, %v45
  %v49 = vmul.f32 %v40, %v45
  %v50 = vmul.f32 %v42, %v45
  %v51 = vmul.f32 %v44, %v45
  %v52 = vsub.f32 %v27, %v46
  %v53 = vsub.f32 %v28, %v47
  %v54 = vsub.f32 %v29, %v48
  %v55 = vsub.f32 %v30, %v49
  %v56 = vsub.f32 %v31, %v50
  %v57 = vsub.f32 %v32, %v51
  %v58 = vmul.f32 %v52, %v52
  %v59 = vmul.f32 %v53, %v53
  %v60 = vmul.f32 %v54, %v54
  %v61 = vmul.f32 %v55, %v55
  %v62 = vmul.f32 %v56, %v56
  %v63 = vmul.f32 %v57, %v57
  %64 = vadd.xlane.f32.xlu0 %v58
  %v65 = vpop.xlane.xlu0 %64
  %66 = vadd.xlane.f32.xlu0 %v59
  %v67 = vpop.xlane.xlu0 %66
  %68 = vadd.xlane.f32.xlu0 %v60
  %v69 = vpop.xlane.xlu0 %68
  %70 = vadd.xlane.f32.xlu0 %v61
  %v71 = vpop.xlane.xlu0 %70
  %72 = vadd.xlane.f32.xlu0 %v62
  %v73 = vpop.xlane.xlu0 %72
  %74 = vadd.xlane.f32.xlu0 %v63
  %v75 = vpop.xlane.xlu0 %74
  %v76 = vmul.f32 %v65, %v45
  %v77 = vmul.f32 %v67, %v45
  %v78 = vmul.f32 %v69, %v45
  %v79 = vmul.f32 %v71, %v45
  %v80 = vmul.f32 %v73, %v45
  %v81 = vmul.f32 %v75, %v45
  %v82 = vadd.f32 %v76, 1e-06
  %v83 = vadd.f32 %v77, 1e-06
  %v84 = vadd.f32 %v78, 1e-06
  %v85 = vadd.f32 %v79, 1e-06
  %v86 = vadd.f32 %v80, 1e-06
  %v87 = vadd.f32 %v81, 1e-06
  %v88 = vrsqrt.pop %v82
  %v89 = vrsqrt.pop %v83
  %v90 = vrsqrt.pop %v84
  %v91 = vrsqrt.pop %v85
  %v92 = vrsqrt.pop %v86
  %v93 = vrsqrt.pop %v87
  %v94 = vmul.f32 %v52, %v88
  %v95 = vmul.f32 %v53, %v89
  %v96 = vmul.f32 %v54, %v90
  %v97 = vmul.f32 %v55, %v91
  %v98 = vmul.f32 %v56, %v92
  %v99 = vmul.f32 %v57, %v93
  %v100 = vld [vmem:[%s1] sm:$0x1]
  %v102 = vlaneseq
  %v103 = vshrl.u32 %v102, 7
  %v104 = vsub.s32 0, %v103
  %v105 = vrot.slane %v100, %v104
  %v107 = vmul.f32 %v94, %v105
  %v108 = vmul.f32 %v95, %v105
  %v109 = vmul.f32 %v96, %v105
  %v110 = vmul.f32 %v97, %v105
  %v111 = vmul.f32 %v98, %v105
  %v112 = vmul.f32 %v99, %v105
  %v113 = vld [vmem:[%s2] sm:$0x1]
  %v115 = vlaneseq
  %v116 = vshrl.u32 %v115, 7
  %v117 = vsub.s32 0, %v116
  %v118 = vrot.slane %v113, %v117
  %v120 = vadd.f32 %v107, %v118
  %v121 = vadd.f32 %v108, %v118
  %v122 = vadd.f32 %v109, %v118
  %v123 = vadd.f32 %v110, %v118
  %v124 = vadd.f32 %v111, %v118
  %v125 = vadd.f32 %v112, %v118
  %v126 = vpack.c.bf16 %v121, %v120
  %v127 = vpack.c.bf16 %v123, %v122
  %v128 = vpack.c.bf16 %v125, %v124
  %v129 = vld [vmem:[%s3] sm:$0xff]
  %v130 = vld [vmem:[%s3 + $0x8] sm:$0xf]
  %v131 = vld [vmem:[%s3 + $0xc] sm:$0xff]
  %v132 = vld [vmem:[%s3 + $0x14] sm:$0xf]
  %v133 = vld [vmem:[%s3 + $0x18] sm:$0xff]
  %v134 = vld [vmem:[%s3 + $0x20] sm:$0xf]
  %v135 = vld [vmem:[%s3 + $0x24] sm:$0xff]
  %v136 = vld [vmem:[%s3 + $0x2c] sm:$0xf]
  %v137 = vld [vmem:[%s3 + $0x30] sm:$0xff]
  %v138 = vld [vmem:[%s3 + $0x38] sm:$0xf]
  %v139 = vld [vmem:[%s3 + $0x3c] sm:$0xff]
  %v140 = vld [vmem:[%s3 + $0x44] sm:$0xf]
  %v141 = vld [vmem:[%s3 + $0x48] sm:$0xff]
  %v142 = vld [vmem:[%s3 + $0x50] sm:$0xf]
  %v143 = vld [vmem:[%s3 + $0x54] sm:$0xff]
  %v144 = vld [vmem:[%s3 + $0x5c] sm:$0xf]
  %v145 = vld [vmem:[%s3 + $0x60] sm:$0xff]
  %v146 = vld [vmem:[%s3 + $0x68] sm:$0xf]
  %v147 = vld [vmem:[%s3 + $0x6c] sm:$0xff]
  %v148 = vld [vmem:[%s3 + $0x74] sm:$0xf]
  %v149 = vld [vmem:[%s3 + $0x78] sm:$0xff]
  %v150 = vld [vmem:[%s3 + $0x80] sm:$0xf]
  %v151 = vld [vmem:[%s3 + $0x84] sm:$0xff]
  %v152 = vld [vmem:[%s3 + $0x8c] sm:$0xf]
  %v153 = vld [vmem:[%s3 + $0x90] sm:$0xff]
  %v154 = vld [vmem:[%s3 + $0x98] sm:$0xf]
  %v155 = vld [vmem:[%s3 + $0x9c] sm:$0xff]
  %v156 = vld [vmem:[%s3 + $0xa4] sm:$0xf]
  %v157 = vld [vmem:[%s3 + $0xa8] sm:$0xff]
  %v158 = vld [vmem:[%s3 + $0xb0] sm:$0xf]
  %v159 = vld [vmem:[%s3 + $0xb4] sm:$0xff]
  %v160 = vld [vmem:[%s3 + $0xbc] sm:$0xf]
  %v161 = vld [vmem:[%s4] sm:$0x7]
  %v163 = vlaneseq
  %v164 = vshrl.u32 %v163, 7
  %v165 = vsub.s32 0, %v164
  %v166 = vrot.slane %v161, %v165
  %v167 = vlaneseq
  %v168 = vshrl.u32 %v167, 7
  %v169 = vsub.s32 1, %v168
  %v170 = vrot.slane %v161, %v169
  %v171 = vlaneseq
  %v172 = vshrl.u32 %v171, 7
  %v173 = vsub.s32 2, %v172
  %v174 = vrot.slane %v161, %v173
  %v210 = vunpack.c.l.b16 %v129
  %v211 = vunpack.c.h.b16 %v129
  %v212 = vunpack.c.l.b16 %v130
  %v213 = vunpack.c.l.b16 %v131
  %v214 = vunpack.c.h.b16 %v131
  %v215 = vunpack.c.l.b16 %v132
  %v216 = vunpack.c.l.b16 %v133
  %v217 = vunpack.c.h.b16 %v133
  %v218 = vunpack.c.l.b16 %v134
  %v219 = vunpack.c.l.b16 %v135
  %v220 = vunpack.c.h.b16 %v135
  %v221 = vunpack.c.l.b16 %v136
  %v222 = vunpack.c.l.b16 %v137
  %v223 = vunpack.c.h.b16 %v137
  %v224 = vunpack.c.l.b16 %v138
  %v225 = vunpack.c.l.b16 %v139
  %v226 = vunpack.c.h.b16 %v139
  %v227 = vunpack.c.l.b16 %v140
  %v228 = vunpack.c.l.b16 %v141
  %v229 = vunpack.c.h.b16 %v141
  %v230 = vunpack.c.l.b16 %v142
  %v231 = vunpack.c.l.b16 %v143
  %v232 = vunpack.c.h.b16 %v143
  %v233 = vunpack.c.l.b16 %v144
  %v234 = vunpack.c.l.b16 %v145
  %v235 = vunpack.c.h.b16 %v145
  %v236 = vunpack.c.l.b16 %v146
  %v237 = vunpack.c.l.b16 %v147
  %v238 = vunpack.c.h.b16 %v147
  %v239 = vunpack.c.l.b16 %v148
  %v240 = vunpack.c.l.b16 %v149
  %v241 = vunpack.c.h.b16 %v149
  %v242 = vunpack.c.l.b16 %v150
  %v243 = vunpack.c.l.b16 %v151
  %v244 = vunpack.c.h.b16 %v151
  %v245 = vunpack.c.l.b16 %v152
  %v246 = vunpack.c.l.b16 %v153
  %v247 = vunpack.c.h.b16 %v153
  %v248 = vunpack.c.l.b16 %v154
  %v249 = vunpack.c.l.b16 %v155
  %v250 = vunpack.c.h.b16 %v155
  %v251 = vunpack.c.l.b16 %v156
  %v252 = vunpack.c.l.b16 %v157
  %v253 = vunpack.c.h.b16 %v157
  %v254 = vunpack.c.l.b16 %v158
  %v255 = vunpack.c.l.b16 %v159
  %v256 = vunpack.c.h.b16 %v159
  %v257 = vunpack.c.l.b16 %v160
  %v258 = vpack.c.b16 %v213, %v210
  %v259 = vpack.c.b16 %v214, %v211
  %v260 = vpack.c.b16 %v215, %v212
  %v261 = vpack.c.b16 %v219, %v216
  %v262 = vpack.c.b16 %v220, %v217
  %v263 = vpack.c.b16 %v221, %v218
  %v264 = vpack.c.b16 %v225, %v222
  %v265 = vpack.c.b16 %v226, %v223
  %v266 = vpack.c.b16 %v227, %v224
  %v267 = vpack.c.b16 %v231, %v228
  %v268 = vpack.c.b16 %v232, %v229
  %v269 = vpack.c.b16 %v233, %v230
  %v270 = vpack.c.b16 %v237, %v234
  %v271 = vpack.c.b16 %v238, %v235
  %v272 = vpack.c.b16 %v239, %v236
  %v273 = vpack.c.b16 %v243, %v240
  %v274 = vpack.c.b16 %v244, %v241
  %v275 = vpack.c.b16 %v245, %v242
  %v276 = vpack.c.b16 %v249, %v246
  %v277 = vpack.c.b16 %v250, %v247
  %v278 = vpack.c.b16 %v251, %v248
  %v279 = vpack.c.b16 %v255, %v252
  %v280 = vpack.c.b16 %v256, %v253
  %v281 = vpack.c.b16 %v257, %v254
  %306 = vmatprep.subr.bf16.mxu0 %v280
  %307 = vmatpush1.bf16.msra.mxu0 %v279
  %308 = vmatprep.subr.bf16.mxu0 %v277
  %309 = vmatpush1.bf16.msra.mxu0 %v276
  %310 = vmatprep.subr.bf16.mxu0 %v274
  %311 = vmatpush1.bf16.msra.mxu0 %v273
  %312 = vmatprep.subr.bf16.mxu0 %v271
  %313 = vmatpush1.bf16.msra.mxu0 %v270
  %314 = vmatprep.subr.bf16.mxu0 %v268
  %315 = vmatpush1.bf16.msra.mxu0 %v267
  %316 = vmatprep.subr.bf16.mxu0 %v265
  %317 = vmatpush1.bf16.msra.mxu0 %v264
  %318 = vmatprep.subr.bf16.mxu0 %v262
  %319 = vmatpush1.bf16.msra.mxu0 %v261
  %320 = vmatprep.subr.bf16.mxu0 %v259
  %321 = vmatpush1.bf16.msra.mxu0 %v258
  %322 = vmatprep.subr.bf16.mxu0 0
  %323 = vmatpush2.bf16.msra.mxu0 0
  %324 = vmatprep.subr.bf16.mxu0 0
  %325 = vmatpush2.bf16.msra.mxu0 0
  %326 = vmatprep.subr.bf16.mxu0 0
  %327 = vmatpush2.bf16.msra.mxu0 0
  %328 = vmatprep.subr.bf16.mxu0 0
  %329 = vmatpush2.bf16.msra.mxu0 0
  %330 = vmatprep.subr.bf16.mxu0 0
  %331 = vmatpush2.bf16.msra.mxu0 0
  %332 = vmatprep.subr.bf16.mxu0 0
  %333 = vmatpush2.bf16.msra.mxu0 0
  %334 = vmatprep.subr.bf16.mxu0 0
  %335 = vmatpush2.bf16.msra.mxu0 0
  %336 = vmatprep.subr.bf16.mxu0 0
  %337 = vmatpush2.bf16.msra.mxu0 0
  %338 = vmatprep.mubr.bf16.mxu0 0
  %339 = vmatmul.mubr.bf16.gmra.mxu0 %v126
  %v340 = vpop.f32.mrf.mxu0
  %v341 = vadd.f32 %v166, %v340
  %v342 = vpop.f32.mrf.mxu0
  %v343 = vadd.f32 %v170, %v342
  %v344 = vpop.f32.mrf.mxu0
  %v345 = vadd.f32 %v166, %v344
  %v346 = vpop.f32.mrf.mxu0
  %v347 = vadd.f32 %v170, %v346
  %348 = vmatprep.mubr.bf16.mxu0 0
  %349 = vmatmul.mubr.bf16.gmra.mxu0 %v127
  %v350 = vpop.f32.mrf.mxu0
  %v351 = vadd.f32 %v166, %v350
  %v352 = vpop.f32.mrf.mxu0
  %v353 = vadd.f32 %v170, %v352
  %v354 = vpop.f32.mrf.mxu0
  %v355 = vadd.f32 %v166, %v354
  %v356 = vpop.f32.mrf.mxu0
  %v357 = vadd.f32 %v170, %v356
  %358 = vmatprep.mubr.bf16.mxu0 0
  %359 = vmatmul.mubr.bf16.gmra.mxu0 %v128
  %v360 = vpop.f32.mrf.mxu0
  %v361 = vadd.f32 %v166, %v360
  %v362 = vpop.f32.mrf.mxu0
  %v363 = vadd.f32 %v170, %v362
  %v364 = vpop.f32.mrf.mxu0
  %v365 = vadd.f32 %v166, %v364
  %v366 = vpop.f32.mrf.mxu0
  %v367 = vadd.f32 %v170, %v366
  %368 = vdwg.mxu0
  %369 = vmatprep.subr.bf16.mxu0 0
  %370 = vmatpush1.bf16.msra.mxu0 %v281
  %371 = vmatprep.subr.bf16.mxu0 0
  %372 = vmatpush1.bf16.msra.mxu0 %v278
  %373 = vmatprep.subr.bf16.mxu0 0
  %374 = vmatpush1.bf16.msra.mxu0 %v275
  %375 = vmatprep.subr.bf16.mxu0 0
  %376 = vmatpush1.bf16.msra.mxu0 %v272
  %377 = vmatprep.subr.bf16.mxu0 0
  %378 = vmatpush1.bf16.msra.mxu0 %v269
  %379 = vmatprep.subr.bf16.mxu0 0
  %380 = vmatpush1.bf16.msra.mxu0 %v266
  %381 = vmatprep.subr.bf16.mxu0 0
  %382 = vmatpush1.bf16.msra.mxu0 %v263
  %383 = vmatprep.subr.bf16.mxu0 0
  %384 = vmatpush1.bf16.msra.mxu0 %v260
  %385 = vmatprep.subr.bf16.mxu0 0
  %386 = vmatpush2.bf16.msra.mxu0 0
  %387 = vmatprep.subr.bf16.mxu0 0
  %388 = vmatpush2.bf16.msra.mxu0 0
  %389 = vmatprep.subr.bf16.mxu0 0
  %390 = vmatpush2.bf16.msra.mxu0 0
  %391 = vmatprep.subr.bf16.mxu0 0
  %392 = vmatpush2.bf16.msra.mxu0 0
  %393 = vmatprep.subr.bf16.mxu0 0
  %394 = vmatpush2.bf16.msra.mxu0 0
  %395 = vmatprep.subr.bf16.mxu0 0
  %396 = vmatpush2.bf16.msra.mxu0 0
  %397 = vmatprep.subr.bf16.mxu0 0
  %398 = vmatpush2.bf16.msra.mxu0 0
  %399 = vmatprep.subr.bf16.mxu0 0
  %400 = vmatpush2.bf16.msra.mxu0 0
  %401 = vmatprep.mubr.bf16.mxu0 0
  %402 = vmatmul.mubr.bf16.gmra.mxu0 %v126
  %v403 = vpop.f32.mrf.mxu0
  %v404 = vadd.f32 %v174, %v403
  %v405 = vpop.f32.mrf.mxu0
  %v406 = vpop.f32.mrf.mxu0
  %v407 = vadd.f32 %v174, %v406
  %v408 = vpop.f32.mrf.mxu0
  %409 = vmatprep.mubr.bf16.mxu0 0
  %410 = vmatmul.mubr.bf16.gmra.mxu0 %v127
  %v411 = vpop.f32.mrf.mxu0
  %v412 = vadd.f32 %v174, %v411
  %v413 = vpop.f32.mrf.mxu0
  %v414 = vpop.f32.mrf.mxu0
  %v415 = vadd.f32 %v174, %v414
  %v416 = vpop.f32.mrf.mxu0
  %417 = vmatprep.mubr.bf16.mxu0 0
  %418 = vmatmul.mubr.bf16.gmra.mxu0 %v128
  %v419 = vpop.f32.mrf.mxu0
  %v420 = vadd.f32 %v174, %v419
  %v421 = vpop.f32.mrf.mxu0
  %v422 = vpop.f32.mrf.mxu0
  %v423 = vadd.f32 %v174, %v422
  %v424 = vpop.f32.mrf.mxu0
  %425 = vdwg.mxu0
  %v426 = vpack.c.bf16 %v345, %v341
  %v427 = vpack.c.bf16 %v347, %v343
  %v428 = vpack.c.bf16 %v407, %v404
  %v429 = vpack.c.bf16 %v355, %v351
  %v430 = vpack.c.bf16 %v357, %v353
  %v431 = vpack.c.bf16 %v415, %v412
  %v432 = vpack.c.bf16 %v365, %v361
  %v433 = vpack.c.bf16 %v367, %v363
  %v434 = vpack.c.bf16 %v423, %v420
  %v444 = vunpack.c.l.b16 %v426
  %v445 = vunpack.c.l.b16 %v427
  %v446 = vunpack.c.l.b16 %v428
  %v447 = vunpack.c.h.b16 %v426
  %v448 = vunpack.c.h.b16 %v427
  %v449 = vunpack.c.h.b16 %v428
  %v450 = vunpack.c.l.b16 %v429
  %v451 = vunpack.c.l.b16 %v430
  %v452 = vunpack.c.l.b16 %v431
  %v453 = vunpack.c.h.b16 %v429
  %v454 = vunpack.c.h.b16 %v430
  %v455 = vunpack.c.h.b16 %v431
  %v456 = vunpack.c.l.b16 %v432
  %v457 = vunpack.c.l.b16 %v433
  %v458 = vunpack.c.l.b16 %v434
  %v459 = vunpack.c.h.b16 %v432
  %v460 = vunpack.c.h.b16 %v433
  %v461 = vunpack.c.h.b16 %v434
  %v462 = vpack.c.b16 %v445, %v444
  %v463 = vpack.c.b16 %v446, %v446
  %v464 = vpack.c.b16 %v448, %v447
  %v465 = vpack.c.b16 %v449, %v449
  %v466 = vpack.c.b16 %v451, %v450
  %v467 = vpack.c.b16 %v452, %v452
  %v468 = vpack.c.b16 %v454, %v453
  %v469 = vpack.c.b16 %v455, %v455
  %v470 = vpack.c.b16 %v457, %v456
  %v471 = vpack.c.b16 %v458, %v458
  %v472 = vpack.c.b16 %v460, %v459
  %v473 = vpack.c.b16 %v461, %v461
  %486 = vst [vmem:[%s5] sm:$0xff] %v462
  %487 = vst [vmem:[%s5 + $0x8] sm:$0xf] %v463
  %488 = vst [vmem:[%s5 + $0xc] sm:$0xff] %v464
  %489 = vst [vmem:[%s5 + $0x14] sm:$0xf] %v465
  %490 = vst [vmem:[%s5 + $0x18] sm:$0xff] %v466
  %491 = vst [vmem:[%s5 + $0x20] sm:$0xf] %v467
  %492 = vst [vmem:[%s5 + $0x24] sm:$0xff] %v468
  %493 = vst [vmem:[%s5 + $0x2c] sm:$0xf] %v469
  %494 = vst [vmem:[%s5 + $0x30] sm:$0xff] %v470
  %495 = vst [vmem:[%s5 + $0x38] sm:$0xf] %v471
  %496 = vst [vmem:[%s5 + $0x3c] sm:$0xff] %v472
  %497 = vst [vmem:[%s5 + $0x44] sm:$0xf] %v473
  // Predicated region
  $region22: #{lorat_forward.17} parent=0 // pred_check
    _
  $region23: #{lorat_forward.17} parent=0 // pred_check_branch
    %499 = sbr.rel (0) target = $region25
  $region24: #{lorat_forward.17} parent=0 // pred_region
    _
  $region25: #{lorat_forward.17} parent=0 // pred_fallthru
    _
  // Predicated region
  $region26: #{lorat_forward.17} parent=0 // pred_check
    _
  $region27: #{lorat_forward.17} parent=0 // pred_check_branch
    %501 = sbr.rel (0) target = $region29
  $region28: #{lorat_forward.17} parent=0 // pred_region
    _
  $region29: #{lorat_forward.17} parent=0 // pred_fallthru
    _

// kernel: lorat_forward.20
$region0: #{lorat_forward.20}
  #allocation0 [shape = 'u32[]', space=smem, size = 0x4, offset = 0x4, fixed_abs, tag = 'smem constant byte address 0x4 - core index']
  #allocation1 [shape = 'u32[144,128]{1,0:T(1,128)}', space=vmem, size = 0x12000, scoped, tag = 'internal scratch']
  %s0 = inlined_call_operand.vmem [shape: bf16[48,128], index: 0, kind: input, shape index: {}]
  %s1 = inlined_call_operand.vmem [shape: f32[1,128], index: 1, kind: input, shape index: {}]
  %s2 = inlined_call_operand.vmem [shape: f32[1,128], index: 2, kind: input, shape index: {}]
  %s3 = inlined_call_operand.vmem [shape: bf16[128,256], index: 3, kind: input, shape index: {}]
  %s4 = inlined_call_operand.vmem [shape: f32[1,256], index: 4, kind: input, shape index: {}]
  %s5 = inlined_call_operand.vmem [shape: bf16[48,256], index: 5, kind: output, shape index: {}]
  %s6 = sld [smem:[#allocation0]]
  $region30: #{lorat_forward.20} parent=0
    _
  %s8 = ssub.s32 1, %s6
  %s9 = scalar_select 0, %s8, %s6
  // Predicated region
  $region2: #{lorat_forward.20} parent=0 // pred_check
    _
  $region3: #{lorat_forward.20} parent=0 // pred_check_branch
    %11 = sbr.rel (0) target = $region5
  $region4: #{lorat_forward.20} parent=0 // pred_region
    _
  $region5: #{lorat_forward.20} parent=0 // pred_fallthru
    _
  // Predicated region
  $region6: #{lorat_forward.20} parent=0 // pred_check
    _
  $region7: #{lorat_forward.20} parent=0 // pred_check_branch
    %13 = sbr.rel (0) target = $region9
  $region8: #{lorat_forward.20} parent=0 // pred_region
    _
  $region9: #{lorat_forward.20} parent=0 // pred_fallthru
    _
  // Predicated region
  $region10: #{lorat_forward.20} parent=0 // pred_check
    _
  $region11: #{lorat_forward.20} parent=0 // pred_check_branch
    %15 = sbr.rel (0) target = $region13
  $region12: #{lorat_forward.20} parent=0 // pred_region
    _
  $region13: #{lorat_forward.20} parent=0 // pred_fallthru
    _
  // Predicated region
  $region14: #{lorat_forward.20} parent=0 // pred_check
    _
  $region15: #{lorat_forward.20} parent=0 // pred_check_branch
    %17 = sbr.rel (0) target = $region17
  $region16: #{lorat_forward.20} parent=0 // pred_region
    _
  $region17: #{lorat_forward.20} parent=0 // pred_fallthru
    _
  // Predicated region
  $region18: #{lorat_forward.20} parent=0 // pred_check
    _
  $region19: #{lorat_forward.20} parent=0 // pred_check_branch
    %19 = sbr.rel (0) target = $region21
  $region20: #{lorat_forward.20} parent=0 // pred_region
    _
  $region21: #{lorat_forward.20} parent=0 // pred_fallthru
    _
  %v21 = vld [vmem:[%s0] sm:$0xf]
  %v22 = vld [vmem:[%s0 + $0x4] sm:$0xf]
  %v23 = vld [vmem:[%s0 + $0x8] sm:$0xf]
  %v24 = vld [vmem:[%s0 + $0xc] sm:$0xf]
  %v25 = vld [vmem:[%s0 + $0x10] sm:$0xf]
  %v26 = vld [vmem:[%s0 + $0x14] sm:$0xf]
  %v27 = vunpack.c.l.bf16 %v21
  %v28 = vunpack.c.l.bf16 %v22
  %v29 = vunpack.c.l.bf16 %v23
  %v30 = vunpack.c.l.bf16 %v24
  %v31 = vunpack.c.l.bf16 %v25
  %v32 = vunpack.c.l.bf16 %v26
  %33 = vadd.xlane.f32.xlu0 %v27
  %v34 = vpop.xlane.xlu0 %33
  %35 = vadd.xlane.f32.xlu0 %v28
  %v36 = vpop.xlane.xlu0 %35
  %37 = vadd.xlane.f32.xlu0 %v29
  %v38 = vpop.xlane.xlu0 %37
  %39 = vadd.xlane.f32.xlu0 %v30
  %v40 = vpop.xlane.xlu0 %39
  %41 = vadd.xlane.f32.xlu0 %v31
  %v42 = vpop.xlane.xlu0 %41
  %43 = vadd.xlane.f32.xlu0 %v32
  %v44 = vpop.xlane.xlu0 %43
  %v45 = vrcp.pop 128.0
  %v46 = vmul.f32 %v34, %v45
  %v47 = vmul.f32 %v36, %v45
  %v48 = vmul.f32 %v38, %v45
  %v49 = vmul.f32 %v40, %v45
  %v50 = vmul.f32 %v42, %v45
  %v51 = vmul.f32 %v44, %v45
  %v52 = vsub.f32 %v27, %v46
  %v53 = vsub.f32 %v28, %v47
  %v54 = vsub.f32 %v29, %v48
  %v55 = vsub.f32 %v30, %v49
  %v56 = vsub.f32 %v31, %v50
  %v57 = vsub.f32 %v32, %v51
  %v58 = vmul.f32 %v52, %v52
  %v59 = vmul.f32 %v53, %v53
  %v60 = vmul.f32 %v54, %v54
  %v61 = vmul.f32 %v55, %v55
  %v62 = vmul.f32 %v56, %v56
  %v63 = vmul.f32 %v57, %v57
  %64 = vadd.xlane.f32.xlu0 %v58
  %v65 = vpop.xlane.xlu0 %64
  %66 = vadd.xlane.f32.xlu0 %v59
  %v67 = vpop.xlane.xlu0 %66
  %68 = vadd.xlane.f32.xlu0 %v60
  %v69 = vpop.xlane.xlu0 %68
  %70 = vadd.xlane.f32.xlu0 %v61
  %v71 = vpop.xlane.xlu0 %70
  %72 = vadd.xlane.f32.xlu0 %v62
  %v73 = vpop.xlane.xlu0 %72
  %74 = vadd.xlane.f32.xlu0 %v63
  %v75 = vpop.xlane.xlu0 %74
  %v76 = vmul.f32 %v65, %v45
  %v77 = vmul.f32 %v67, %v45
  %v78 = vmul.f32 %v69, %v45
  %v79 = vmul.f32 %v71, %v45
  %v80 = vmul.f32 %v73, %v45
  %v81 = vmul.f32 %v75, %v45
  %v82 = vadd.f32 %v76, 1e-06
  %v83 = vadd.f32 %v77, 1e-06
  %v84 = vadd.f32 %v78, 1e-06
  %v85 = vadd.f32 %v79, 1e-06
  %v86 = vadd.f32 %v80, 1e-06
  %v87 = vadd.f32 %v81, 1e-06
  %v88 = vrsqrt.pop %v82
  %v89 = vrsqrt.pop %v83
  %v90 = vrsqrt.pop %v84
  %v91 = vrsqrt.pop %v85
  %v92 = vrsqrt.pop %v86
  %v93 = vrsqrt.pop %v87
  %v94 = vmul.f32 %v52, %v88
  %v95 = vmul.f32 %v53, %v89
  %v96 = vmul.f32 %v54, %v90
  %v97 = vmul.f32 %v55, %v91
  %v98 = vmul.f32 %v56, %v92
  %v99 = vmul.f32 %v57, %v93
  %v100 = vld [vmem:[%s1] sm:$0x1]
  %v102 = vlaneseq
  %v103 = vshrl.u32 %v102, 7
  %v104 = vsub.s32 0, %v103
  %v105 = vrot.slane %v100, %v104
  %v107 = vmul.f32 %v94, %v105
  %v108 = vmul.f32 %v95, %v105
  %v109 = vmul.f32 %v96, %v105
  %v110 = vmul.f32 %v97, %v105
  %v111 = vmul.f32 %v98, %v105
  %v112 = vmul.f32 %v99, %v105
  %v113 = vld [vmem:[%s2] sm:$0x1]
  %v115 = vlaneseq
  %v116 = vshrl.u32 %v115, 7
  %v117 = vsub.s32 0, %v116
  %v118 = vrot.slane %v113, %v117
  %v120 = vadd.f32 %v107, %v118
  %v121 = vadd.f32 %v108, %v118
  %v122 = vadd.f32 %v109, %v118
  %v123 = vadd.f32 %v110, %v118
  %v124 = vadd.f32 %v111, %v118
  %v125 = vadd.f32 %v112, %v118
  %v126 = vpack.c.bf16 %v121, %v120
  %v127 = vpack.c.bf16 %v123, %v122
  %v128 = vpack.c.bf16 %v125, %v124
  %v129 = vld [vmem:[%s3] sm:$0xff]
  %v130 = vld [vmem:[%s3 + $0x8] sm:$0xff]
  %v131 = vld [vmem:[%s3 + $0x10] sm:$0xff]
  %v132 = vld [vmem:[%s3 + $0x18] sm:$0xff]
  %v133 = vld [vmem:[%s3 + $0x20] sm:$0xff]
  %v134 = vld [vmem:[%s3 + $0x28] sm:$0xff]
  %v135 = vld [vmem:[%s3 + $0x30] sm:$0xff]
  %v136 = vld [vmem:[%s3 + $0x38] sm:$0xff]
  %v137 = vld [vmem:[%s3 + $0x40] sm:$0xff]
  %v138 = vld [vmem:[%s3 + $0x48] sm:$0xff]
  %v139 = vld [vmem:[%s3 + $0x50] sm:$0xff]
  %v140 = vld [vmem:[%s3 + $0x58] sm:$0xff]
  %v141 = vld [vmem:[%s3 + $0x60] sm:$0xff]
  %v142 = vld [vmem:[%s3 + $0x68] sm:$0xff]
  %v143 = vld [vmem:[%s3 + $0x70] sm:$0xff]
  %v144 = vld [vmem:[%s3 + $0x78] sm:$0xff]
  %v145 = vld [vmem:[%s4] sm:$0x3]
  %v147 = vlaneseq
  %v148 = vshrl.u32 %v147, 7
  %v149 = vsub.s32 0, %v148
  %v150 = vrot.slane %v145, %v149
  %v151 = vlaneseq
  %v152 = vshrl.u32 %v151, 7
  %v153 = vsub.s32 1, %v152
  %v154 = vrot.slane %v145, %v153
  %v173 = vunpack.c.l.b16 %v129
  %v174 = vunpack.c.h.b16 %v129
  %v175 = vunpack.c.l.b16 %v130
  %v176 = vunpack.c.h.b16 %v130
  %v177 = vunpack.c.l.b16 %v131
  %v178 = vunpack.c.h.b16 %v131
  %v179 = vunpack.c.l.b16 %v132
  %v180 = vunpack.c.h.b16 %v132
  %v181 = vunpack.c.l.b16 %v133
  %v182 = vunpack.c.h.b16 %v133
  %v183 = vunpack.c.l.b16 %v134
  %v184 = vunpack.c.h.b16 %v134
  %v185 = vunpack.c.l.b16 %v135
  %v186 = vunpack.c.h.b16 %v135
  %v187 = vunpack.c.l.b16 %v136
  %v188 = vunpack.c.h.b16 %v136
  %v189 = vunpack.c.l.b16 %v137
  %v190 = vunpack.c.h.b16 %v137
  %v191 = vunpack.c.l.b16 %v138
  %v192 = vunpack.c.h.b16 %v138
  %v193 = vunpack.c.l.b16 %v139
  %v194 = vunpack.c.h.b16 %v139
  %v195 = vunpack.c.l.b16 %v140
  %v196 = vunpack.c.h.b16 %v140
  %v197 = vunpack.c.l.b16 %v141
  %v198 = vunpack.c.h.b16 %v141
  %v199 = vunpack.c.l.b16 %v142
  %v200 = vunpack.c.h.b16 %v142
  %v201 = vunpack.c.l.b16 %v143
  %v202 = vunpack.c.h.b16 %v143
  %v203 = vunpack.c.l.b16 %v144
  %v204 = vunpack.c.h.b16 %v144
  %v205 = vpack.c.b16 %v175, %v173
  %v206 = vpack.c.b16 %v176, %v174
  %v207 = vpack.c.b16 %v179, %v177
  %v208 = vpack.c.b16 %v180, %v178
  %v209 = vpack.c.b16 %v183, %v181
  %v210 = vpack.c.b16 %v184, %v182
  %v211 = vpack.c.b16 %v187, %v185
  %v212 = vpack.c.b16 %v188, %v186
  %v213 = vpack.c.b16 %v191, %v189
  %v214 = vpack.c.b16 %v192, %v190
  %v215 = vpack.c.b16 %v195, %v193
  %v216 = vpack.c.b16 %v196, %v194
  %v217 = vpack.c.b16 %v199, %v197
  %v218 = vpack.c.b16 %v200, %v198
  %v219 = vpack.c.b16 %v203, %v201
  %v220 = vpack.c.b16 %v204, %v202
  %237 = vmatprep.subr.bf16.mxu0 %v220
  %238 = vmatpush1.bf16.msra.mxu0 %v219
  %239 = vmatprep.subr.bf16.mxu0 %v218
  %240 = vmatpush1.bf16.msra.mxu0 %v217
  %241 = vmatprep.subr.bf16.mxu0 %v216
  %242 = vmatpush1.bf16.msra.mxu0 %v215
  %243 = vmatprep.subr.bf16.mxu0 %v214
  %244 = vmatpush1.bf16.msra.mxu0 %v213
  %245 = vmatprep.subr.bf16.mxu0 %v212
  %246 = vmatpush1.bf16.msra.mxu0 %v211
  %247 = vmatprep.subr.bf16.mxu0 %v210
  %248 = vmatpush1.bf16.msra.mxu0 %v209
  %249 = vmatprep.subr.bf16.mxu0 %v208
  %250 = vmatpush1.bf16.msra.mxu0 %v207
  %251 = vmatprep.subr.bf16.mxu0 %v206
  %252 = vmatpush1.bf16.msra.mxu0 %v205
  %253 = vmatprep.subr.bf16.mxu0 0
  %254 = vmatpush2.bf16.msra.mxu0 0
  %255 = vmatprep.subr.bf16.mxu0 0
  %256 = vmatpush2.bf16.msra.mxu0 0
  %257 = vmatprep.subr.bf16.mxu0 0
  %258 = vmatpush2.bf16.msra.mxu0 0
  %259 = vmatprep.subr.bf16.mxu0 0
  %260 = vmatpush2.bf16.msra.mxu0 0
  %261 = vmatprep.subr.bf16.mxu0 0
  %262 = vmatpush2.bf16.msra.mxu0 0
  %263 = vmatprep.subr.bf16.mxu0 0
  %264 = vmatpush2.bf16.msra.mxu0 0
  %265 = vmatprep.subr.bf16.mxu0 0
  %266 = vmatpush2.bf16.msra.mxu0 0
  %267 = vmatprep.subr.bf16.mxu0 0
  %268 = vmatpush2.bf16.msra.mxu0 0
  %269 = vmatprep.mubr.bf16.mxu0 0
  %270 = vmatmul.mubr.bf16.gmra.mxu0 %v126
  %v271 = vpop.f32.mrf.mxu0
  %v272 = vadd.f32 %v150, %v271
  %v273 = vpop.f32.mrf.mxu0
  %v274 = vadd.f32 %v154, %v273
  %v275 = vpop.f32.mrf.mxu0
  %v276 = vadd.f32 %v150, %v275
  %v277 = vpop.f32.mrf.mxu0
  %v278 = vadd.f32 %v154, %v277
  %279 = vmatprep.mubr.bf16.mxu0 0
  %280 = vmatmul.mubr.bf16.gmra.mxu0 %v127
  %v281 = vpop.f32.mrf.mxu0
  %v282 = vadd.f32 %v150, %v281
  %v283 = vpop.f32.mrf.mxu0
  %v284 = vadd.f32 %v154, %v283
  %v285 = vpop.f32.mrf.mxu0
  %v286 = vadd.f32 %v150, %v285
  %v287 = vpop.f32.mrf.mxu0
  %v288 = vadd.f32 %v154, %v287
  %289 = vmatprep.mubr.bf16.mxu0 0
  %290 = vmatmul.mubr.bf16.gmra.mxu0 %v128
  %v291 = vpop.f32.mrf.mxu0
  %v292 = vadd.f32 %v150, %v291
  %v293 = vpop.f32.mrf.mxu0
  %v294 = vadd.f32 %v154, %v293
  %v295 = vpop.f32.mrf.mxu0
  %v296 = vadd.f32 %v150, %v295
  %v297 = vpop.f32.mrf.mxu0
  %v298 = vadd.f32 %v154, %v297
  %299 = vdwg.mxu0
  %v300 = vmul.f32 %v272, 0.5
  %v301 = vmul.f32 %v274, 0.5
  %v302 = vmul.f32 %v276, 0.5
  %v303 = vmul.f32 %v278, 0.5
  %v304 = vmul.f32 %v282, 0.5
  %v305 = vmul.f32 %v284, 0.5
  %v306 = vmul.f32 %v286, 0.5
  %v307 = vmul.f32 %v288, 0.5
  %v308 = vmul.f32 %v292, 0.5
  %v309 = vmul.f32 %v294, 0.5
  %v310 = vmul.f32 %v296, 0.5
  %v311 = vmul.f32 %v298, 0.5
  %v312 = vmul.f32 %v272, 0.70710677
  %v313 = vmul.f32 %v274, 0.70710677
  %v314 = vmul.f32 %v276, 0.70710677
  %v315 = vmul.f32 %v278, 0.70710677
  %v316 = vmul.f32 %v282, 0.70710677
  %v317 = vmul.f32 %v284, 0.70710677
  %v318 = vmul.f32 %v286, 0.70710677
  %v319 = vmul.f32 %v288, 0.70710677
  %v320 = vmul.f32 %v292, 0.70710677
  %v321 = vmul.f32 %v294, 0.70710677
  %v322 = vmul.f32 %v296, 0.70710677
  %v323 = vmul.f32 %v298, 0.70710677
  %v324 = vand.u32 2147483647, %v312
  %v325 = vand.u32 2147483647, %v313
  %v326 = vand.u32 2147483647, %v314
  %v327 = vand.u32 2147483647, %v315
  %v328 = vand.u32 2147483647, %v316
  %v329 = vand.u32 2147483647, %v317
  %v330 = vand.u32 2147483647, %v318
  %v331 = vand.u32 2147483647, %v319
  %v332 = vand.u32 2147483647, %v320
  %v333 = vand.u32 2147483647, %v321
  %v334 = vand.u32 2147483647, %v322
  %v335 = vand.u32 2147483647, %v323
  %v336 = vmul.f32 %v324, 0.3275911
  %v337 = vmul.f32 %v325, 0.3275911
  %v338 = vmul.f32 %v326, 0.3275911
  %v339 = vmul.f32 %v327, 0.3275911
  %v340 = vmul.f32 %v328, 0.3275911
  %v341 = vmul.f32 %v329, 0.3275911
  %v342 = vmul.f32 %v330, 0.3275911
  %v343 = vmul.f32 %v331, 0.3275911
  %v344 = vmul.f32 %v332, 0.3275911
  %v345 = vmul.f32 %v333, 0.3275911
  %v346 = vmul.f32 %v334, 0.3275911
  %v347 = vmul.f32 %v335, 0.3275911
  %v348 = vadd.f32 %v336, 1.0
  %v349 = vadd.f32 %v337, 1.0
  %v350 = vadd.f32 %v338, 1.0
  %v351 = vadd.f32 %v339, 1.0
  %v352 = vadd.f32 %v340, 1.0
  %v353 = vadd.f32 %v341, 1.0
  %v354 = vadd.f32 %v342, 1.0
  %v355 = vadd.f32 %v343, 1.0
  %v356 = vadd.f32 %v344, 1.0
  %v357 = vadd.f32 %v345, 1.0
  %v358 = vadd.f32 %v346, 1.0
  %v359 = vadd.f32 %v347, 1.0
  %v360 = vrcp.pop %v348
  %v361 = vrcp.pop %v349
  %v362 = vrcp.pop %v350
  %v363 = vrcp.pop %v351
  %v364 = vrcp.pop %v352
  %v365 = vrcp.pop %v353
  %v366 = vrcp.pop %v354
  %v367 = vrcp.pop %v355
  %v368 = vrcp.pop %v356
  %v369 = vrcp.pop %v357
  %v370 = vrcp.pop %v358
  %v371 = vrcp.pop %v359
  %v372 = vmul.f32 %v360, 1.0614054
  %v373 = vmul.f32 %v361, 1.0614054
  %v374 = vmul.f32 %v362, 1.0614054
  %v375 = vmul.f32 %v363, 1.0614054
  %v376 = vmul.f32 %v364, 1.0614054
  %v377 = vmul.f32 %v365, 1.0614054
  %v378 = vmul.f32 %v366, 1.0614054
  %v379 = vmul.f32 %v367, 1.0614054
  %v380 = vmul.f32 %v368, 1.0614054
  %v381 = vmul.f32 %v369, 1.0614054
  %v382 = vmul.f32 %v370, 1.0614054
  %v383 = vmul.f32 %v371, 1.0614054
  %v384 = vadd.f32 %v372, -1.4531521
  %v385 = vadd.f32 %v373, -1.4531521
  %v386 = vadd.f32 %v374, -1.4531521
  %v387 = vadd.f32 %v375, -1.4531521
  %v388 = vadd.f32 %v376, -1.4531521
  %v389 = vadd.f32 %v377, -1.4531521
  %v390 = vadd.f32 %v378, -1.4531521
  %v391 = vadd.f32 %v379, -1.4531521
  %v392 = vadd.f32 %v380, -1.4531521
  %v393 = vadd.f32 %v381, -1.4531521
  %v394 = vadd.f32 %v382, -1.4531521
  %v395 = vadd.f32 %v383, -1.4531521
  %v396 = vmul.f32 %v384, %v360
  %v397 = vmul.f32 %v385, %v361
  %v398 = vmul.f32 %v386, %v362
  %v399 = vmul.f32 %v387, %v363
  %v400 = vmul.f32 %v388, %v364
  %v401 = vmul.f32 %v389, %v365
  %v402 = vmul.f32 %v390, %v366
  %v403 = vmul.f32 %v391, %v367
  %v404 = vmul.f32 %v392, %v368
  %v405 = vmul.f32 %v393, %v369
  %v406 = vmul.f32 %v394, %v370
  %v407 = vmul.f32 %v395, %v371
  %v408 = vadd.f32 %v396, 1.4214138
  %v409 = vadd.f32 %v397, 1.4214138
  %v410 = vadd.f32 %v398, 1.4214138
  %v411 = vadd.f32 %v399, 1.4214138
  %v412 = vadd.f32 %v400, 1.4214138
  %v413 = vadd.f32 %v401, 1.4214138
  %v414 = vadd.f32 %v402, 1.4214138
  %v415 = vadd.f32 %v403, 1.4214138
  %v416 = vadd.f32 %v404, 1.4214138
  %v417 = vadd.f32 %v405, 1.4214138
  %v418 = vadd.f32 %v406, 1.4214138
  %v419 = vadd.f32 %v407, 1.4214138
  %v420 = vmul.f32 %v408, %v360
  %v421 = vmul.f32 %v409, %v361
  %v422 = vmul.f32 %v410, %v362
  %v423 = vmul.f32 %v411, %v363
  %v424 = vmul.f32 %v412, %v364
  %v425 = vmul.f32 %v413, %v365
  %v426 = vmul.f32 %v414, %v366
  %v427 = vmul.f32 %v415, %v367
  %v428 = vmul.f32 %v416, %v368
  %v429 = vmul.f32 %v417, %v369
  %v430 = vmul.f32 %v418, %v370
  %v431 = vmul.f32 %v419, %v371
  %v432 = vadd.f32 %v420, -0.28449672
  %v433 = vadd.f32 %v421, -0.28449672
  %v434 = vadd.f32 %v422, -0.28449672
  %v435 = vadd.f32 %v423, -0.28449672
  %v436 = vadd.f32 %v424, -0.28449672
  %v437 = vadd.f32 %v425, -0.28449672
  %v438 = vadd.f32 %v426, -0.28449672
  %v439 = vadd.f32 %v427, -0.28449672
  %v440 = vadd.f32 %v428, -0.28449672
  %v441 = vadd.f32 %v429, -0.28449672
  %v442 = vadd.f32 %v430, -0.28449672
  %v443 = vadd.f32 %v431, -0.28449672
  %v444 = vmul.f32 %v432, %v360
  %v445 = vmul.f32 %v433, %v361
  %v446 = vmul.f32 %v434, %v362
  %v447 = vmul.f32 %v435, %v363
  %v448 = vmul.f32 %v436, %v364
  %v449 = vmul.f32 %v437, %v365
  %v450 = vmul.f32 %v438, %v366
  %v451 = vmul.f32 %v439, %v367
  %v452 = vmul.f32 %v440, %v368
  %v453 = vmul.f32 %v441, %v369
  %v454 = vmul.f32 %v442, %v370
  %v455 = vmul.f32 %v443, %v371
  %v456 = vadd.f32 %v444, 0.2548296
  %v457 = vadd.f32 %v445, 0.2548296
  %v458 = vadd.f32 %v446, 0.2548296
  %v459 = vadd.f32 %v447, 0.2548296
  %v460 = vadd.f32 %v448, 0.2548296
  %v461 = vadd.f32 %v449, 0.2548296
  %v462 = vadd.f32 %v450, 0.2548296
  %v463 = vadd.f32 %v451, 0.2548296
  %v464 = vadd.f32 %v452, 0.2548296
  %v465 = vadd.f32 %v453, 0.2548296
  %v466 = vadd.f32 %v454, 0.2548296
  %v467 = vadd.f32 %v455, 0.2548296
  %v468 = vmul.f32 %v456, %v360
  %v469 = vmul.f32 %v457, %v361
  %v470 = vmul.f32 %v458, %v362
  %v471 = vmul.f32 %v459, %v363
  %v472 = vmul.f32 %v460, %v364
  %v473 = vmul.f32 %v461, %v365
  %v474 = vmul.f32 %v462, %v366
  %v475 = vmul.f32 %v463, %v367
  %v476 = vmul.f32 %v464, %v368
  %v477 = vmul.f32 %v465, %v369
  %v478 = vmul.f32 %v466, %v370
  %v479 = vmul.f32 %v467, %v371
  %v480 = vsub.f32 0.0, %v324
  %v481 = vsub.f32 0.0, %v325
  %v482 = vsub.f32 0.0, %v326
  %v483 = vsub.f32 0.0, %v327
  %v484 = vsub.f32 0.0, %v328
  %v485 = vsub.f32 0.0, %v329
  %v486 = vsub.f32 0.0, %v330
  %v487 = vsub.f32 0.0, %v331
  %v488 = vsub.f32 0.0, %v332
  %v489 = vsub.f32 0.0, %v333
  %v490 = vsub.f32 0.0, %v334
  %v491 = vsub.f32 0.0, %v335
  %v492 = vmul.f32 %v480, %v324
  %v493 = vmul.f32 %v481, %v325
  %v494 = vmul.f32 %v482, %v326
  %v495 = vmul.f32 %v483, %v327
  %v496 = vmul.f32 %v484, %v328
  %v497 = vmul.f32 %v485, %v329
  %v498 = vmul.f32 %v486, %v330
  %v499 = vmul.f32 %v487, %v331
  %v500 = vmul.f32 %v488, %v332
  %v501 = vmul.f32 %v489, %v333
  %v502 = vmul.f32 %v490, %v334
  %v503 = vmul.f32 %v491, %v335
  %v504 = vmul.f32 %v492, 1.442695
  %v505 = vpow.pop %v504
  %v506 = vmul.f32 %v493, 1.442695
  %v507 = vpow.pop %v506
  %v508 = vmul.f32 %v494, 1.442695
  %v509 = vpow.pop %v508
  %v510 = vmul.f32 %v495, 1.442695
  %v511 = vpow.pop %v510
  %v512 = vmul.f32 %v496, 1.442695
  %v513 = vpow.pop %v512
  %v514 = vmul.f32 %v497, 1.442695
  %v515 = vpow.pop %v514
  %v516 = vmul.f32 %v498, 1.442695
  %v517 = vpow.pop %v516
  %v518 = vmul.f32 %v499, 1.442695
  %v519 = vpow.pop %v518
  %v520 = vmul.f32 %v500, 1.442695
  %v521 = vpow.pop %v520
  %v522 = vmul.f32 %v501, 1.442695
  %v523 = vpow.pop %v522
  %v524 = vmul.f32 %v502, 1.442695
  %v525 = vpow.pop %v524
  %v526 = vmul.f32 %v503, 1.442695
  %v527 = vpow.pop %v526
  %v528 = vmul.f32 %v468, %v505
  %v529 = vmul.f32 %v469, %v507
  %v530 = vmul.f32 %v470, %v509
  %v531 = vmul.f32 %v471, %v511
  %v532 = vmul.f32 %v472, %v513
  %v533 = vmul.f32 %v473, %v515
  %v534 = vmul.f32 %v474, %v517
  %v535 = vmul.f32 %v475, %v519
  %v536 = vmul.f32 %v476, %v521
  %v537 = vmul.f32 %v477, %v523
  %v538 = vmul.f32 %v478, %v525
  %v539 = vmul.f32 %v479, %v527
  %v540 = vsub.f32 1.0, %v528
  %v541 = vsub.f32 1.0, %v529
  %v542 = vsub.f32 1.0, %v530
  %v543 = vsub.f32 1.0, %v531
  %v544 = vsub.f32 1.0, %v532
  %v545 = vsub.f32 1.0, %v533
  %v546 = vsub.f32 1.0, %v534
  %v547 = vsub.f32 1.0, %v535
  %v548 = vsub.f32 1.0, %v536
  %v549 = vsub.f32 1.0, %v537
  %v550 = vsub.f32 1.0, %v538
  %v551 = vsub.f32 1.0, %v539
  %vm552 = vcmp.ge.f32.partialorder %v312, 0.0
  %vm553 = vcmp.ge.f32.partialorder %v313, 0.0
  %vm554 = vcmp.ge.f32.partialorder %v314, 0.0
  %vm555 = vcmp.ge.f32.partialorder %v315, 0.0
  %vm556 = vcmp.ge.f32.partialorder %v316, 0.0
  %vm557 = vcmp.ge.f32.partialorder %v317, 0.0
  %vm558 = vcmp.ge.f32.partialorder %v318, 0.0
  %vm559 = vcmp.ge.f32.partialorder %v319, 0.0
  %vm560 = vcmp.ge.f32.partialorder %v320, 0.0
  %vm561 = vcmp.ge.f32.partialorder %v321, 0.0
  %vm562 = vcmp.ge.f32.partialorder %v322, 0.0
  %vm563 = vcmp.ge.f32.partialorder %v323, 0.0
  %v564 = vsub.f32 0.0, %v540
  %v565 = vsub.f32 0.0, %v541
  %v566 = vsub.f32 0.0, %v542
  %v567 = vsub.f32 0.0, %v543
  %v568 = vsub.f32 0.0, %v544
  %v569 = vsub.f32 0.0, %v545
  %v570 = vsub.f32 0.0, %v546
  %v571 = vsub.f32 0.0, %v547
  %v572 = vsub.f32 0.0, %v548
  %v573 = vsub.f32 0.0, %v549
  %v574 = vsub.f32 0.0, %v550
  %v575 = vsub.f32 0.0, %v551
  %v576 = vsel %vm552, %v540, %v564
  %v577 = vsel %vm553, %v541, %v565
  %v578 = vsel %vm554, %v542, %v566
  %v579 = vsel %vm555, %v543, %v567
  %v580 = vsel %vm556, %v544, %v568
  %v581 = vsel %vm557, %v545, %v569
  %v582 = vsel %vm558, %v546, %v570
  %v583 = vsel %vm559, %v547, %v571
  %v584 = vsel %vm560, %v548, %v572
  %v585 = vsel %vm561, %v549, %v573
  %v586 = vsel %vm562, %v550, %v574
  %v587 = vsel %vm563, %v551, %v575
  %v588 = vadd.f32 %v576, 1.0
  %v589 = vadd.f32 %v577, 1.0
  %v590 = vadd.f32 %v578, 1.0
  %v591 = vadd.f32 %v579, 1.0
  %v592 = vadd.f32 %v580, 1.0
  %v593 = vadd.f32 %v581, 1.0
  %v594 = vadd.f32 %v582, 1.0
  %v595 = vadd.f32 %v583, 1.0
  %v596 = vadd.f32 %v584, 1.0
  %v597 = vadd.f32 %v585, 1.0
  %v598 = vadd.f32 %v586, 1.0
  %v599 = vadd.f32 %v587, 1.0
  %v600 = vmul.f32 %v300, %v588
  %v601 = vmul.f32 %v301, %v589
  %v602 = vmul.f32 %v302, %v590
  %v603 = vmul.f32 %v303, %v591
  %v604 = vmul.f32 %v304, %v592
  %v605 = vmul.f32 %v305, %v593
  %v606 = vmul.f32 %v306, %v594
  %v607 = vmul.f32 %v307, %v595
  %v608 = vmul.f32 %v308, %v596
  %v609 = vmul.f32 %v309, %v597
  %v610 = vmul.f32 %v310, %v598
  %v611 = vmul.f32 %v311, %v599
  %v612 = vpack.c.bf16 %v602, %v600
  %v613 = vpack.c.bf16 %v603, %v601
  %v614 = vpack.c.bf16 %v606, %v604
  %v615 = vpack.c.bf16 %v607, %v605
  %v616 = vpack.c.bf16 %v610, %v608
  %v617 = vpack.c.bf16 %v611, %v609
  %v624 = vunpack.c.l.b16 %v612
  %v625 = vunpack.c.l.b16 %v613
  %v626 = vunpack.c.h.b16 %v612
  %v627 = vunpack.c.h.b16 %v613
  %v628 = vunpack.c.l.b16 %v614
  %v629 = vunpack.c.l.b16 %v615
  %v630 = vunpack.c.h.b16 %v614
  %v631 = vunpack.c.h.b16 %v615
  %v632 = vunpack.c.l.b16 %v616
  %v633 = vunpack.c.l.b16 %v617
  %v634 = vunpack.c.h.b16 %v616
  %v635 = vunpack.c.h.b16 %v617
  %v636 = vpack.c.b16 %v625, %v624
  %v637 = vpack.c.b16 %v627, %v626
  %v638 = vpack.c.b16 %v629, %v628
  %v639 = vpack.c.b16 %v631, %v630
  %v640 = vpack.c.b16 %v633, %v632
  %v641 = vpack.c.b16 %v635, %v634
  %648 = vst [vmem:[%s5] sm:$0xff] %v636
  %649 = vst [vmem:[%s5 + $0x8] sm:$0xff] %v637
  %650 = vst [vmem:[%s5 + $0x10] sm:$0xff] %v638
  %651 = vst [vmem:[%s5 + $0x18] sm:$0xff] %v639
  %652 = vst [vmem:[%s5 + $0x20] sm:$0xff] %v640
  %653 = vst [vmem:[%s5 + $0x28] sm:$0xff] %v641
  // Predicated region
  $region22: #{lorat_forward.20} parent=0 // pred_check
    _
  $region23: #{lorat_forward.20} parent=0 // pred_check_branch
    %655 = sbr.rel (0) target = $region25
  $region24: #{lorat_forward.20} parent=0 // pred_region
    _
  $region25: #{lorat_forward.20} parent=0 // pred_fallthru
    _
  // Predicated region
  $region26: #{lorat_forward.20} parent=0 // pred_check
    _
  $region27: #{lorat_forward.20} parent=0 // pred_check_branch
    %657 = sbr.rel (0) target = $region29
  $region28: #{lorat_forward.20} parent=0 // pred_region
    _
  $region29: #{lorat_forward.20} parent=0 // pred_fallthru
    _

// kernel: lorat_forward.21
$region0: #{lorat_forward.21}
  #allocation0 [shape = 'u32[]', space=smem, size = 0x4, offset = 0x4, fixed_abs, tag = 'smem constant byte address 0x4 - core index']
  #allocation1 [shape = 'u32[144,128]{1,0:T(1,128)}', space=vmem, size = 0x12000, scoped, tag = 'internal scratch']
  %s0 = inlined_call_operand.vmem [shape: bf16[48,256], index: 0, kind: input, shape index: {}]
  %s1 = inlined_call_operand.vmem [shape: bf16[256,128], index: 1, kind: input, shape index: {}]
  %s2 = inlined_call_operand.vmem [shape: f32[1,128], index: 2, kind: input, shape index: {}]
  %s3 = inlined_call_operand.vmem [shape: f32[1,128], index: 3, kind: input, shape index: {}]
  %s4 = inlined_call_operand.vmem [shape: bf16[48,128], index: 4, kind: input, shape index: {}]
  %s5 = inlined_call_operand.vmem [shape: bf16[48,128], index: 5, kind: output, shape index: {}]
  %s6 = sld [smem:[#allocation0]]
  $region30: #{lorat_forward.21} parent=0
    _
  %s8 = ssub.s32 1, %s6
  %s9 = scalar_select 0, %s8, %s6
  // Predicated region
  $region2: #{lorat_forward.21} parent=0 // pred_check
    _
  $region3: #{lorat_forward.21} parent=0 // pred_check_branch
    %11 = sbr.rel (0) target = $region5
  $region4: #{lorat_forward.21} parent=0 // pred_region
    _
  $region5: #{lorat_forward.21} parent=0 // pred_fallthru
    _
  // Predicated region
  $region6: #{lorat_forward.21} parent=0 // pred_check
    _
  $region7: #{lorat_forward.21} parent=0 // pred_check_branch
    %13 = sbr.rel (0) target = $region9
  $region8: #{lorat_forward.21} parent=0 // pred_region
    _
  $region9: #{lorat_forward.21} parent=0 // pred_fallthru
    _
  // Predicated region
  $region10: #{lorat_forward.21} parent=0 // pred_check
    _
  $region11: #{lorat_forward.21} parent=0 // pred_check_branch
    %15 = sbr.rel (0) target = $region13
  $region12: #{lorat_forward.21} parent=0 // pred_region
    _
  $region13: #{lorat_forward.21} parent=0 // pred_fallthru
    _
  // Predicated region
  $region14: #{lorat_forward.21} parent=0 // pred_check
    _
  $region15: #{lorat_forward.21} parent=0 // pred_check_branch
    %17 = sbr.rel (0) target = $region17
  $region16: #{lorat_forward.21} parent=0 // pred_region
    _
  $region17: #{lorat_forward.21} parent=0 // pred_fallthru
    _
  // Predicated region
  $region18: #{lorat_forward.21} parent=0 // pred_check
    _
  $region19: #{lorat_forward.21} parent=0 // pred_check_branch
    %19 = sbr.rel (0) target = $region21
  $region20: #{lorat_forward.21} parent=0 // pred_region
    _
  $region21: #{lorat_forward.21} parent=0 // pred_fallthru
    _
  %v21 = vld [vmem:[%s0] sm:$0xff]
  %v22 = vld [vmem:[%s0 + $0x8] sm:$0xff]
  %v23 = vld [vmem:[%s0 + $0x10] sm:$0xff]
  %v24 = vld [vmem:[%s0 + $0x18] sm:$0xff]
  %v25 = vld [vmem:[%s0 + $0x20] sm:$0xff]
  %v26 = vld [vmem:[%s0 + $0x28] sm:$0xff]
  %v27 = vld [vmem:[%s1] sm:$0xf]
  %v28 = vld [vmem:[%s1 + $0x4] sm:$0xf]
  %v29 = vld [vmem:[%s1 + $0x8] sm:$0xf]
  %v30 = vld [vmem:[%s1 + $0xc] sm:$0xf]
  %v31 = vld [vmem:[%s1 + $0x10] sm:$0xf]
  %v32 = vld [vmem:[%s1 + $0x14] sm:$0xf]
  %v33 = vld [vmem:[%s1 + $0x18] sm:$0xf]
  %v34 = vld [vmem:[%s1 + $0x1c] sm:$0xf]
  %v35 = vld [vmem:[%s1 + $0x20] sm:$0xf]
  %v36 = vld [vmem:[%s1 + $0x24] sm:$0xf]
  %v37 = vld [vmem:[%s1 + $0x28] sm:$0xf]
  %v38 = vld [vmem:[%s1 + $0x2c] sm:$0xf]
  %v39 = vld [vmem:[%s1 + $0x30] sm:$0xf]
  %v40 = vld [vmem:[%s1 + $0x34] sm:$0xf]
  %v41 = vld [vmem:[%s1 + $0x38] sm:$0xf]
  %v42 = vld [vmem:[%s1 + $0x3c] sm:$0xf]
  %v43 = vld [vmem:[%s1 + $0x40] sm:$0xf]
  %v44 = vld [vmem:[%s1 + $0x44] sm:$0xf]
  %v45 = vld [vmem:[%s1 + $0x48] sm:$0xf]
  %v46 = vld [vmem:[%s1 + $0x4c] sm:$0xf]
  %v47 = vld [vmem:[%s1 + $0x50] sm:$0xf]
  %v48 = vld [vmem:[%s1 + $0x54] sm:$0xf]
  %v49 = vld [vmem:[%s1 + $0x58] sm:$0xf]
  %v50 = vld [vmem:[%s1 + $0x5c] sm:$0xf]
  %v51 = vld [vmem:[%s1 + $0x60] sm:$0xf]
  %v52 = vld [vmem:[%s1 + $0x64] sm:$0xf]
  %v53 = vld [vmem:[%s1 + $0x68] sm:$0xf]
  %v54 = vld [vmem:[%s1 + $0x6c] sm:$0xf]
  %v55 = vld [vmem:[%s1 + $0x70] sm:$0xf]
  %v56 = vld [vmem:[%s1 + $0x74] sm:$0xf]
  %v57 = vld [vmem:[%s1 + $0x78] sm:$0xf]
  %v58 = vld [vmem:[%s1 + $0x7c] sm:$0xf]
  %v59 = vld [vmem:[%s2] sm:$0x1]
  %v61 = vlaneseq
  %v62 = vshrl.u32 %v61, 7
  %v63 = vsub.s32 0, %v62
  %v64 = vrot.slane %v59, %v63
  %v72 = vunpack.c.l.b16 %v21
  %v73 = vunpack.c.h.b16 %v21
  %v74 = vunpack.c.l.b16 %v22
  %v75 = vunpack.c.h.b16 %v22
  %v76 = vunpack.c.l.b16 %v23
  %v77 = vunpack.c.h.b16 %v23
  %v78 = vunpack.c.l.b16 %v24
  %v79 = vunpack.c.h.b16 %v24
  %v80 = vunpack.c.l.b16 %v25
  %v81 = vunpack.c.h.b16 %v25
  %v82 = vunpack.c.l.b16 %v26
  %v83 = vunpack.c.h.b16 %v26
  %v84 = vpack.c.b16 %v74, %v72
  %v85 = vpack.c.b16 %v75, %v73
  %v86 = vpack.c.b16 %v78, %v76
  %v87 = vpack.c.b16 %v79, %v77
  %v88 = vpack.c.b16 %v82, %v80
  %v89 = vpack.c.b16 %v83, %v81
  %v128 = vunpack.c.l.b16 %v27
  %v129 = vunpack.c.l.b16 %v28
  %v130 = vunpack.c.l.b16 %v29
  %v131 = vunpack.c.l.b16 %v30
  %v132 = vunpack.c.l.b16 %v31
  %v133 = vunpack.c.l.b16 %v32
  %v134 = vunpack.c.l.b16 %v33
  %v135 = vunpack.c.l.b16 %v34
  %v136 = vunpack.c.l.b16 %v35
  %v137 = vunpack.c.l.b16 %v36
  %v138 = vunpack.c.l.b16 %v37
  %v139 = vunpack.c.l.b16 %v38
  %v140 = vunpack.c.l.b16 %v39
  %v141 = vunpack.c.l.b16 %v40
  %v142 = vunpack.c.l.b16 %v41
  %v143 = vunpack.c.l.b16 %v42
  %v144 = vunpack.c.l.b16 %v43
  %v145 = vunpack.c.l.b16 %v44
  %v146 = vunpack.c.l.b16 %v45
  %v147 = vunpack.c.l.b16 %v46
  %v148 = vunpack.c.l.b16 %v47
  %v149 = vunpack.c.l.b16 %v48
  %v150 = vunpack.c.l.b16 %v49
  %v151 = vunpack.c.l.b16 %v50
  %v152 = vunpack.c.l.b16 %v51
  %v153 = vunpack.c.l.b16 %v52
  %v154 = vunpack.c.l.b16 %v53
  %v155 = vunpack.c.l.b16 %v54
  %v156 = vunpack.c.l.b16 %v55
  %v157 = vunpack.c.l.b16 %v56
  %v158 = vunpack.c.l.b16 %v57
  %v159 = vunpack.c.l.b16 %v58
  %v160 = vpack.c.b16 %v129, %v128
  %v161 = vpack.c.b16 %v131, %v130
  %v162 = vpack.c.b16 %v133, %v132
  %v163 = vpack.c.b16 %v135, %v134
  %v164 = vpack.c.b16 %v137, %v136
  %v165 = vpack.c.b16 %v139, %v138
  %v166 = vpack.c.b16 %v141, %v140
  %v167 = vpack.c.b16 %v143, %v142
  %v168 = vpack.c.b16 %v145, %v144
  %v169 = vpack.c.b16 %v147, %v146
  %v170 = vpack.c.b16 %v149, %v148
  %v171 = vpack.c.b16 %v151, %v150
  %v172 = vpack.c.b16 %v153, %v152
  %v173 = vpack.c.b16 %v155, %v154
  %v174 = vpack.c.b16 %v157, %v156
  %v175 = vpack.c.b16 %v159, %v158
  %192 = vmatprep.subr.bf16.mxu0 0
  %193 = vmatpush1.bf16.msra.mxu0 %v167
  %194 = vmatprep.subr.bf16.mxu0 0
  %195 = vmatpush1.bf16.msra.mxu0 %v166
  %196 = vmatprep.subr.bf16.mxu0 0
  %197 = vmatpush1.bf16.msra.mxu0 %v165
  %198 = vmatprep.subr.bf16.mxu0 0
  %199 = vmatpush1.bf16.msra.mxu0 %v164
  %200 = vmatprep.subr.bf16.mxu0 0
  %201 = vmatpush1.bf16.msra.mxu0 %v163
  %202 = vmatprep.subr.bf16.mxu0 0
  %203 = vmatpush1.bf16.msra.mxu0 %v162
  %204 = vmatprep.subr.bf16.mxu0 0
  %205 = vmatpush1.bf16.msra.mxu0 %v161
  %206 = vmatprep.subr.bf16.mxu0 0
  %207 = vmatpush1.bf16.msra.mxu0 %v160
  %208 = vmatprep.subr.bf16.mxu0 0
  %209 = vmatpush2.bf16.msra.mxu0 %v175
  %210 = vmatprep.subr.bf16.mxu0 0
  %211 = vmatpush2.bf16.msra.mxu0 %v174
  %212 = vmatprep.subr.bf16.mxu0 0
  %213 = vmatpush2.bf16.msra.mxu0 %v173
  %214 = vmatprep.subr.bf16.mxu0 0
  %215 = vmatpush2.bf16.msra.mxu0 %v172
  %216 = vmatprep.subr.bf16.mxu0 0
  %217 = vmatpush2.bf16.msra.mxu0 %v171
  %218 = vmatprep.subr.bf16.mxu0 0
  %219 = vmatpush2.bf16.msra.mxu0 %v170
  %220 = vmatprep.subr.bf16.mxu0 0
  %221 = vmatpush2.bf16.msra.mxu0 %v169
  %222 = vmatprep.subr.bf16.mxu0 0
  %223 = vmatpush2.bf16.msra.mxu0 %v168
  %224 = vmatprep.mubr.bf16.mxu0 %v85
  %225 = vmatmul.mubr.bf16.gmra.mxu0 %v84
  %v226 = vpop.f32.mrf.mxu0
  %v227 = vadd.f32 %v64, %v226
  %v228 = vpop.f32.mrf.mxu0
  %v229 = vpop.f32.mrf.mxu0
  %v230 = vadd.f32 %v64, %v229
  %v231 = vpop.f32.mrf.mxu0
  %232 = vmatprep.mubr.bf16.mxu0 %v87
  %233 = vmatmul.mubr.bf16.gmra.mxu0 %v86
  %v234 = vpop.f32.mrf.mxu0
  %v235 = vadd.f32 %v64, %v234
  %v236 = vpop.f32.mrf.mxu0
  %v237 = vpop.f32.mrf.mxu0
  %v238 = vadd.f32 %v64, %v237
  %v239 = vpop.f32.mrf.mxu0
  %240 = vmatprep.mubr.bf16.mxu0 %v89
  %241 = vmatmul.mubr.bf16.gmra.mxu0 %v88
  %v242 = vpop.f32.mrf.mxu0
  %v243 = vadd.f32 %v64, %v242
  %v244 = vpop.f32.mrf.mxu0
  %v245 = vpop.f32.mrf.mxu0
  %v246 = vadd.f32 %v64, %v245
  %v247 = vpop.f32.mrf.mxu0
  %248 = vdwg.mxu0
  %v249 = vld [vmem:[%s4] sm:$0xf]
  %v250 = vld [vmem:[%s4 + $0x4] sm:$0xf]
  %v251 = vld [vmem:[%s4 + $0x8] sm:$0xf]
  %v252 = vld [vmem:[%s4 + $0xc] sm:$0xf]
  %v253 = vld [vmem:[%s4 + $0x10] sm:$0xf]
  %v254 = vld [vmem:[%s4 + $0x14] sm:$0xf]
  %v255 = vunpack.c.l.bf16 %v249
  %v256 = vunpack.c.l.bf16 %v250
  %v257 = vunpack.c.l.bf16 %v251
  %v258 = vunpack.c.l.bf16 %v252
  %v259 = vunpack.c.l.bf16 %v253
  %v260 = vunpack.c.l.bf16 %v254
  %v261 = vld [vmem:[%s3] sm:$0x1]
  %v263 = vlaneseq
  %v264 = vshrl.u32 %v263, 7
  %v265 = vsub.s32 0, %v264
  %v266 = vrot.slane %v261, %v265
  %v268 = vmul.f32 %v266, %v227
  %v269 = vmul.f32 %v266, %v230
  %v270 = vmul.f32 %v266, %v235
  %v271 = vmul.f32 %v266, %v238
  %v272 = vmul.f32 %v266, %v243
  %v273 = vmul.f32 %v266, %v246
  %v274 = vadd.f32 %v255, %v268
  %v275 = vadd.f32 %v256, %v269
  %v276 = vadd.f32 %v257, %v270
  %v277 = vadd.f32 %v258, %v271
  %v278 = vadd.f32 %v259, %v272
  %v279 = vadd.f32 %v260, %v273
  %v280 = vpack.c.bf16 %v275, %v274
  %v281 = vpack.c.bf16 %v277, %v276
  %v282 = vpack.c.bf16 %v279, %v278
  %v286 = vunpack.c.l.b16 %v280
  %v287 = vunpack.c.h.b16 %v280
  %v288 = vunpack.c.l.b16 %v281
  %v289 = vunpack.c.h.b16 %v281
  %v290 = vunpack.c.l.b16 %v282
  %v291 = vunpack.c.h.b16 %v282
  %v292 = vpack.c.b16 %v286, %v286
  %v293 = vpack.c.b16 %v287, %v287
  %v294 = vpack.c.b16 %v288, %v288
  %v295 = vpack.c.b16 %v289, %v289
  %v296 = vpack.c.b16 %v290, %v290
  %v297 = vpack.c.b16 %v291, %v291
  %304 = vst [vmem:[%s5] sm:$0xf] %v292
  %305 = vst [vmem:[%s5 + $0x4] sm:$0xf] %v293
  %306 = vst [vmem:[%s5 + $0x8] sm:$0xf] %v294
  %307 = vst [vmem:[%s5 + $0xc] sm:$0xf] %v295
  %308 = vst [vmem:[%s5 + $0x10] sm:$0xf] %v296
  %309 = vst [vmem:[%s5 + $0x14] sm:$0xf] %v297
  // Predicated region
  $region22: #{lorat_forward.21} parent=0 // pred_check
    _
  $region23: #{lorat_forward.21} parent=0 // pred_check_branch
    %311 = sbr.rel (0) target = $region25
  $region24: #{lorat_forward.21} parent=0 // pred_region
    _
  $region25: #{lorat_forward.21} parent=0 // pred_fallthru
    _
  // Predicated region
  $region26: #{lorat_forward.21} parent=0 // pred_check
    _
  $region27: #{lorat_forward.21} parent=0 // pred_check_branch
    %313 = sbr.rel (0) target = $region29
  $region28: #{lorat_forward.21} parent=0 // pred_region
    _
  $region29: #{lorat_forward.21} parent=0 // pred_fallthru
    _

// kernel: lorat_forward.27
$region0: #{lorat_forward.27}
  #allocation0 [shape = 'u32[]', space=smem, size = 0x4, offset = 0x4, fixed_abs, tag = 'smem constant byte address 0x4 - core index']
  #allocation1 [shape = 'u32[144,128]{1,0:T(1,128)}', space=vmem, size = 0x12000, scoped, tag = 'internal scratch']
  %s0 = inlined_call_operand.vmem [shape: bf16[32,128], index: 0, kind: input, shape index: {}]
  %s1 = inlined_call_operand.vmem [shape: f32[1,128], index: 1, kind: input, shape index: {}]
  %s2 = inlined_call_operand.vmem [shape: f32[1,128], index: 2, kind: input, shape index: {}]
  %s3 = inlined_call_operand.vmem [shape: bf16[128,256], index: 3, kind: input, shape index: {}]
  %s4 = inlined_call_operand.vmem [shape: f32[1,256], index: 4, kind: input, shape index: {}]
  %s5 = inlined_call_operand.vmem [shape: bf16[32,256], index: 5, kind: output, shape index: {}]
  %s6 = sld [smem:[#allocation0]]
  $region30: #{lorat_forward.27} parent=0
    _
  %s8 = ssub.s32 1, %s6
  %s9 = scalar_select 0, %s8, %s6
  // Predicated region
  $region2: #{lorat_forward.27} parent=0 // pred_check
    _
  $region3: #{lorat_forward.27} parent=0 // pred_check_branch
    %11 = sbr.rel (0) target = $region5
  $region4: #{lorat_forward.27} parent=0 // pred_region
    _
  $region5: #{lorat_forward.27} parent=0 // pred_fallthru
    _
  // Predicated region
  $region6: #{lorat_forward.27} parent=0 // pred_check
    _
  $region7: #{lorat_forward.27} parent=0 // pred_check_branch
    %13 = sbr.rel (0) target = $region9
  $region8: #{lorat_forward.27} parent=0 // pred_region
    _
  $region9: #{lorat_forward.27} parent=0 // pred_fallthru
    _
  // Predicated region
  $region10: #{lorat_forward.27} parent=0 // pred_check
    _
  $region11: #{lorat_forward.27} parent=0 // pred_check_branch
    %15 = sbr.rel (0) target = $region13
  $region12: #{lorat_forward.27} parent=0 // pred_region
    _
  $region13: #{lorat_forward.27} parent=0 // pred_fallthru
    _
  // Predicated region
  $region14: #{lorat_forward.27} parent=0 // pred_check
    _
  $region15: #{lorat_forward.27} parent=0 // pred_check_branch
    %17 = sbr.rel (0) target = $region17
  $region16: #{lorat_forward.27} parent=0 // pred_region
    _
  $region17: #{lorat_forward.27} parent=0 // pred_fallthru
    _
  // Predicated region
  $region18: #{lorat_forward.27} parent=0 // pred_check
    _
  $region19: #{lorat_forward.27} parent=0 // pred_check_branch
    %19 = sbr.rel (0) target = $region21
  $region20: #{lorat_forward.27} parent=0 // pred_region
    _
  $region21: #{lorat_forward.27} parent=0 // pred_fallthru
    _
  %v21 = vld [vmem:[%s0] sm:$0xf]
  %v22 = vld [vmem:[%s0 + $0x4] sm:$0xf]
  %v23 = vld [vmem:[%s0 + $0x8] sm:$0xf]
  %v24 = vld [vmem:[%s0 + $0xc] sm:$0xf]
  %v25 = vunpack.c.l.bf16 %v21
  %v26 = vunpack.c.l.bf16 %v22
  %v27 = vunpack.c.l.bf16 %v23
  %v28 = vunpack.c.l.bf16 %v24
  %29 = vadd.xlane.f32.xlu0 %v25
  %v30 = vpop.xlane.xlu0 %29
  %31 = vadd.xlane.f32.xlu0 %v26
  %v32 = vpop.xlane.xlu0 %31
  %33 = vadd.xlane.f32.xlu0 %v27
  %v34 = vpop.xlane.xlu0 %33
  %35 = vadd.xlane.f32.xlu0 %v28
  %v36 = vpop.xlane.xlu0 %35
  %v37 = vrcp.pop 128.0
  %v38 = vmul.f32 %v30, %v37
  %v39 = vmul.f32 %v32, %v37
  %v40 = vmul.f32 %v34, %v37
  %v41 = vmul.f32 %v36, %v37
  %v42 = vsub.f32 %v25, %v38
  %v43 = vsub.f32 %v26, %v39
  %v44 = vsub.f32 %v27, %v40
  %v45 = vsub.f32 %v28, %v41
  %v46 = vmul.f32 %v42, %v42
  %v47 = vmul.f32 %v43, %v43
  %v48 = vmul.f32 %v44, %v44
  %v49 = vmul.f32 %v45, %v45
  %50 = vadd.xlane.f32.xlu0 %v46
  %v51 = vpop.xlane.xlu0 %50
  %52 = vadd.xlane.f32.xlu0 %v47
  %v53 = vpop.xlane.xlu0 %52
  %54 = vadd.xlane.f32.xlu0 %v48
  %v55 = vpop.xlane.xlu0 %54
  %56 = vadd.xlane.f32.xlu0 %v49
  %v57 = vpop.xlane.xlu0 %56
  %v58 = vmul.f32 %v51, %v37
  %v59 = vmul.f32 %v53, %v37
  %v60 = vmul.f32 %v55, %v37
  %v61 = vmul.f32 %v57, %v37
  %v62 = vadd.f32 %v58, 1e-06
  %v63 = vadd.f32 %v59, 1e-06
  %v64 = vadd.f32 %v60, 1e-06
  %v65 = vadd.f32 %v61, 1e-06
  %v66 = vrsqrt.pop %v62
  %v67 = vrsqrt.pop %v63
  %v68 = vrsqrt.pop %v64
  %v69 = vrsqrt.pop %v65
  %v70 = vmul.f32 %v42, %v66
  %v71 = vmul.f32 %v43, %v67
  %v72 = vmul.f32 %v44, %v68
  %v73 = vmul.f32 %v45, %v69
  %v74 = vld [vmem:[%s1] sm:$0x1]
  %v76 = vlaneseq
  %v77 = vshrl.u32 %v76, 7
  %v78 = vsub.s32 0, %v77
  %v79 = vrot.slane %v74, %v78
  %v81 = vmul.f32 %v70, %v79
  %v82 = vmul.f32 %v71, %v79
  %v83 = vmul.f32 %v72, %v79
  %v84 = vmul.f32 %v73, %v79
  %v85 = vld [vmem:[%s2] sm:$0x1]
  %v87 = vlaneseq
  %v88 = vshrl.u32 %v87, 7
  %v89 = vsub.s32 0, %v88
  %v90 = vrot.slane %v85, %v89
  %v92 = vadd.f32 %v81, %v90
  %v93 = vadd.f32 %v82, %v90
  %v94 = vadd.f32 %v83, %v90
  %v95 = vadd.f32 %v84, %v90
  %v96 = vpack.c.bf16 %v93, %v92
  %v97 = vpack.c.bf16 %v95, %v94
  %v98 = vld [vmem:[%s3] sm:$0xff]
  %v99 = vld [vmem:[%s3 + $0x8] sm:$0xff]
  %v100 = vld [vmem:[%s3 + $0x10] sm:$0xff]
  %v101 = vld [vmem:[%s3 + $0x18] sm:$0xff]
  %v102 = vld [vmem:[%s3 + $0x20] sm:$0xff]
  %v103 = vld [vmem:[%s3 + $0x28] sm:$0xff]
  %v104 = vld [vmem:[%s3 + $0x30] sm:$0xff]
  %v105 = vld [vmem:[%s3 + $0x38] sm:$0xff]
  %v106 = vld [vmem:[%s3 + $0x40] sm:$0xff]
  %v107 = vld [vmem:[%s3 + $0x48] sm:$0xff]
  %v108 = vld [vmem:[%s3 + $0x50] sm:$0xff]
  %v109 = vld [vmem:[%s3 + $0x58] sm:$0xff]
  %v110 = vld [vmem:[%s3 + $0x60] sm:$0xff]
  %v111 = vld [vmem:[%s3 + $0x68] sm:$0xff]
  %v112 = vld [vmem:[%s3 + $0x70] sm:$0xff]
  %v113 = vld [vmem:[%s3 + $0x78] sm:$0xff]
  %v114 = vld [vmem:[%s4] sm:$0x3]
  %v116 = vlaneseq
  %v117 = vshrl.u32 %v116, 7
  %v118 = vsub.s32 0, %v117
  %v119 = vrot.slane %v114, %v118
  %v120 = vlaneseq
  %v121 = vshrl.u32 %v120, 7
  %v122 = vsub.s32 1, %v121
  %v123 = vrot.slane %v114, %v122
  %v142 = vunpack.c.l.b16 %v98
  %v143 = vunpack.c.h.b16 %v98
  %v144 = vunpack.c.l.b16 %v99
  %v145 = vunpack.c.h.b16 %v99
  %v146 = vunpack.c.l.b16 %v100
  %v147 = vunpack.c.h.b16 %v100
  %v148 = vunpack.c.l.b16 %v101
  %v149 = vunpack.c.h.b16 %v101
  %v150 = vunpack.c.l.b16 %v102
  %v151 = vunpack.c.h.b16 %v102
  %v152 = vunpack.c.l.b16 %v103
  %v153 = vunpack.c.h.b16 %v103
  %v154 = vunpack.c.l.b16 %v104
  %v155 = vunpack.c.h.b16 %v104
  %v156 = vunpack.c.l.b16 %v105
  %v157 = vunpack.c.h.b16 %v105
  %v158 = vunpack.c.l.b16 %v106
  %v159 = vunpack.c.h.b16 %v106
  %v160 = vunpack.c.l.b16 %v107
  %v161 = vunpack.c.h.b16 %v107
  %v162 = vunpack.c.l.b16 %v108
  %v163 = vunpack.c.h.b16 %v108
  %v164 = vunpack.c.l.b16 %v109
  %v165 = vunpack.c.h.b16 %v109
  %v166 = vunpack.c.l.b16 %v110
  %v167 = vunpack.c.h.b16 %v110
  %v168 = vunpack.c.l.b16 %v111
  %v169 = vunpack.c.h.b16 %v111
  %v170 = vunpack.c.l.b16 %v112
  %v171 = vunpack.c.h.b16 %v112
  %v172 = vunpack.c.l.b16 %v113
  %v173 = vunpack.c.h.b16 %v113
  %v174 = vpack.c.b16 %v144, %v142
  %v175 = vpack.c.b16 %v145, %v143
  %v176 = vpack.c.b16 %v148, %v146
  %v177 = vpack.c.b16 %v149, %v147
  %v178 = vpack.c.b16 %v152, %v150
  %v179 = vpack.c.b16 %v153, %v151
  %v180 = vpack.c.b16 %v156, %v154
  %v181 = vpack.c.b16 %v157, %v155
  %v182 = vpack.c.b16 %v160, %v158
  %v183 = vpack.c.b16 %v161, %v159
  %v184 = vpack.c.b16 %v164, %v162
  %v185 = vpack.c.b16 %v165, %v163
  %v186 = vpack.c.b16 %v168, %v166
  %v187 = vpack.c.b16 %v169, %v167
  %v188 = vpack.c.b16 %v172, %v170
  %v189 = vpack.c.b16 %v173, %v171
  %206 = vmatprep.subr.bf16.mxu0 %v189
  %207 = vmatpush1.bf16.msra.mxu0 %v188
  %208 = vmatprep.subr.bf16.mxu0 %v187
  %209 = vmatpush1.bf16.msra.mxu0 %v186
  %210 = vmatprep.subr.bf16.mxu0 %v185
  %211 = vmatpush1.bf16.msra.mxu0 %v184
  %212 = vmatprep.subr.bf16.mxu0 %v183
  %213 = vmatpush1.bf16.msra.mxu0 %v182
  %214 = vmatprep.subr.bf16.mxu0 %v181
  %215 = vmatpush1.bf16.msra.mxu0 %v180
  %216 = vmatprep.subr.bf16.mxu0 %v179
  %217 = vmatpush1.bf16.msra.mxu0 %v178
  %218 = vmatprep.subr.bf16.mxu0 %v177
  %219 = vmatpush1.bf16.msra.mxu0 %v176
  %220 = vmatprep.subr.bf16.mxu0 %v175
  %221 = vmatpush1.bf16.msra.mxu0 %v174
  %222 = vmatprep.subr.bf16.mxu0 0
  %223 = vmatpush2.bf16.msra.mxu0 0
  %224 = vmatprep.subr.bf16.mxu0 0
  %225 = vmatpush2.bf16.msra.mxu0 0
  %226 = vmatprep.subr.bf16.mxu0 0
  %227 = vmatpush2.bf16.msra.mxu0 0
  %228 = vmatprep.subr.bf16.mxu0 0
  %229 = vmatpush2.bf16.msra.mxu0 0
  %230 = vmatprep.subr.bf16.mxu0 0
  %231 = vmatpush2.bf16.msra.mxu0 0
  %232 = vmatprep.subr.bf16.mxu0 0
  %233 = vmatpush2.bf16.msra.mxu0 0
  %234 = vmatprep.subr.bf16.mxu0 0
  %235 = vmatpush2.bf16.msra.mxu0 0
  %236 = vmatprep.subr.bf16.mxu0 0
  %237 = vmatpush2.bf16.msra.mxu0 0
  %238 = vmatprep.mubr.bf16.mxu0 0
  %239 = vmatmul.mubr.bf16.gmra.mxu0 %v96
  %v240 = vpop.f32.mrf.mxu0
  %v241 = vadd.f32 %v119, %v240
  %v242 = vpop.f32.mrf.mxu0
  %v243 = vadd.f32 %v123, %v242
  %v244 = vpop.f32.mrf.mxu0
  %v245 = vadd.f32 %v119, %v244
  %v246 = vpop.f32.mrf.mxu0
  %v247 = vadd.f32 %v123, %v246
  %248 = vmatprep.mubr.bf16.mxu0 0
  %249 = vmatmul.mubr.bf16.gmra.mxu0 %v97
  %v250 = vpop.f32.mrf.mxu0
  %v251 = vadd.f32 %v119, %v250
  %v252 = vpop.f32.mrf.mxu0
  %v253 = vadd.f32 %v123, %v252
  %v254 = vpop.f32.mrf.mxu0
  %v255 = vadd.f32 %v119, %v254
  %v256 = vpop.f32.mrf.mxu0
  %v257 = vadd.f32 %v123, %v256
  %258 = vdwg.mxu0
  %v259 = vmax.f32 %v241, 0.0
  %v260 = vmax.f32 %v243, 0.0
  %v261 = vmax.f32 %v245, 0.0
  %v262 = vmax.f32 %v247, 0.0
  %v263 = vmax.f32 %v251, 0.0
  %v264 = vmax.f32 %v253, 0.0
  %v265 = vmax.f32 %v255, 0.0
  %v266 = vmax.f32 %v257, 0.0
  %v267 = vpack.c.bf16 %v261, %v259
  %v268 = vpack.c.bf16 %v262, %v260
  %v269 = vpack.c.bf16 %v265, %v263
  %v270 = vpack.c.bf16 %v266, %v264
  %v275 = vunpack.c.l.b16 %v267
  %v276 = vunpack.c.l.b16 %v268
  %v277 = vunpack.c.h.b16 %v267
  %v278 = vunpack.c.h.b16 %v268
  %v279 = vunpack.c.l.b16 %v269
  %v280 = vunpack.c.l.b16 %v270
  %v281 = vunpack.c.h.b16 %v269
  %v282 = vunpack.c.h.b16 %v270
  %v283 = vpack.c.b16 %v276, %v275
  %v284 = vpack.c.b16 %v278, %v277
  %v285 = vpack.c.b16 %v280, %v279
  %v286 = vpack.c.b16 %v282, %v281
  %291 = vst [vmem:[%s5] sm:$0xff] %v283
  %292 = vst [vmem:[%s5 + $0x8] sm:$0xff] %v284
  %293 = vst [vmem:[%s5 + $0x10] sm:$0xff] %v285
  %294 = vst [vmem:[%s5 + $0x18] sm:$0xff] %v286
  // Predicated region
  $region22: #{lorat_forward.27} parent=0 // pred_check
    _
  $region23: #{lorat_forward.27} parent=0 // pred_check_branch
    %296 = sbr.rel (0) target = $region25
  $region24: #{lorat_forward.27} parent=0 // pred_region
    _
  $region25: #{lorat_forward.27} parent=0 // pred_fallthru
    _
  // Predicated region
  $region26: #{lorat_forward.27} parent=0 // pred_check
    _
  $region27: #{lorat_forward.27} parent=0 // pred_check_branch
    %298 = sbr.rel (0) target = $region29
  $region28: #{lorat_forward.27} parent=0 // pred_region
    _
  $region29: #{lorat_forward.27} parent=0 // pred_fallthru
    _

// kernel: lorat_forward.29
$region0: #{lorat_forward.29}
  #allocation0 [shape = 'u32[]', space=smem, size = 0x4, offset = 0x4, fixed_abs, tag = 'smem constant byte address 0x4 - core index']
  #allocation1 [shape = 'u32[144,128]{1,0:T(1,128)}', space=vmem, size = 0x12000, scoped, tag = 'internal scratch']
  %s0 = inlined_call_operand.vmem [shape: bf16[32,128], index: 0, kind: input, shape index: {}]
  %s1 = inlined_call_operand.vmem [shape: bf16[128,128], index: 1, kind: input, shape index: {}]
  %s2 = inlined_call_operand.vmem [shape: f32[1,128], index: 2, kind: input, shape index: {}]
  %s3 = inlined_call_operand.vmem [shape: bf16[32,128], index: 3, kind: output, shape index: {}]
  %s4 = sld [smem:[#allocation0]]
  $region22: #{lorat_forward.29} parent=0
    _
  %s6 = ssub.s32 1, %s4
  %s7 = scalar_select 0, %s6, %s4
  // Predicated region
  $region2: #{lorat_forward.29} parent=0 // pred_check
    _
  $region3: #{lorat_forward.29} parent=0 // pred_check_branch
    %9 = sbr.rel (0) target = $region5
  $region4: #{lorat_forward.29} parent=0 // pred_region
    _
  $region5: #{lorat_forward.29} parent=0 // pred_fallthru
    _
  // Predicated region
  $region6: #{lorat_forward.29} parent=0 // pred_check
    _
  $region7: #{lorat_forward.29} parent=0 // pred_check_branch
    %11 = sbr.rel (0) target = $region9
  $region8: #{lorat_forward.29} parent=0 // pred_region
    _
  $region9: #{lorat_forward.29} parent=0 // pred_fallthru
    _
  // Predicated region
  $region10: #{lorat_forward.29} parent=0 // pred_check
    _
  $region11: #{lorat_forward.29} parent=0 // pred_check_branch
    %13 = sbr.rel (0) target = $region13
  $region12: #{lorat_forward.29} parent=0 // pred_region
    _
  $region13: #{lorat_forward.29} parent=0 // pred_fallthru
    _
  %v15 = vld [vmem:[%s0] sm:$0xf]
  %v16 = vld [vmem:[%s0 + $0x4] sm:$0xf]
  %v17 = vld [vmem:[%s0 + $0x8] sm:$0xf]
  %v18 = vld [vmem:[%s0 + $0xc] sm:$0xf]
  %v19 = vld [vmem:[%s1] sm:$0xf]
  %v20 = vld [vmem:[%s1 + $0x4] sm:$0xf]
  %v21 = vld [vmem:[%s1 + $0x8] sm:$0xf]
  %v22 = vld [vmem:[%s1 + $0xc] sm:$0xf]
  %v23 = vld [vmem:[%s1 + $0x10] sm:$0xf]
  %v24 = vld [vmem:[%s1 + $0x14] sm:$0xf]
  %v25 = vld [vmem:[%s1 + $0x18] sm:$0xf]
  %v26 = vld [vmem:[%s1 + $0x1c] sm:$0xf]
  %v27 = vld [vmem:[%s1 + $0x20] sm:$0xf]
  %v28 = vld [vmem:[%s1 + $0x24] sm:$0xf]
  %v29 = vld [vmem:[%s1 + $0x28] sm:$0xf]
  %v30 = vld [vmem:[%s1 + $0x2c] sm:$0xf]
  %v31 = vld [vmem:[%s1 + $0x30] sm:$0xf]
  %v32 = vld [vmem:[%s1 + $0x34] sm:$0xf]
  %v33 = vld [vmem:[%s1 + $0x38] sm:$0xf]
  %v34 = vld [vmem:[%s1 + $0x3c] sm:$0xf]
  %v35 = vld [vmem:[%s2] sm:$0x1]
  %v37 = vlaneseq
  %v38 = vshrl.u32 %v37, 7
  %v39 = vsub.s32 0, %v38
  %v40 = vrot.slane %v35, %v39
  %v46 = vunpack.c.l.b16 %v15
  %v47 = vunpack.c.l.b16 %v16
  %v48 = vunpack.c.l.b16 %v17
  %v49 = vunpack.c.l.b16 %v18
  %v50 = vpack.c.b16 %v47, %v46
  %v51 = vpack.c.b16 %v49, %v48
  %v70 = vunpack.c.l.b16 %v19
  %v71 = vunpack.c.l.b16 %v20
  %v72 = vunpack.c.l.b16 %v21
  %v73 = vunpack.c.l.b16 %v22
  %v74 = vunpack.c.l.b16 %v23
  %v75 = vunpack.c.l.b16 %v24
  %v76 = vunpack.c.l.b16 %v25
  %v77 = vunpack.c.l.b16 %v26
  %v78 = vunpack.c.l.b16 %v27
  %v79 = vunpack.c.l.b16 %v28
  %v80 = vunpack.c.l.b16 %v29
  %v81 = vunpack.c.l.b16 %v30
  %v82 = vunpack.c.l.b16 %v31
  %v83 = vunpack.c.l.b16 %v32
  %v84 = vunpack.c.l.b16 %v33
  %v85 = vunpack.c.l.b16 %v34
  %v86 = vpack.c.b16 %v71, %v70
  %v87 = vpack.c.b16 %v73, %v72
  %v88 = vpack.c.b16 %v75, %v74
  %v89 = vpack.c.b16 %v77, %v76
  %v90 = vpack.c.b16 %v79, %v78
  %v91 = vpack.c.b16 %v81, %v80
  %v92 = vpack.c.b16 %v83, %v82
  %v93 = vpack.c.b16 %v85, %v84
  %102 = vmatprep.subr.bf16.mxu0 0
  %103 = vmatpush1.bf16.msra.mxu0 %v93
  %104 = vmatprep.subr.bf16.mxu0 0
  %105 = vmatpush1.bf16.msra.mxu0 %v92
  %106 = vmatprep.subr.bf16.mxu0 0
  %107 = vmatpush1.bf16.msra.mxu0 %v91
  %108 = vmatprep.subr.bf16.mxu0 0
  %109 = vmatpush1.bf16.msra.mxu0 %v90
  %110 = vmatprep.subr.bf16.mxu0 0
  %111 = vmatpush1.bf16.msra.mxu0 %v89
  %112 = vmatprep.subr.bf16.mxu0 0
  %113 = vmatpush1.bf16.msra.mxu0 %v88
  %114 = vmatprep.subr.bf16.mxu0 0
  %115 = vmatpush1.bf16.msra.mxu0 %v87
  %116 = vmatprep.subr.bf16.mxu0 0
  %117 = vmatpush1.bf16.msra.mxu0 %v86
  %118 = vmatprep.subr.bf16.mxu0 0
  %119 = vmatpush2.bf16.msra.mxu0 0
  %120 = vmatprep.subr.bf16.mxu0 0
  %121 = vmatpush2.bf16.msra.mxu0 0
  %122 = vmatprep.subr.bf16.mxu0 0
  %123 = vmatpush2.bf16.msra.mxu0 0
  %124 = vmatprep.subr.bf16.mxu0 0
  %125 = vmatpush2.bf16.msra.mxu0 0
  %126 = vmatprep.subr.bf16.mxu0 0
  %127 = vmatpush2.bf16.msra.mxu0 0
  %128 = vmatprep.subr.bf16.mxu0 0
  %129 = vmatpush2.bf16.msra.mxu0 0
  %130 = vmatprep.subr.bf16.mxu0 0
  %131 = vmatpush2.bf16.msra.mxu0 0
  %132 = vmatprep.subr.bf16.mxu0 0
  %133 = vmatpush2.bf16.msra.mxu0 0
  %134 = vmatprep.mubr.bf16.mxu0 0
  %135 = vmatmul.mubr.bf16.gmra.mxu0 %v50
  %v136 = vpop.f32.mrf.mxu0
  %v137 = vadd.f32 %v40, %v136
  %v138 = vpop.f32.mrf.mxu0
  %v139 = vpop.f32.mrf.mxu0
  %v140 = vadd.f32 %v40, %v139
  %v141 = vpop.f32.mrf.mxu0
  %142 = vmatprep.mubr.bf16.mxu0 0
  %143 = vmatmul.mubr.bf16.gmra.mxu0 %v51
  %v144 = vpop.f32.mrf.mxu0
  %v145 = vadd.f32 %v40, %v144
  %v146 = vpop.f32.mrf.mxu0
  %v147 = vpop.f32.mrf.mxu0
  %v148 = vadd.f32 %v40, %v147
  %v149 = vpop.f32.mrf.mxu0
  %150 = vdwg.mxu0
  %v151 = vmax.f32 %v137, 0.0
  %v152 = vmax.f32 %v140, 0.0
  %v153 = vmax.f32 %v145, 0.0
  %v154 = vmax.f32 %v148, 0.0
  %v155 = vpack.c.bf16 %v152, %v151
  %v156 = vpack.c.bf16 %v154, %v153
  %v159 = vunpack.c.l.b16 %v155
  %v160 = vunpack.c.h.b16 %v155
  %v161 = vunpack.c.l.b16 %v156
  %v162 = vunpack.c.h.b16 %v156
  %v163 = vpack.c.b16 %v159, %v159
  %v164 = vpack.c.b16 %v160, %v160
  %v165 = vpack.c.b16 %v161, %v161
  %v166 = vpack.c.b16 %v162, %v162
  %171 = vst [vmem:[%s3] sm:$0xf] %v163
  %172 = vst [vmem:[%s3 + $0x4] sm:$0xf] %v164
  %173 = vst [vmem:[%s3 + $0x8] sm:$0xf] %v165
  %174 = vst [vmem:[%s3 + $0xc] sm:$0xf] %v166
  // Predicated region
  $region14: #{lorat_forward.29} parent=0 // pred_check
    _
  $region15: #{lorat_forward.29} parent=0 // pred_check_branch
    %176 = sbr.rel (0) target = $region17
  $region16: #{lorat_forward.29} parent=0 // pred_region
    _
  $region17: #{lorat_forward.29} parent=0 // pred_fallthru
    _
  // Predicated region
  $region18: #{lorat_forward.29} parent=0 // pred_check
    _
  $region19: #{lorat_forward.29} parent=0 // pred_check_branch
    %178 = sbr.rel (0) target = $region21
  $region20: #{lorat_forward.29} parent=0 // pred_region
    _
  $region21: #{lorat_forward.29} parent=0 // pred_fallthru
    _

</llo_original>
